<compile_context>
chip_gen: v7x
topology: tpu7x:2x2x1
jax: 0.10.0
libtpu: 0.0.40
codegen_flags: <defaults>
</compile_context>

<pallas_src>
import functools
import math

import jax
import jax.numpy as jnp
from jax.experimental import pallas as pl
from jax.experimental.pallas import tpu as pltpu

SELU_ALPHA = 1.6732632423543772
SELU_LAMBDA = 1.0507009873554805
BN_EPS = 1e-5
LN_EPS = 1e-5
MAX_POS_EMB = 512
# Eval-mode BatchNorm2d(1) with default (untrained) running stats: y = x / sqrt(1 + eps).
BN2D_SCALE = 1.0 / math.sqrt(1.0 + BN_EPS)
BN2D_SHIFT = 0.0

_VMEM_LIMIT = 32 * 1024 * 1024


def _cparams(sems):
    return pltpu.CompilerParams(dimension_semantics=sems, vmem_limit_bytes=_VMEM_LIMIT)


def _row_tile(m, cap=512):
    return m if m <= cap else cap


def _ln(x, g, b, eps=LN_EPS):
    mu = jnp.mean(x, axis=-1, keepdims=True)
    var = jnp.mean((x - mu) ** 2, axis=-1, keepdims=True)
    return (x - mu) * jax.lax.rsqrt(var + eps) * g + b


def _swish(x):
    return x * jax.nn.sigmoid(x)


# ------------------------------------------------------------------ front: LL + BN2d + SELU

def _front_kernel(x_ref, w_ref, b_ref, o_ref, acc_ref):
    @pl.when(pl.program_id(1) == 0)
    def _():
        acc_ref[...] = jnp.zeros_like(acc_ref)

    acc_ref[...] += jnp.dot(x_ref[...].astype(jnp.float32), w_ref[...],
                            preferred_element_type=jnp.float32)

    @pl.when(pl.program_id(1) == pl.num_programs(1) - 1)
    def _():
        y = acc_ref[...] + b_ref[...]
        y = y * BN2D_SCALE + BN2D_SHIFT
        y = SELU_LAMBDA * jnp.where(y > 0, y, SELU_ALPHA * (jnp.exp(y) - 1.0))
        o_ref[...] = y.astype(o_ref.dtype)


def front_ll_bn_selu(x, w, b):
    """selu(bn2d(x @ w + b)); x:(M, K) with K tiled through a VMEM f32 accumulator."""
    M, K = x.shape
    D = w.shape[1]
    tm = _row_tile(M)
    tk = 512 if K % 512 == 0 else K
    return pl.pallas_call(
        _front_kernel,
        grid=(pl.cdiv(M, tm), pl.cdiv(K, tk)),
        in_specs=[
            pl.BlockSpec((tm, tk), lambda i, k: (i, k)),
            pl.BlockSpec((tk, D), lambda i, k: (k, 0)),
            pl.BlockSpec((1, D), lambda i, k: (0, 0)),
        ],
        out_specs=pl.BlockSpec((tm, D), lambda i, k: (i, 0)),
        out_shape=jax.ShapeDtypeStruct((M, D), x.dtype),
        scratch_shapes=[pltpu.VMEM((tm, D), jnp.float32)],
        compiler_params=_cparams(("parallel", "arbitrary")),
    )(x, w, b)


# --------------------------------------------------------- kernel A: ff1 + attn LN + Q/K/V

def _ff1_qkv_kernel(x_ref, g1_ref, bt1_ref, w1_ref, wb1_ref, w2_ref, wb2_ref,
                    g2_ref, bt2_ref, wq_ref, wk_ref, wv_ref,
                    xo_ref, q_ref, k_ref, v_ref):
    x = x_ref[...].astype(jnp.float32)
    h = _ln(x, g1_ref[...], bt1_ref[...])
    h = jnp.dot(h, w1_ref[...], preferred_element_type=jnp.float32) + wb1_ref[...]
    h = _swish(h)
    h = jnp.dot(h, w2_ref[...], preferred_element_type=jnp.float32) + wb2_ref[...]
    x = x + 0.5 * h                                  # ff1 residual folded in
    xo_ref[...] = x.astype(xo_ref.dtype)
    hn = _ln(x, g2_ref[...], bt2_ref[...])
    q_ref[...] = jnp.dot(hn, wq_ref[...], preferred_element_type=jnp.float32).astype(q_ref.dtype)
    k_ref[...] = jnp.dot(hn, wk_ref[...], preferred_element_type=jnp.float32).astype(k_ref.dtype)
    v_ref[...] = jnp.dot(hn, wv_ref[...], preferred_element_type=jnp.float32).astype(v_ref.dtype)


def ff1_and_qkv(x, p):
    M, D = x.shape
    Dff = p["ff1_w1"].shape[1]
    tm = _row_tile(M)
    row = lambda i: (i, 0)
    cst = lambda i: (0, 0)
    return pl.pallas_call(
        _ff1_qkv_kernel,
        grid=(pl.cdiv(M, tm),),
        in_specs=[
            pl.BlockSpec((tm, D), row),
            pl.BlockSpec((1, D), cst), pl.BlockSpec((1, D), cst),
            pl.BlockSpec((D, Dff), cst), pl.BlockSpec((1, Dff), cst),
            pl.BlockSpec((Dff, D), cst), pl.BlockSpec((1, D), cst),
            pl.BlockSpec((1, D), cst), pl.BlockSpec((1, D), cst),
            pl.BlockSpec((D, D), cst), pl.BlockSpec((D, D), cst), pl.BlockSpec((D, D), cst),
        ],
        out_specs=tuple(pl.BlockSpec((tm, D), row) for _ in range(4)),
        out_shape=tuple(jax.ShapeDtypeStruct((M, D), x.dtype) for _ in range(4)),
        compiler_params=_cparams(("parallel",)),
    )(x, p["ff1_ln_g"], p["ff1_ln_b"], p["ff1_w1"], p["ff1_b1"], p["ff1_w2"], p["ff1_b2"],
      p["attn_ln_g"], p["attn_ln_b"], p["to_q_w"], p["to_k_w"], p["to_v_w"])


# ----------------------------------------------------- kernel B: attention core + out proj

def _attn_core_kernel(q_ref, k_ref, v_ref, pos_ref, xres_ref, wo_ref, bo_ref, o_ref,
                      *, heads, scale):
    q = q_ref[0].astype(jnp.float32)                 # (N, D)
    k = k_ref[0].astype(jnp.float32)
    v = v_ref[0].astype(jnp.float32)
    n, d = q.shape
    dh = d // heads
    y = xres_ref[0].astype(jnp.float32) + bo_ref[...]   # residual + out-proj bias
    for h in range(heads):
        sl = slice(h * dh, (h + 1) * dh)
        qh, kh, vh = q[:, sl], k[:, sl], v[:, sl]
        dots = jax.lax.dot_general(qh, kh, (((1,), (1,)), ((), ())),
                                   preferred_element_type=jnp.float32)
        s = (dots + pos_ref[0, h].astype(jnp.float32)) * scale
        s = s - jnp.max(s, axis=-1, keepdims=True)
        pr = jnp.exp(s)
        pr = pr * pl.reciprocal(jnp.sum(pr, axis=-1, keepdims=True), approx=True)
        oh = jnp.dot(pr, vh, preferred_element_type=jnp.float32)          # (N, dh)
        # head-concat + Wout fused as per-head row blocks of Wout (exact identity)
        y = y + jnp.dot(oh, wo_ref[h * dh:(h + 1) * dh, :],
                        preferred_element_type=jnp.float32)
    o_ref[0] = y.astype(o_ref.dtype)


def attention_block(xres, q, k, v, pos, wo, bo, heads):
    B, N, D = xres.shape
    scale = (D // heads) ** -0.5
    b3 = lambda i: (i, 0, 0)
    b4 = lambda i: (i, 0, 0, 0)
    cst = lambda i: (0, 0)
    return pl.pallas_call(
        functools.partial(_attn_core_kernel, heads=heads, scale=scale),
        grid=(B,),
        in_specs=[
            pl.BlockSpec((1, N, D), b3),
            pl.BlockSpec((1, N, D), b3),
            pl.BlockSpec((1, N, D), b3),
            pl.BlockSpec((1, heads, N, N), b4),
            pl.BlockSpec((1, N, D), b3),
            pl.BlockSpec((D, D), cst),
            pl.BlockSpec((1, D), cst),
        ],
        out_specs=pl.BlockSpec((1, N, D), b3),
        out_shape=jax.ShapeDtypeStruct((B, N, D), xres.dtype),
        compiler_params=_cparams(("parallel",)),
    )(q, k, v, pos, xres, wo, bo)


# ------------------------------------------------------------- kernel C: fused conv module

def _conv_module_kernel(x_ref, g_ref, bt_ref, wa_ref, ba_ref, wb_ref, bb_ref,
                        dww_ref, dwb_ref, bns_ref, bnsh_ref, w2_ref, b2_ref,
                        o_ref, buf_ref, *, ksize):
    x = x_ref[0].astype(jnp.float32)                 # (N, D)
    n = x.shape[0]
    h = _ln(x, g_ref[...], bt_ref[...])
    a = jnp.dot(h, wa_ref[...], preferred_element_type=jnp.float32) + ba_ref[...]
    g = jnp.dot(h, wb_ref[...], preferred_element_type=jnp.float32) + bb_ref[...]
    u = a * jax.nn.sigmoid(g)                        # GLU with pre-split weights, (N, C)
    c = u.shape[1]
    pad_l = ksize // 2
    # zero-padded time axis lives in a VMEM scratch; conv = ksize shifted sublane reads
    buf_ref[...] = jnp.zeros_like(buf_ref)
    buf_ref[pad_l:pad_l + n, :] = u
    acc = jnp.zeros((n, c), jnp.float32)
    for j in range(ksize):                           # cross-correlation, like torch Conv1d
        acc = acc + buf_ref[j:j + n, :] * dww_ref[j:j + 1, :]
    acc = acc + dwb_ref[...]
    acc = acc * bns_ref[...] + bnsh_ref[...]         # eval-mode BatchNorm1d (per-channel)
    acc = _swish(acc)
    y = jnp.dot(acc, w2_ref[...], preferred_element_type=jnp.float32) + b2_ref[...]
    o_ref[0] = (x + y).astype(o_ref.dtype)           # residual folded in


def conv_block(x, p, ksize):
    B, N, D = x.shape
    C = p["pw1_wa"].shape[1]
    pad_l = ksize // 2
    pad_r = ksize // 2 - (ksize + 1) % 2
    b3 = lambda i: (i, 0, 0)
    cst = lambda i: (0, 0)
    return pl.pallas_call(
        functools.partial(_conv_module_kernel, ksize=ksize),
        grid=(B,),
        in_specs=[
            pl.BlockSpec((1, N, D), b3),
            pl.BlockSpec((1, D), cst), pl.BlockSpec((1, D), cst),
            pl.BlockSpec((D, C), cst), pl.BlockSpec((1, C), cst),
            pl.BlockSpec((D, C), cst), pl.BlockSpec((1, C), cst),
            pl.BlockSpec((ksize, C), cst), pl.BlockSpec((1, C), cst),
            pl.BlockSpec((1, C), cst), pl.BlockSpec((1, C), cst),
            pl.BlockSpec((C, D), cst), pl.BlockSpec((1, D), cst),
        ],
        out_specs=pl.BlockSpec((1, N, D), b3),
        out_shape=jax.ShapeDtypeStruct((B, N, D), x.dtype),
        scratch_shapes=[pltpu.VMEM((N + pad_l + pad_r, C), jnp.float32)],
        compiler_params=_cparams(("parallel",)),
    )(x, p["conv_ln_g"], p["conv_ln_b"], p["pw1_wa"], p["pw1_ba"], p["pw1_wb"], p["pw1_bb"],
      p["dw_w"], p["dw_b"], p["bn1d_scale"], p["bn1d_shift"], p["pw2_w"], p["pw2_b"])


# -------------------------------------------------------------- kernel D: ff2 + post norm

def _ff2_post_kernel(x_ref, g_ref, bt_ref, w1_ref, b1_ref, w2_ref, b2_ref,
                     pg_ref, pb_ref, o_ref):
    x = x_ref[...].astype(jnp.float32)
    h = _ln(x, g_ref[...], bt_ref[...])
    h = jnp.dot(h, w1_ref[...], preferred_element_type=jnp.float32) + b1_ref[...]
    h = _swish(h)
    h = jnp.dot(h, w2_ref[...], preferred_element_type=jnp.float32) + b2_ref[...]
    x = x + 0.5 * h
    o_ref[...] = _ln(x, pg_ref[...], pb_ref[...]).astype(o_ref.dtype)


def ff2_post(x, p):
    M, D = x.shape
    Dff = p["ff2_w1"].shape[1]
    tm = _row_tile(M)
    row = lambda i: (i, 0)
    cst = lambda i: (0, 0)
    return pl.pallas_call(
        _ff2_post_kernel,
        grid=(pl.cdiv(M, tm),),
        in_specs=[
            pl.BlockSpec((tm, D), row),
            pl.BlockSpec((1, D), cst), pl.BlockSpec((1, D), cst),
            pl.BlockSpec((D, Dff), cst), pl.BlockSpec((1, Dff), cst),
            pl.BlockSpec((Dff, D), cst), pl.BlockSpec((1, D), cst),
            pl.BlockSpec((1, D), cst), pl.BlockSpec((1, D), cst),
        ],
        out_specs=pl.BlockSpec((tm, D), row),
        out_shape=jax.ShapeDtypeStruct((M, D), x.dtype),
        compiler_params=_cparams(("parallel",)),
    )(x, p["ff2_ln_g"], p["ff2_ln_b"], p["ff2_w1"], p["ff2_b1"], p["ff2_w2"], p["ff2_b2"],
      p["post_ln_g"], p["post_ln_b"])


# ------------------------------------------------------------------------- classifier head

def _fc_kernel(x_ref, w_ref, b_ref, o_ref):
    y = jnp.dot(x_ref[...].astype(jnp.float32), w_ref[...], preferred_element_type=jnp.float32)
    o_ref[...] = (y + b_ref[...]).astype(o_ref.dtype)


def fc_head(x, w, b):
    M, D = x.shape
    N = w.shape[1]
    return pl.pallas_call(
        _fc_kernel,
        grid=(1,),
        in_specs=[pl.BlockSpec((M, D), lambda i: (0, 0)),
                  pl.BlockSpec((D, N), lambda i: (0, 0)),
                  pl.BlockSpec((1, N), lambda i: (0, 0))],
        out_specs=pl.BlockSpec((M, N), lambda i: (0, 0)),
        out_shape=jax.ShapeDtypeStruct((M, N), x.dtype),
        compiler_params=_cparams(("arbitrary",)),
    )(x, w, b)


# --------------------------------------------------------------------------- model glue

def conformer_block(x, p, heads, ksize):
    B, N, D = x.shape
    dh = D // heads
    M = B * N

    # ff1 + attention LN + Q/K/V projections (one fused, row-tiled kernel)
    xnew, q, k, v = ff1_and_qkv(x.reshape(M, D), p)

    # Shaw relative-position bias via matmul + static skew gather (no (N, N, dh) tensor).
    qh = q.reshape(B, N, heads, dh)
    rel_idx = jnp.clip(jnp.arange(-(N - 1), N), -MAX_POS_EMB, MAX_POS_EMB) + MAX_POS_EMB
    rel_t = p["rel_pos_emb"][rel_idx]                                   # (2N-1, dh)
    s_rel = jnp.einsum("bnhd,rd->bhnr", qh, rel_t)                      # MXU matmul
    gidx = (jnp.arange(N)[:, None] - jnp.arange(N)[None, :]) + (N - 1)  # i - j + (N-1)
    pos = jnp.take_along_axis(
        s_rel, jnp.broadcast_to(gidx[None, None], (B, heads, N, N)), axis=-1)

    x3 = xnew.reshape(B, N, D)
    x3 = attention_block(x3, q.reshape(B, N, D), k.reshape(B, N, D), v.reshape(B, N, D),
                         pos, p["to_out_w"], p["to_out_b"], heads)
    x3 = conv_block(x3, p, ksize)
    x3 = ff2_post(x3.reshape(M, D), p)
    return x3.reshape(B, N, D)


def xlsr_conformer_forward(params, x_ssl_feat, cfg):
    # TODO(synk): the fairseq XLSR-300M feature extractor (SSLModel) needs its checkpoint;
    # x_ssl_feat stands in for ssl_model(x) output of shape (B, T, 1024).
    B, T, F = x_ssl_feat.shape
    D = cfg["dim"]

    x = front_ll_bn_selu(x_ssl_feat.reshape(B * T, F), params["LL_w"], params["LL_b"])
    x = x.reshape(B, T, D)

    cls = jnp.broadcast_to(params["class_token"].astype(x.dtype), (B, 1, D))
    x = jnp.concatenate([cls, x], axis=1)                               # (B, T+1, D)

    # TODO(synk): x_len / attention-mask (variable=True) path not implemented; x_len=None only.
    for blk in params["blocks"]:
        x = conformer_block(x, blk, heads=cfg["heads"], ksize=cfg["ksize"])

    embedding = x[:, 0, :]
    out = fc_head(embedding, params["fc5_w"], params["fc5_b"])
    return out, embedding


# ----------------------------------------------------------------------------- params

def init_params(key, *, dim, heads, ff_mult, exp_fac, ksize, n_layers, ssl_dim):
    dh = dim // heads
    inner = dim * exp_fac
    keys = list(jax.random.split(key, 4 + 16 * n_layers))
    it = iter(keys)

    def w(fan_in, fan_out):
        return jax.random.normal(next(it), (fan_in, fan_out), jnp.float32) * 0.02

    def zrow(n):
        return jnp.zeros((1, n), jnp.float32)

    def orow(n):
        return jnp.ones((1, n), jnp.float32)

    # Eval-mode BatchNorm1d with default (untrained) running stats.
    bn1d_scale = jnp.full((1, inner), 1.0 / math.sqrt(1.0 + BN_EPS), jnp.float32)

    params = {
        "LL_w": w(ssl_dim, dim),
        "LL_b": zrow(dim),
        "class_token": jax.random.uniform(next(it), (1, 1, dim), jnp.float32),
        "fc5_w": w(dim, 2),
        "fc5_b": zrow(2),
        "blocks": [],
    }
    for _ in range(n_layers):
        p = {
            "ff1_ln_g": orow(dim), "ff1_ln_b": zrow(dim),
            "ff1_w1": w(dim, dim * ff_mult), "ff1_b1": zrow(dim * ff_mult),
            "ff1_w2": w(dim * ff_mult, dim), "ff1_b2": zrow(dim),
            "attn_ln_g": orow(dim), "attn_ln_b": zrow(dim),
            "to_q_w": w(dim, dim),
            # to_kv weight stored pre-split into K / V halves (torch chunk order preserved)
            "to_k_w": w(dim, dim), "to_v_w": w(dim, dim),
            "to_out_w": w(dim, dim), "to_out_b": zrow(dim),
            "rel_pos_emb": jax.random.normal(next(it), (2 * MAX_POS_EMB + 1, dh), jnp.float32) * 0.02,
            "conv_ln_g": orow(dim), "conv_ln_b": zrow(dim),
            # 1x1 conv (dim -> 2*inner) stored pre-split into GLU value / gate halves
            "pw1_wa": w(dim, inner), "pw1_ba": zrow(inner),
            "pw1_wb": w(dim, inner), "pw1_bb": zrow(inner),
            # depthwise kernel stored as (ksize, inner): channel axis on lanes
            "dw_w": jax.random.normal(next(it), (ksize, inner), jnp.float32) * 0.02,
            "dw_b": zrow(inner),
            "bn1d_scale": bn1d_scale, "bn1d_shift": zrow(inner),
            "pw2_w": w(inner, dim), "pw2_b": zrow(dim),
            "ff2_ln_g": orow(dim), "ff2_ln_b": zrow(dim),
            "ff2_w1": w(dim, dim * ff_mult), "ff2_b1": zrow(dim * ff_mult),
            "ff2_w2": w(dim * ff_mult, dim), "ff2_b2": zrow(dim),
            "post_ln_g": orow(dim), "post_ln_b": zrow(dim),
        }
        params["blocks"].append(p)
    return params


# ------------------------------------------------------------------------------- main

if __name__ == "__main__":
    cfg = dict(dim=32, heads=4, ff_mult=4, exp_fac=2, ksize=7, n_layers=2, ssl_dim=1024)

    key = jax.random.PRNGKey(0)
    pkey, xkey = jax.random.split(key)
    params = init_params(pkey, **cfg)

    # x_ssl_feat plays the role of ssl_model(x) output: (batch=2, frames=8, 1024)
    x_ssl_feat = jax.random.normal(xkey, (2, 8, 1024), jnp.float32)

    fwd = jax.jit(functools.partial(xlsr_conformer_forward, cfg=cfg))
    out, emb = fwd(params, x_ssl_feat)
    jax.block_until_ready((out, emb))

    assert out.shape == (2, 2), out.shape
    assert emb.shape == (2, cfg["dim"]), emb.shape
    assert jnp.all(jnp.isfinite(out)) and jnp.all(jnp.isfinite(emb))
    print("KERNEL_OK")
</pallas_src>

<mosaic_0001>
module attributes {stable_mosaic.version = 11 : i64} {
  func.func @_front_kernel(%arg0: i32, %arg1: i32, %arg2: memref<16x512xf32, #tpu.memory_space<vmem>>, %arg3: memref<512x32xf32, #tpu.memory_space<vmem>>, %arg4: memref<1x32xf32, #tpu.memory_space<vmem>>, %arg5: memref<16x32xf32, #tpu.memory_space<vmem>>, %arg6: memref<16x32xf32, #tpu.memory_space<vmem>>) attributes {dimension_semantics = [#tpu.dimension_semantics<parallel>, #tpu.dimension_semantics<arbitrary>], iteration_bounds = array<i64: 1, 2>, scalar_prefetch = 0 : i64, scratch_operands = 1 : i64, tpu.core_type = #tpu.core_type<tc>, window_params = [{transform_indices = @transform_0, window_bounds = array<i64: 16, 512>}, {transform_indices = @transform_1, window_bounds = array<i64: 512, 32>}, {pipeline_mode = #tpu.pipeline_mode<synchronous>, transform_indices = @transform_2, window_bounds = array<i64: 1, 32>}, {transform_indices = @transform_3, window_bounds = array<i64: 16, 32>}]} {
    %c0_i32 = arith.constant 0 : i32
    %0 = arith.cmpi eq, %arg1, %c0_i32 : i32
    %1 = arith.extui %0 : i1 to i32
    %c0_i32_0 = arith.constant 0 : i32
    %2 = arith.cmpi ne, %1, %c0_i32_0 : i32
    scf.if %2 {
      %cst_9 = arith.constant 0.000000e+00 : f32
      %12 = vector.broadcast %cst_9 : f32 to vector<16x32xf32>
      %c0_10 = arith.constant 0 : index
      %c0_11 = arith.constant 0 : index
      %13 = vector.load %arg6[%c0_10, %c0_11] : memref<16x32xf32, #tpu.memory_space<vmem>>, vector<16x32xf32>
      tpu.vector_store %arg6[%c0_10, %c0_11], %12 {strides = array<i32>} : memref<16x32xf32, #tpu.memory_space<vmem>>, vector<16x32xf32>,
    } else {
    }
    %c0 = arith.constant 0 : index
    %c0_1 = arith.constant 0 : index
    %3 = vector.load %arg6[%c0, %c0_1] : memref<16x32xf32, #tpu.memory_space<vmem>>, vector<16x32xf32>
    %c0_2 = arith.constant 0 : index
    %c0_3 = arith.constant 0 : index
    %4 = vector.load %arg2[%c0_2, %c0_3] : memref<16x512xf32, #tpu.memory_space<vmem>>, vector<16x512xf32>
    %c0_4 = arith.constant 0 : index
    %c0_5 = arith.constant 0 : index
    %5 = vector.load %arg3[%c0_4, %c0_5] : memref<512x32xf32, #tpu.memory_space<vmem>>, vector<512x32xf32>
    %cst = arith.constant dense<0.000000e+00> : vector<16x32xf32>
    %6 = tpu.matmul %4, %5, %cst {dimension_numbers = #tpu.dot_dimension_numbers<[1], [0], [0], [1], [0, 0, 1, 1], [], []>} : vector<16x512xf32>, vector<512x32xf32>, vector<16x32xf32> -> vector<16x32xf32>
    %7 = arith.addf %3, %6 : vector<16x32xf32>
    %c0_6 = arith.constant 0 : index
    %c0_7 = arith.constant 0 : index
    %8 = vector.load %arg6[%c0_6, %c0_7] : memref<16x32xf32, #tpu.memory_space<vmem>>, vector<16x32xf32>
    tpu.vector_store %arg6[%c0_6, %c0_7], %7 {strides = array<i32>} : memref<16x32xf32, #tpu.memory_space<vmem>>, vector<16x32xf32>,
    %c1_i32 = arith.constant 1 : i32
    %9 = arith.cmpi eq, %arg1, %c1_i32 : i32
    %10 = arith.extui %9 : i1 to i32
    %c0_i32_8 = arith.constant 0 : i32
    %11 = arith.cmpi ne, %10, %c0_i32_8 : i32
    scf.if %11 {
      %c0_9 = arith.constant 0 : index
      %c0_10 = arith.constant 0 : index
      %12 = vector.load %arg6[%c0_9, %c0_10] : memref<16x32xf32, #tpu.memory_space<vmem>>, vector<16x32xf32>
      %c0_11 = arith.constant 0 : index
      %c0_12 = arith.constant 0 : index
      %13 = vector.load %arg4[%c0_11, %c0_12] : memref<1x32xf32, #tpu.memory_space<vmem>>, vector<1x32xf32>
      %14 = vector.broadcast %13 : vector<1x32xf32> to vector<16x32xf32>
      %15 = arith.addf %12, %14 : vector<16x32xf32>
      %cst_13 = arith.constant 0.999994993 : f32
      %16 = vector.broadcast %cst_13 : f32 to vector<16x32xf32>
      %17 = arith.mulf %15, %16 : vector<16x32xf32>
      %cst_14 = arith.constant 0.000000e+00 : f32
      %18 = vector.broadcast %cst_14 : f32 to vector<16x32xf32>
      %19 = arith.addf %17, %18 : vector<16x32xf32>
      %cst_15 = arith.constant 0.000000e+00 : f32
      %20 = vector.broadcast %cst_15 : f32 to vector<16x32xf32>
      %21 = arith.cmpf ogt, %19, %20 : vector<16x32xf32>
      %22 = math.exp %19 : vector<16x32xf32>
      %cst_16 = arith.constant 1.000000e+00 : f32
      %23 = vector.broadcast %cst_16 : f32 to vector<16x32xf32>
      %24 = arith.subf %22, %23 : vector<16x32xf32>
      %cst_17 = arith.constant 1.67326319 : f32
      %25 = vector.broadcast %cst_17 : f32 to vector<16x32xf32>
      %26 = arith.mulf %25, %24 : vector<16x32xf32>
      %27 = arith.select %21, %19, %26 : vector<16x32xi1>, vector<16x32xf32>
      %cst_18 = arith.constant 1.05070102 : f32
      %28 = vector.broadcast %cst_18 : f32 to vector<16x32xf32>
      %29 = arith.mulf %28, %27 : vector<16x32xf32>
      %c0_19 = arith.constant 0 : index
      %c0_20 = arith.constant 0 : index
      %30 = vector.load %arg5[%c0_19, %c0_20] : memref<16x32xf32, #tpu.memory_space<vmem>>, vector<16x32xf32>
      tpu.vector_store %arg5[%c0_19, %c0_20], %29 {strides = array<i32>} : memref<16x32xf32, #tpu.memory_space<vmem>>, vector<16x32xf32>,
    } else {
    }
    return
  }
  func.func @transform_0(%arg0: i32, %arg1: i32) -> (i32, i32) {
    %c0_i32 = arith.constant 0 : i32
    return %arg0, %arg1 : i32, i32
  }
  func.func @transform_1(%arg0: i32, %arg1: i32) -> (i32, i32) {
    %c0_i32 = arith.constant 0 : i32
    %c0_i32_0 = arith.constant 0 : i32
    return %arg1, %c0_i32 : i32, i32
  }
  func.func @transform_2(%arg0: i32, %arg1: i32) -> (i32, i32) {
    %c0_i32 = arith.constant 0 : i32
    %c0_i32_0 = arith.constant 0 : i32
    %c0_i32_1 = arith.constant 0 : i32
    return %c0_i32, %c0_i32_0 : i32, i32
  }
  func.func @transform_3(%arg0: i32, %arg1: i32) -> (i32, i32) {
    %c0_i32 = arith.constant 0 : i32
    %c0_i32_0 = arith.constant 0 : i32
    return %arg0, %c0_i32 : i32, i32
  }
}

module attributes {stable_mosaic.version = 11 : i64} {
  func.func @_ff1_qkv_kernel(%arg0: i32, %arg1: memref<18x32xf32, #tpu.memory_space<vmem>>, %arg2: memref<1x32xf32, #tpu.memory_space<vmem>>, %arg3: memref<1x32xf32, #tpu.memory_space<vmem>>, %arg4: memref<32x128xf32, #tpu.memory_space<vmem>>, %arg5: memref<1x128xf32, #tpu.memory_space<vmem>>, %arg6: memref<128x32xf32, #tpu.memory_space<vmem>>, %arg7: memref<1x32xf32, #tpu.memory_space<vmem>>, %arg8: memref<1x32xf32, #tpu.memory_space<vmem>>, %arg9: memref<1x32xf32, #tpu.memory_space<vmem>>, %arg10: memref<32x32xf32, #tpu.memory_space<vmem>>, %arg11: memref<32x32xf32, #tpu.memory_space<vmem>>, %arg12: memref<32x32xf32, #tpu.memory_space<vmem>>, %arg13: memref<18x32xf32, #tpu.memory_space<vmem>>, %arg14: memref<18x32xf32, #tpu.memory_space<vmem>>, %arg15: memref<18x32xf32, #tpu.memory_space<vmem>>, %arg16: memref<18x32xf32, #tpu.memory_space<vmem>>) attributes {dimension_semantics = [#tpu.dimension_semantics<parallel>], iteration_bounds = array<i64: 1>, scalar_prefetch = 0 : i64, scratch_operands = 0 : i64, tpu.core_type = #tpu.core_type<tc>, window_params = [{transform_indices = @transform_0, window_bounds = array<i64: 18, 32>}, {pipeline_mode = #tpu.pipeline_mode<synchronous>, transform_indices = @transform_1, window_bounds = array<i64: 1, 32>}, {pipeline_mode = #tpu.pipeline_mode<synchronous>, transform_indices = @transform_2, window_bounds = array<i64: 1, 32>}, {pipeline_mode = #tpu.pipeline_mode<synchronous>, transform_indices = @transform_3, window_bounds = array<i64: 32, 128>}, {pipeline_mode = #tpu.pipeline_mode<synchronous>, transform_indices = @transform_4, window_bounds = array<i64: 1, 128>}, {pipeline_mode = #tpu.pipeline_mode<synchronous>, transform_indices = @transform_5, window_bounds = array<i64: 128, 32>}, {pipeline_mode = #tpu.pipeline_mode<synchronous>, transform_indices = @transform_6, window_bounds = array<i64: 1, 32>}, {pipeline_mode = #tpu.pipeline_mode<synchronous>, transform_indices = @transform_7, window_bounds = array<i64: 1, 32>}, {pipeline_mode = #tpu.pipeline_mode<synchronous>, transform_indices = @transform_8, window_bounds = array<i64: 1, 32>}, {pipeline_mode = #tpu.pipeline_mode<synchronous>, transform_indices = @transform_9, window_bounds = array<i64: 32, 32>}, {pipeline_mode = #tpu.pipeline_mode<synchronous>, transform_indices = @transform_10, window_bounds = array<i64: 32, 32>}, {pipeline_mode = #tpu.pipeline_mode<synchronous>, transform_indices = @transform_11, window_bounds = array<i64: 32, 32>}, {transform_indices = @transform_12, window_bounds = array<i64: 18, 32>}, {transform_indices = @transform_13, window_bounds = array<i64: 18, 32>}, {transform_indices = @transform_14, window_bounds = array<i64: 18, 32>}, {transform_indices = @transform_15, window_bounds = array<i64: 18, 32>}]} {
    %c0 = arith.constant 0 : index
    %c0_0 = arith.constant 0 : index
    %0 = vector.load %arg1[%c0, %c0_0] : memref<18x32xf32, #tpu.memory_space<vmem>>, vector<18x32xf32>
    %c0_1 = arith.constant 0 : index
    %c0_2 = arith.constant 0 : index
    %1 = vector.load %arg2[%c0_1, %c0_2] : memref<1x32xf32, #tpu.memory_space<vmem>>, vector<1x32xf32>
    %c0_3 = arith.constant 0 : index
    %c0_4 = arith.constant 0 : index
    %2 = vector.load %arg3[%c0_3, %c0_4] : memref<1x32xf32, #tpu.memory_space<vmem>>, vector<1x32xf32>
    %cst = arith.constant dense<0.000000e+00> : vector<18xf32>
    %3 = vector.multi_reduction <add>, %0, %cst [1] : vector<18x32xf32> to vector<18xf32>
    %4 = vector.shape_cast %3 : vector<18xf32> to vector<18x1xf32>
    %cst_5 = arith.constant 3.200000e+01 : f32
    %5 = vector.broadcast %cst_5 : f32 to vector<18x1xf32>
    %6 = arith.divf %4, %5 : vector<18x1xf32>
    %7 = vector.broadcast %6 : vector<18x1xf32> to vector<18x32xf32>
    %8 = arith.subf %0, %7 : vector<18x32xf32>
    %9 = arith.mulf %8, %8 : vector<18x32xf32>
    %cst_6 = arith.constant dense<0.000000e+00> : vector<18xf32>
    %10 = vector.multi_reduction <add>, %9, %cst_6 [1] : vector<18x32xf32> to vector<18xf32>
    %11 = vector.shape_cast %10 : vector<18xf32> to vector<18x1xf32>
    %cst_7 = arith.constant 3.200000e+01 : f32
    %12 = vector.broadcast %cst_7 : f32 to vector<18x1xf32>
    %13 = arith.divf %11, %12 : vector<18x1xf32>
    %14 = vector.broadcast %6 : vector<18x1xf32> to vector<18x32xf32>
    %15 = arith.subf %0, %14 : vector<18x32xf32>
    %cst_8 = arith.constant 9.99999974E-6 : f32
    %16 = vector.broadcast %cst_8 : f32 to vector<18x1xf32>
    %17 = arith.addf %13, %16 : vector<18x1xf32>
    %18 = math.rsqrt %17 : vector<18x1xf32>
    %19 = vector.broadcast %18 : vector<18x1xf32> to vector<18x32xf32>
    %20 = arith.mulf %15, %19 : vector<18x32xf32>
    %21 = vector.broadcast %1 : vector<1x32xf32> to vector<18x32xf32>
    %22 = arith.mulf %20, %21 : vector<18x32xf32>
    %23 = vector.broadcast %2 : vector<1x32xf32> to vector<18x32xf32>
    %24 = arith.addf %22, %23 : vector<18x32xf32>
    %c0_9 = arith.constant 0 : index
    %c0_10 = arith.constant 0 : index
    %25 = vector.load %arg4[%c0_9, %c0_10] : memref<32x128xf32, #tpu.memory_space<vmem>>, vector<32x128xf32>
    %cst_11 = arith.constant dense<0.000000e+00> : vector<18x128xf32>
    %26 = tpu.matmul %24, %25, %cst_11 {dimension_numbers = #tpu.dot_dimension_numbers<[1], [0], [0], [1], [0, 0, 1, 1], [], []>} : vector<18x32xf32>, vector<32x128xf32>, vector<18x128xf32> -> vector<18x128xf32>
    %c0_12 = arith.constant 0 : index
    %c0_13 = arith.constant 0 : index
    %27 = vector.load %arg5[%c0_12, %c0_13] : memref<1x128xf32, #tpu.memory_space<vmem>>, vector<1x128xf32>
    %28 = vector.broadcast %27 : vector<1x128xf32> to vector<18x128xf32>
    %29 = arith.addf %26, %28 : vector<18x128xf32>
    %30 = arith.negf %29 : vector<18x128xf32>
    %31 = math.exp %30 : vector<18x128xf32>
    %cst_14 = arith.constant 1.000000e+00 : f32
    %32 = vector.broadcast %cst_14 : f32 to vector<18x128xf32>
    %33 = arith.addf %32, %31 : vector<18x128xf32>
    %34 = arith.divf %32, %33 : vector<18x128xf32>
    %35 = arith.mulf %29, %34 : vector<18x128xf32>
    %c0_15 = arith.constant 0 : index
    %c0_16 = arith.constant 0 : index
    %36 = vector.load %arg6[%c0_15, %c0_16] : memref<128x32xf32, #tpu.memory_space<vmem>>, vector<128x32xf32>
    %cst_17 = arith.constant dense<0.000000e+00> : vector<18x32xf32>
    %37 = tpu.matmul %35, %36, %cst_17 {dimension_numbers = #tpu.dot_dimension_numbers<[1], [0], [0], [1], [0, 0, 1, 1], [], []>} : vector<18x128xf32>, vector<128x32xf32>, vector<18x32xf32> -> vector<18x32xf32>
    %c0_18 = arith.constant 0 : index
    %c0_19 = arith.constant 0 : index
    %38 = vector.load %arg7[%c0_18, %c0_19] : memref<1x32xf32, #tpu.memory_space<vmem>>, vector<1x32xf32>
    %39 = vector.broadcast %38 : vector<1x32xf32> to vector<18x32xf32>
    %40 = arith.addf %37, %39 : vector<18x32xf32>
    %cst_20 = arith.constant 5.000000e-01 : f32
    %41 = vector.broadcast %cst_20 : f32 to vector<18x32xf32>
    %42 = arith.mulf %41, %40 : vector<18x32xf32>
    %43 = arith.addf %0, %42 : vector<18x32xf32>
    %c0_21 = arith.constant 0 : index
    %c0_22 = arith.constant 0 : index
    %44 = vector.load %arg13[%c0_21, %c0_22] : memref<18x32xf32, #tpu.memory_space<vmem>>, vector<18x32xf32>
    tpu.vector_store %arg13[%c0_21, %c0_22], %43 {strides = array<i32>} : memref<18x32xf32, #tpu.memory_space<vmem>>, vector<18x32xf32>,
    %c0_23 = arith.constant 0 : index
    %c0_24 = arith.constant 0 : index
    %45 = vector.load %arg8[%c0_23, %c0_24] : memref<1x32xf32, #tpu.memory_space<vmem>>, vector<1x32xf32>
    %c0_25 = arith.constant 0 : index
    %c0_26 = arith.constant 0 : index
    %46 = vector.load %arg9[%c0_25, %c0_26] : memref<1x32xf32, #tpu.memory_space<vmem>>, vector<1x32xf32>
    %cst_27 = arith.constant dense<0.000000e+00> : vector<18xf32>
    %47 = vector.multi_reduction <add>, %43, %cst_27 [1] : vector<18x32xf32> to vector<18xf32>
    %48 = vector.shape_cast %47 : vector<18xf32> to vector<18x1xf32>
    %cst_28 = arith.constant 3.200000e+01 : f32
    %49 = vector.broadcast %cst_28 : f32 to vector<18x1xf32>
    %50 = arith.divf %48, %49 : vector<18x1xf32>
    %51 = vector.broadcast %50 : vector<18x1xf32> to vector<18x32xf32>
    %52 = arith.subf %43, %51 : vector<18x32xf32>
    %53 = arith.mulf %52, %52 : vector<18x32xf32>
    %cst_29 = arith.constant dense<0.000000e+00> : vector<18xf32>
    %54 = vector.multi_reduction <add>, %53, %cst_29 [1] : vector<18x32xf32> to vector<18xf32>
    %55 = vector.shape_cast %54 : vector<18xf32> to vector<18x1xf32>
    %cst_30 = arith.constant 3.200000e+01 : f32
    %56 = vector.broadcast %cst_30 : f32 to vector<18x1xf32>
    %57 = arith.divf %55, %56 : vector<18x1xf32>
    %58 = vector.broadcast %50 : vector<18x1xf32> to vector<18x32xf32>
    %59 = arith.subf %43, %58 : vector<18x32xf32>
    %cst_31 = arith.constant 9.99999974E-6 : f32
    %60 = vector.broadcast %cst_31 : f32 to vector<18x1xf32>
    %61 = arith.addf %57, %60 : vector<18x1xf32>
    %62 = math.rsqrt %61 : vector<18x1xf32>
    %63 = vector.broadcast %62 : vector<18x1xf32> to vector<18x32xf32>
    %64 = arith.mulf %59, %63 : vector<18x32xf32>
    %65 = vector.broadcast %45 : vector<1x32xf32> to vector<18x32xf32>
    %66 = arith.mulf %64, %65 : vector<18x32xf32>
    %67 = vector.broadcast %46 : vector<1x32xf32> to vector<18x32xf32>
    %68 = arith.addf %66, %67 : vector<18x32xf32>
    %c0_32 = arith.constant 0 : index
    %c0_33 = arith.constant 0 : index
    %69 = vector.load %arg10[%c0_32, %c0_33] : memref<32x32xf32, #tpu.memory_space<vmem>>, vector<32x32xf32>
    %cst_34 = arith.constant dense<0.000000e+00> : vector<18x32xf32>
    %70 = tpu.matmul %68, %69, %cst_34 {dimension_numbers = #tpu.dot_dimension_numbers<[1], [0], [0], [1], [0, 0, 1, 1], [], []>} : vector<18x32xf32>, vector<32x32xf32>, vector<18x32xf32> -> vector<18x32xf32>
    %c0_35 = arith.constant 0 : index
    %c0_36 = arith.constant 0 : index
    %71 = vector.load %arg14[%c0_35, %c0_36] : memref<18x32xf32, #tpu.memory_space<vmem>>, vector<18x32xf32>
    tpu.vector_store %arg14[%c0_35, %c0_36], %70 {strides = array<i32>} : memref<18x32xf32, #tpu.memory_space<vmem>>, vector<18x32xf32>,
    %c0_37 = arith.constant 0 : index
    %c0_38 = arith.constant 0 : index
    %72 = vector.load %arg11[%c0_37, %c0_38] : memref<32x32xf32, #tpu.memory_space<vmem>>, vector<32x32xf32>
    %cst_39 = arith.constant dense<0.000000e+00> : vector<18x32xf32>
    %73 = tpu.matmul %68, %72, %cst_39 {dimension_numbers = #tpu.dot_dimension_numbers<[1], [0], [0], [1], [0, 0, 1, 1], [], []>} : vector<18x32xf32>, vector<32x32xf32>, vector<18x32xf32> -> vector<18x32xf32>
    %c0_40 = arith.constant 0 : index
    %c0_41 = arith.constant 0 : index
    %74 = vector.load %arg15[%c0_40, %c0_41] : memref<18x32xf32, #tpu.memory_space<vmem>>, vector<18x32xf32>
    tpu.vector_store %arg15[%c0_40, %c0_41], %73 {strides = array<i32>} : memref<18x32xf32, #tpu.memory_space<vmem>>, vector<18x32xf32>,
    %c0_42 = arith.constant 0 : index
    %c0_43 = arith.constant 0 : index
    %75 = vector.load %arg12[%c0_42, %c0_43] : memref<32x32xf32, #tpu.memory_space<vmem>>, vector<32x32xf32>
    %cst_44 = arith.constant dense<0.000000e+00> : vector<18x32xf32>
    %76 = tpu.matmul %68, %75, %cst_44 {dimension_numbers = #tpu.dot_dimension_numbers<[1], [0], [0], [1], [0, 0, 1, 1], [], []>} : vector<18x32xf32>, vector<32x32xf32>, vector<18x32xf32> -> vector<18x32xf32>
    %c0_45 = arith.constant 0 : index
    %c0_46 = arith.constant 0 : index
    %77 = vector.load %arg16[%c0_45, %c0_46] : memref<18x32xf32, #tpu.memory_space<vmem>>, vector<18x32xf32>
    tpu.vector_store %arg16[%c0_45, %c0_46], %76 {strides = array<i32>} : memref<18x32xf32, #tpu.memory_space<vmem>>, vector<18x32xf32>,
    return
  }
  func.func @transform_0(%arg0: i32) -> (i32, i32) {
    %c0_i32 = arith.constant 0 : i32
    %c0_i32_0 = arith.constant 0 : i32
    return %arg0, %c0_i32 : i32, i32
  }
  func.func @transform_1(%arg0: i32) -> (i32, i32) {
    %c0_i32 = arith.constant 0 : i32
    %c0_i32_0 = arith.constant 0 : i32
    %c0_i32_1 = arith.constant 0 : i32
    return %c0_i32, %c0_i32_0 : i32, i32
  }
  func.func @transform_2(%arg0: i32) -> (i32, i32) {
    %c0_i32 = arith.constant 0 : i32
    %c0_i32_0 = arith.constant 0 : i32
    %c0_i32_1 = arith.constant 0 : i32
    return %c0_i32, %c0_i32_0 : i32, i32
  }
  func.func @transform_3(%arg0: i32) -> (i32, i32) {
    %c0_i32 = arith.constant 0 : i32
    %c0_i32_0 = arith.constant 0 : i32
    %c0_i32_1 = arith.constant 0 : i32
    return %c0_i32, %c0_i32_0 : i32, i32
  }
  func.func @transform_4(%arg0: i32) -> (i32, i32) {
    %c0_i32 = arith.constant 0 : i32
    %c0_i32_0 = arith.constant 0 : i32
    %c0_i32_1 = arith.constant 0 : i32
    return %c0_i32, %c0_i32_0 : i32, i32
  }
  func.func @transform_5(%arg0: i32) -> (i32, i32) {
    %c0_i32 = arith.constant 0 : i32
    %c0_i32_0 = arith.constant 0 : i32
    %c0_i32_1 = arith.constant 0 : i32
    return %c0_i32, %c0_i32_0 : i32, i32
  }
  func.func @transform_6(%arg0: i32) -> (i32, i32) {
    %c0_i32 = arith.constant 0 : i32
    %c0_i32_0 = arith.constant 0 : i32
    %c0_i32_1 = arith.constant 0 : i32
    return %c0_i32, %c0_i32_0 : i32, i32
  }
  func.func @transform_7(%arg0: i32) -> (i32, i32) {
    %c0_i32 = arith.constant 0 : i32
    %c0_i32_0 = arith.constant 0 : i32
    %c0_i32_1 = arith.constant 0 : i32
    return %c0_i32, %c0_i32_0 : i32, i32
  }
  func.func @transform_8(%arg0: i32) -> (i32, i32) {
    %c0_i32 = arith.constant 0 : i32
    %c0_i32_0 = arith.constant 0 : i32
    %c0_i32_1 = arith.constant 0 : i32
    return %c0_i32, %c0_i32_0 : i32, i32
  }
  func.func @transform_9(%arg0: i32) -> (i32, i32) {
    %c0_i32 = arith.constant 0 : i32
    %c0_i32_0 = arith.constant 0 : i32
    %c0_i32_1 = arith.constant 0 : i32
    return %c0_i32, %c0_i32_0 : i32, i32
  }
  func.func @transform_10(%arg0: i32) -> (i32, i32) {
    %c0_i32 = arith.constant 0 : i32
    %c0_i32_0 = arith.constant 0 : i32
    %c0_i32_1 = arith.constant 0 : i32
    return %c0_i32, %c0_i32_0 : i32, i32
  }
  func.func @transform_11(%arg0: i32) -> (i32, i32) {
    %c0_i32 = arith.constant 0 : i32
    %c0_i32_0 = arith.constant 0 : i32
    %c0_i32_1 = arith.constant 0 : i32
    return %c0_i32, %c0_i32_0 : i32, i32
  }
  func.func @transform_12(%arg0: i32) -> (i32, i32) {
    %c0_i32 = arith.constant 0 : i32
    %c0_i32_0 = arith.constant 0 : i32
    return %arg0, %c0_i32 : i32, i32
  }
  func.func @transform_13(%arg0: i32) -> (i32, i32) {
    %c0_i32 = arith.constant 0 : i32
    %c0_i32_0 = arith.constant 0 : i32
    return %arg0, %c0_i32 : i32, i32
  }
  func.func @transform_14(%arg0: i32) -> (i32, i32) {
    %c0_i32 = arith.constant 0 : i32
    %c0_i32_0 = arith.constant 0 : i32
    return %arg0, %c0_i32 : i32, i32
  }
  func.func @transform_15(%arg0: i32) -> (i32, i32) {
    %c0_i32 = arith.constant 0 : i32
    %c0_i32_0 = arith.constant 0 : i32
    return %arg0, %c0_i32 : i32, i32
  }
}

module attributes {stable_mosaic.version = 11 : i64} {
  func.func @_attn_core_kernel(%arg0: i32, %arg1: memref<1x9x32xf32, #tpu.memory_space<vmem>>, %arg2: memref<1x9x32xf32, #tpu.memory_space<vmem>>, %arg3: memref<1x9x32xf32, #tpu.memory_space<vmem>>, %arg4: memref<1x4x9x9xf32, #tpu.memory_space<vmem>>, %arg5: memref<1x9x32xf32, #tpu.memory_space<vmem>>, %arg6: memref<32x32xf32, #tpu.memory_space<vmem>>, %arg7: memref<1x32xf32, #tpu.memory_space<vmem>>, %arg8: memref<1x9x32xf32, #tpu.memory_space<vmem>>) attributes {dimension_semantics = [#tpu.dimension_semantics<parallel>], iteration_bounds = array<i64: 2>, scalar_prefetch = 0 : i64, scratch_operands = 0 : i64, tpu.core_type = #tpu.core_type<tc>, window_params = [{transform_indices = @transform_0, window_bounds = array<i64: 1, 9, 32>}, {transform_indices = @transform_1, window_bounds = array<i64: 1, 9, 32>}, {transform_indices = @transform_2, window_bounds = array<i64: 1, 9, 32>}, {transform_indices = @transform_3, window_bounds = array<i64: 1, 4, 9, 9>}, {transform_indices = @transform_4, window_bounds = array<i64: 1, 9, 32>}, {pipeline_mode = #tpu.pipeline_mode<synchronous>, transform_indices = @transform_5, window_bounds = array<i64: 32, 32>}, {pipeline_mode = #tpu.pipeline_mode<synchronous>, transform_indices = @transform_6, window_bounds = array<i64: 1, 32>}, {transform_indices = @transform_7, window_bounds = array<i64: 1, 9, 32>}]} {
    %c0 = arith.constant 0 : index
    %c0_0 = arith.constant 0 : index
    %c0_1 = arith.constant 0 : index
    %0 = vector.load %arg1[%c0, %c0_0, %c0_1] : memref<1x9x32xf32, #tpu.memory_space<vmem>>, vector<1x9x32xf32>
    %1 = vector.shape_cast %0 : vector<1x9x32xf32> to vector<9x32xf32>
    %c0_2 = arith.constant 0 : index
    %c0_3 = arith.constant 0 : index
    %c0_4 = arith.constant 0 : index
    %2 = vector.load %arg2[%c0_2, %c0_3, %c0_4] : memref<1x9x32xf32, #tpu.memory_space<vmem>>, vector<1x9x32xf32>
    %3 = vector.shape_cast %2 : vector<1x9x32xf32> to vector<9x32xf32>
    %c0_5 = arith.constant 0 : index
    %c0_6 = arith.constant 0 : index
    %c0_7 = arith.constant 0 : index
    %4 = vector.load %arg3[%c0_5, %c0_6, %c0_7] : memref<1x9x32xf32, #tpu.memory_space<vmem>>, vector<1x9x32xf32>
    %5 = vector.shape_cast %4 : vector<1x9x32xf32> to vector<9x32xf32>
    %c0_8 = arith.constant 0 : index
    %c0_9 = arith.constant 0 : index
    %c0_10 = arith.constant 0 : index
    %6 = vector.load %arg5[%c0_8, %c0_9, %c0_10] : memref<1x9x32xf32, #tpu.memory_space<vmem>>, vector<1x9x32xf32>
    %7 = vector.shape_cast %6 : vector<1x9x32xf32> to vector<9x32xf32>
    %c0_11 = arith.constant 0 : index
    %c0_12 = arith.constant 0 : index
    %8 = vector.load %arg7[%c0_11, %c0_12] : memref<1x32xf32, #tpu.memory_space<vmem>>, vector<1x32xf32>
    %9 = vector.broadcast %8 : vector<1x32xf32> to vector<9x32xf32>
    %10 = arith.addf %7, %9 : vector<9x32xf32>
    %11 = vector.extract_strided_slice %1 {offsets = [0, 0], sizes = [9, 8], strides = [1, 1]} : vector<9x32xf32> to vector<9x8xf32>
    %12 = vector.extract_strided_slice %3 {offsets = [0, 0], sizes = [9, 8], strides = [1, 1]} : vector<9x32xf32> to vector<9x8xf32>
    %13 = vector.extract_strided_slice %5 {offsets = [0, 0], sizes = [9, 8], strides = [1, 1]} : vector<9x32xf32> to vector<9x8xf32>
    %cst = arith.constant dense<0.000000e+00> : vector<9x9xf32>
    %14 = tpu.matmul %11, %12, %cst {dimension_numbers = #tpu.dot_dimension_numbers<[1], [1], [0], [0], [0, 0, 1, 0], [], []>} : vector<9x8xf32>, vector<9x8xf32>, vector<9x9xf32> -> vector<9x9xf32>
    %c0_13 = arith.constant 0 : index
    %c0_14 = arith.constant 0 : index
    %c0_15 = arith.constant 0 : index
    %c0_16 = arith.constant 0 : index
    %15 = vector.load %arg4[%c0_13, %c0_14, %c0_15, %c0_16] : memref<1x4x9x9xf32, #tpu.memory_space<vmem>>, vector<1x1x9x9xf32>
    %16 = vector.shape_cast %15 : vector<1x1x9x9xf32> to vector<9x9xf32>
    %17 = arith.addf %14, %16 : vector<9x9xf32>
    %cst_17 = arith.constant 0.353553385 : f32
    %18 = vector.broadcast %cst_17 : f32 to vector<9x9xf32>
    %19 = arith.mulf %17, %18 : vector<9x9xf32>
    %cst_18 = arith.constant dense<0xFF800000> : vector<9xf32>
    %20 = vector.multi_reduction <maximumf>, %19, %cst_18 [1] : vector<9x9xf32> to vector<9xf32>
    %21 = vector.shape_cast %20 : vector<9xf32> to vector<9x1xf32>
    %22 = vector.broadcast %21 : vector<9x1xf32> to vector<9x9xf32>
    %23 = arith.subf %19, %22 : vector<9x9xf32>
    %24 = math.exp %23 : vector<9x9xf32>
    %cst_19 = arith.constant dense<0.000000e+00> : vector<9xf32>
    %25 = vector.multi_reduction <add>, %24, %cst_19 [1] : vector<9x9xf32> to vector<9xf32>
    %26 = vector.shape_cast %25 : vector<9xf32> to vector<9x1xf32>
    %27 = tpu.reciprocal %26 {approx = true} : vector<9x1xf32> -> vector<9x1xf32>
    %28 = vector.broadcast %27 : vector<9x1xf32> to vector<9x9xf32>
    %29 = arith.mulf %24, %28 : vector<9x9xf32>
    %cst_20 = arith.constant dense<0.000000e+00> : vector<9x8xf32>
    %30 = tpu.matmul %29, %13, %cst_20 {dimension_numbers = #tpu.dot_dimension_numbers<[1], [0], [0], [1], [0, 0, 1, 1], [], []>} : vector<9x9xf32>, vector<9x8xf32>, vector<9x8xf32> -> vector<9x8xf32>
    %c0_21 = arith.constant 0 : index
    %c0_22 = arith.constant 0 : index
    %31 = vector.load %arg6[%c0_21, %c0_22] : memref<32x32xf32, #tpu.memory_space<vmem>>, vector<8x32xf32>
    %cst_23 = arith.constant dense<0.000000e+00> : vector<9x32xf32>
    %32 = tpu.matmul %30, %31, %cst_23 {dimension_numbers = #tpu.dot_dimension_numbers<[1], [0], [0], [1], [0, 0, 1, 1], [], []>} : vector<9x8xf32>, vector<8x32xf32>, vector<9x32xf32> -> vector<9x32xf32>
    %33 = arith.addf %10, %32 : vector<9x32xf32>
    %34 = vector.extract_strided_slice %1 {offsets = [0, 8], sizes = [9, 8], strides = [1, 1]} : vector<9x32xf32> to vector<9x8xf32>
    %35 = vector.extract_strided_slice %3 {offsets = [0, 8], sizes = [9, 8], strides = [1, 1]} : vector<9x32xf32> to vector<9x8xf32>
    %36 = vector.extract_strided_slice %5 {offsets = [0, 8], sizes = [9, 8], strides = [1, 1]} : vector<9x32xf32> to vector<9x8xf32>
    %cst_24 = arith.constant dense<0.000000e+00> : vector<9x9xf32>
    %37 = tpu.matmul %34, %35, %cst_24 {dimension_numbers = #tpu.dot_dimension_numbers<[1], [1], [0], [0], [0, 0, 1, 0], [], []>} : vector<9x8xf32>, vector<9x8xf32>, vector<9x9xf32> -> vector<9x9xf32>
    %c0_25 = arith.constant 0 : index
    %c1 = arith.constant 1 : index
    %c0_26 = arith.constant 0 : index
    %c0_27 = arith.constant 0 : index
    %38 = vector.load %arg4[%c0_25, %c1, %c0_26, %c0_27] : memref<1x4x9x9xf32, #tpu.memory_space<vmem>>, vector<1x1x9x9xf32>
    %39 = vector.shape_cast %38 : vector<1x1x9x9xf32> to vector<9x9xf32>
    %40 = arith.addf %37, %39 : vector<9x9xf32>
    %cst_28 = arith.constant 0.353553385 : f32
    %41 = vector.broadcast %cst_28 : f32 to vector<9x9xf32>
    %42 = arith.mulf %40, %41 : vector<9x9xf32>
    %cst_29 = arith.constant dense<0xFF800000> : vector<9xf32>
    %43 = vector.multi_reduction <maximumf>, %42, %cst_29 [1] : vector<9x9xf32> to vector<9xf32>
    %44 = vector.shape_cast %43 : vector<9xf32> to vector<9x1xf32>
    %45 = vector.broadcast %44 : vector<9x1xf32> to vector<9x9xf32>
    %46 = arith.subf %42, %45 : vector<9x9xf32>
    %47 = math.exp %46 : vector<9x9xf32>
    %cst_30 = arith.constant dense<0.000000e+00> : vector<9xf32>
    %48 = vector.multi_reduction <add>, %47, %cst_30 [1] : vector<9x9xf32> to vector<9xf32>
    %49 = vector.shape_cast %48 : vector<9xf32> to vector<9x1xf32>
    %50 = tpu.reciprocal %49 {approx = true} : vector<9x1xf32> -> vector<9x1xf32>
    %51 = vector.broadcast %50 : vector<9x1xf32> to vector<9x9xf32>
    %52 = arith.mulf %47, %51 : vector<9x9xf32>
    %cst_31 = arith.constant dense<0.000000e+00> : vector<9x8xf32>
    %53 = tpu.matmul %52, %36, %cst_31 {dimension_numbers = #tpu.dot_dimension_numbers<[1], [0], [0], [1], [0, 0, 1, 1], [], []>} : vector<9x9xf32>, vector<9x8xf32>, vector<9x8xf32> -> vector<9x8xf32>
    %c8 = arith.constant 8 : index
    %c0_32 = arith.constant 0 : index
    %54 = vector.load %arg6[%c8, %c0_32] : memref<32x32xf32, #tpu.memory_space<vmem>>, vector<8x32xf32>
    %cst_33 = arith.constant dense<0.000000e+00> : vector<9x32xf32>
    %55 = tpu.matmul %53, %54, %cst_33 {dimension_numbers = #tpu.dot_dimension_numbers<[1], [0], [0], [1], [0, 0, 1, 1], [], []>} : vector<9x8xf32>, vector<8x32xf32>, vector<9x32xf32> -> vector<9x32xf32>
    %56 = arith.addf %33, %55 : vector<9x32xf32>
    %57 = vector.extract_strided_slice %1 {offsets = [0, 16], sizes = [9, 8], strides = [1, 1]} : vector<9x32xf32> to vector<9x8xf32>
    %58 = vector.extract_strided_slice %3 {offsets = [0, 16], sizes = [9, 8], strides = [1, 1]} : vector<9x32xf32> to vector<9x8xf32>
    %59 = vector.extract_strided_slice %5 {offsets = [0, 16], sizes = [9, 8], strides = [1, 1]} : vector<9x32xf32> to vector<9x8xf32>
    %cst_34 = arith.constant dense<0.000000e+00> : vector<9x9xf32>
    %60 = tpu.matmul %57, %58, %cst_34 {dimension_numbers = #tpu.dot_dimension_numbers<[1], [1], [0], [0], [0, 0, 1, 0], [], []>} : vector<9x8xf32>, vector<9x8xf32>, vector<9x9xf32> -> vector<9x9xf32>
    %c0_35 = arith.constant 0 : index
    %c2 = arith.constant 2 : index
    %c0_36 = arith.constant 0 : index
    %c0_37 = arith.constant 0 : index
    %61 = vector.load %arg4[%c0_35, %c2, %c0_36, %c0_37] : memref<1x4x9x9xf32, #tpu.memory_space<vmem>>, vector<1x1x9x9xf32>
    %62 = vector.shape_cast %61 : vector<1x1x9x9xf32> to vector<9x9xf32>
    %63 = arith.addf %60, %62 : vector<9x9xf32>
    %cst_38 = arith.constant 0.353553385 : f32
    %64 = vector.broadcast %cst_38 : f32 to vector<9x9xf32>
    %65 = arith.mulf %63, %64 : vector<9x9xf32>
    %cst_39 = arith.constant dense<0xFF800000> : vector<9xf32>
    %66 = vector.multi_reduction <maximumf>, %65, %cst_39 [1] : vector<9x9xf32> to vector<9xf32>
    %67 = vector.shape_cast %66 : vector<9xf32> to vector<9x1xf32>
    %68 = vector.broadcast %67 : vector<9x1xf32> to vector<9x9xf32>
    %69 = arith.subf %65, %68 : vector<9x9xf32>
    %70 = math.exp %69 : vector<9x9xf32>
    %cst_40 = arith.constant dense<0.000000e+00> : vector<9xf32>
    %71 = vector.multi_reduction <add>, %70, %cst_40 [1] : vector<9x9xf32> to vector<9xf32>
    %72 = vector.shape_cast %71 : vector<9xf32> to vector<9x1xf32>
    %73 = tpu.reciprocal %72 {approx = true} : vector<9x1xf32> -> vector<9x1xf32>
    %74 = vector.broadcast %73 : vector<9x1xf32> to vector<9x9xf32>
    %75 = arith.mulf %70, %74 : vector<9x9xf32>
    %cst_41 = arith.constant dense<0.000000e+00> : vector<9x8xf32>
    %76 = tpu.matmul %75, %59, %cst_41 {dimension_numbers = #tpu.dot_dimension_numbers<[1], [0], [0], [1], [0, 0, 1, 1], [], []>} : vector<9x9xf32>, vector<9x8xf32>, vector<9x8xf32> -> vector<9x8xf32>
    %c16 = arith.constant 16 : index
    %c0_42 = arith.constant 0 : index
    %77 = vector.load %arg6[%c16, %c0_42] : memref<32x32xf32, #tpu.memory_space<vmem>>, vector<8x32xf32>
    %cst_43 = arith.constant dense<0.000000e+00> : vector<9x32xf32>
    %78 = tpu.matmul %76, %77, %cst_43 {dimension_numbers = #tpu.dot_dimension_numbers<[1], [0], [0], [1], [0, 0, 1, 1], [], []>} : vector<9x8xf32>, vector<8x32xf32>, vector<9x32xf32> -> vector<9x32xf32>
    %79 = arith.addf %56, %78 : vector<9x32xf32>
    %80 = vector.extract_strided_slice %1 {offsets = [0, 24], sizes = [9, 8], strides = [1, 1]} : vector<9x32xf32> to vector<9x8xf32>
    %81 = vector.extract_strided_slice %3 {offsets = [0, 24], sizes = [9, 8], strides = [1, 1]} : vector<9x32xf32> to vector<9x8xf32>
    %82 = vector.extract_strided_slice %5 {offsets = [0, 24], sizes = [9, 8], strides = [1, 1]} : vector<9x32xf32> to vector<9x8xf32>
    %cst_44 = arith.constant dense<0.000000e+00> : vector<9x9xf32>
    %83 = tpu.matmul %80, %81, %cst_44 {dimension_numbers = #tpu.dot_dimension_numbers<[1], [1], [0], [0], [0, 0, 1, 0], [], []>} : vector<9x8xf32>, vector<9x8xf32>, vector<9x9xf32> -> vector<9x9xf32>
    %c0_45 = arith.constant 0 : index
    %c3 = arith.constant 3 : index
    %c0_46 = arith.constant 0 : index
    %c0_47 = arith.constant 0 : index
    %84 = vector.load %arg4[%c0_45, %c3, %c0_46, %c0_47] : memref<1x4x9x9xf32, #tpu.memory_space<vmem>>, vector<1x1x9x9xf32>
    %85 = vector.shape_cast %84 : vector<1x1x9x9xf32> to vector<9x9xf32>
    %86 = arith.addf %83, %85 : vector<9x9xf32>
    %cst_48 = arith.constant 0.353553385 : f32
    %87 = vector.broadcast %cst_48 : f32 to vector<9x9xf32>
    %88 = arith.mulf %86, %87 : vector<9x9xf32>
    %cst_49 = arith.constant dense<0xFF800000> : vector<9xf32>
    %89 = vector.multi_reduction <maximumf>, %88, %cst_49 [1] : vector<9x9xf32> to vector<9xf32>
    %90 = vector.shape_cast %89 : vector<9xf32> to vector<9x1xf32>
    %91 = vector.broadcast %90 : vector<9x1xf32> to vector<9x9xf32>
    %92 = arith.subf %88, %91 : vector<9x9xf32>
    %93 = math.exp %92 : vector<9x9xf32>
    %cst_50 = arith.constant dense<0.000000e+00> : vector<9xf32>
    %94 = vector.multi_reduction <add>, %93, %cst_50 [1] : vector<9x9xf32> to vector<9xf32>
    %95 = vector.shape_cast %94 : vector<9xf32> to vector<9x1xf32>
    %96 = tpu.reciprocal %95 {approx = true} : vector<9x1xf32> -> vector<9x1xf32>
    %97 = vector.broadcast %96 : vector<9x1xf32> to vector<9x9xf32>
    %98 = arith.mulf %93, %97 : vector<9x9xf32>
    %cst_51 = arith.constant dense<0.000000e+00> : vector<9x8xf32>
    %99 = tpu.matmul %98, %82, %cst_51 {dimension_numbers = #tpu.dot_dimension_numbers<[1], [0], [0], [1], [0, 0, 1, 1], [], []>} : vector<9x9xf32>, vector<9x8xf32>, vector<9x8xf32> -> vector<9x8xf32>
    %c24 = arith.constant 24 : index
    %c0_52 = arith.constant 0 : index
    %100 = vector.load %arg6[%c24, %c0_52] : memref<32x32xf32, #tpu.memory_space<vmem>>, vector<8x32xf32>
    %cst_53 = arith.constant dense<0.000000e+00> : vector<9x32xf32>
    %101 = tpu.matmul %99, %100, %cst_53 {dimension_numbers = #tpu.dot_dimension_numbers<[1], [0], [0], [1], [0, 0, 1, 1], [], []>} : vector<9x8xf32>, vector<8x32xf32>, vector<9x32xf32> -> vector<9x32xf32>
    %102 = arith.addf %79, %101 : vector<9x32xf32>
    %c0_54 = arith.constant 0 : index
    %c0_55 = arith.constant 0 : index
    %c0_56 = arith.constant 0 : index
    %103 = vector.load %arg8[%c0_54, %c0_55, %c0_56] : memref<1x9x32xf32, #tpu.memory_space<vmem>>, vector<1x9x32xf32>
    %104 = vector.shape_cast %103 : vector<1x9x32xf32> to vector<9x32xf32>
    %105 = vector.shape_cast %102 : vector<9x32xf32> to vector<1x9x32xf32>
    tpu.vector_store %arg8[%c0_54, %c0_55, %c0_56], %105 {strides = array<i32>} : memref<1x9x32xf32, #tpu.memory_space<vmem>>, vector<1x9x32xf32>,
    return
  }
  func.func @transform_0(%arg0: i32) -> (i32, i32, i32) {
    %c0_i32 = arith.constant 0 : i32
    %c0_i32_0 = arith.constant 0 : i32
    %c0_i32_1 = arith.constant 0 : i32
    return %arg0, %c0_i32, %c0_i32_0 : i32, i32, i32
  }
  func.func @transform_1(%arg0: i32) -> (i32, i32, i32) {
    %c0_i32 = arith.constant 0 : i32
    %c0_i32_0 = arith.constant 0 : i32
    %c0_i32_1 = arith.constant 0 : i32
    return %arg0, %c0_i32, %c0_i32_0 : i32, i32, i32
  }
  func.func @transform_2(%arg0: i32) -> (i32, i32, i32) {
    %c0_i32 = arith.constant 0 : i32
    %c0_i32_0 = arith.constant 0 : i32
    %c0_i32_1 = arith.constant 0 : i32
    return %arg0, %c0_i32, %c0_i32_0 : i32, i32, i32
  }
  func.func @transform_3(%arg0: i32) -> (i32, i32, i32, i32) {
    %c0_i32 = arith.constant 0 : i32
    %c0_i32_0 = arith.constant 0 : i32
    %c0_i32_1 = arith.constant 0 : i32
    %c0_i32_2 = arith.constant 0 : i32
    return %arg0, %c0_i32, %c0_i32_0, %c0_i32_1 : i32, i32, i32, i32
  }
  func.func @transform_4(%arg0: i32) -> (i32, i32, i32) {
    %c0_i32 = arith.constant 0 : i32
    %c0_i32_0 = arith.constant 0 : i32
    %c0_i32_1 = arith.constant 0 : i32
    return %arg0, %c0_i32, %c0_i32_0 : i32, i32, i32
  }
  func.func @transform_5(%arg0: i32) -> (i32, i32) {
    %c0_i32 = arith.constant 0 : i32
    %c0_i32_0 = arith.constant 0 : i32
    %c0_i32_1 = arith.constant 0 : i32
    return %c0_i32, %c0_i32_0 : i32, i32
  }
  func.func @transform_6(%arg0: i32) -> (i32, i32) {
    %c0_i32 = arith.constant 0 : i32
    %c0_i32_0 = arith.constant 0 : i32
    %c0_i32_1 = arith.constant 0 : i32
    return %c0_i32, %c0_i32_0 : i32, i32
  }
  func.func @transform_7(%arg0: i32) -> (i32, i32, i32) {
    %c0_i32 = arith.constant 0 : i32
    %c0_i32_0 = arith.constant 0 : i32
    %c0_i32_1 = arith.constant 0 : i32
    return %arg0, %c0_i32, %c0_i32_0 : i32, i32, i32
  }
}

module attributes {stable_mosaic.version = 11 : i64} {
  func.func @_ff2_post_kernel(%arg0: i32, %arg1: memref<18x32xf32, #tpu.memory_space<vmem>>, %arg2: memref<1x32xf32, #tpu.memory_space<vmem>>, %arg3: memref<1x32xf32, #tpu.memory_space<vmem>>, %arg4: memref<32x128xf32, #tpu.memory_space<vmem>>, %arg5: memref<1x128xf32, #tpu.memory_space<vmem>>, %arg6: memref<128x32xf32, #tpu.memory_space<vmem>>, %arg7: memref<1x32xf32, #tpu.memory_space<vmem>>, %arg8: memref<1x32xf32, #tpu.memory_space<vmem>>, %arg9: memref<1x32xf32, #tpu.memory_space<vmem>>, %arg10: memref<18x32xf32, #tpu.memory_space<vmem>>) attributes {dimension_semantics = [#tpu.dimension_semantics<parallel>], iteration_bounds = array<i64: 1>, scalar_prefetch = 0 : i64, scratch_operands = 0 : i64, tpu.core_type = #tpu.core_type<tc>, window_params = [{transform_indices = @transform_0, window_bounds = array<i64: 18, 32>}, {pipeline_mode = #tpu.pipeline_mode<synchronous>, transform_indices = @transform_1, window_bounds = array<i64: 1, 32>}, {pipeline_mode = #tpu.pipeline_mode<synchronous>, transform_indices = @transform_2, window_bounds = array<i64: 1, 32>}, {pipeline_mode = #tpu.pipeline_mode<synchronous>, transform_indices = @transform_3, window_bounds = array<i64: 32, 128>}, {pipeline_mode = #tpu.pipeline_mode<synchronous>, transform_indices = @transform_4, window_bounds = array<i64: 1, 128>}, {pipeline_mode = #tpu.pipeline_mode<synchronous>, transform_indices = @transform_5, window_bounds = array<i64: 128, 32>}, {pipeline_mode = #tpu.pipeline_mode<synchronous>, transform_indices = @transform_6, window_bounds = array<i64: 1, 32>}, {pipeline_mode = #tpu.pipeline_mode<synchronous>, transform_indices = @transform_7, window_bounds = array<i64: 1, 32>}, {pipeline_mode = #tpu.pipeline_mode<synchronous>, transform_indices = @transform_8, window_bounds = array<i64: 1, 32>}, {transform_indices = @transform_9, window_bounds = array<i64: 18, 32>}]} {
    %c0 = arith.constant 0 : index
    %c0_0 = arith.constant 0 : index
    %0 = vector.load %arg1[%c0, %c0_0] : memref<18x32xf32, #tpu.memory_space<vmem>>, vector<18x32xf32>
    %c0_1 = arith.constant 0 : index
    %c0_2 = arith.constant 0 : index
    %1 = vector.load %arg2[%c0_1, %c0_2] : memref<1x32xf32, #tpu.memory_space<vmem>>, vector<1x32xf32>
    %c0_3 = arith.constant 0 : index
    %c0_4 = arith.constant 0 : index
    %2 = vector.load %arg3[%c0_3, %c0_4] : memref<1x32xf32, #tpu.memory_space<vmem>>, vector<1x32xf32>
    %cst = arith.constant dense<0.000000e+00> : vector<18xf32>
    %3 = vector.multi_reduction <add>, %0, %cst [1] : vector<18x32xf32> to vector<18xf32>
    %4 = vector.shape_cast %3 : vector<18xf32> to vector<18x1xf32>
    %cst_5 = arith.constant 3.200000e+01 : f32
    %5 = vector.broadcast %cst_5 : f32 to vector<18x1xf32>
    %6 = arith.divf %4, %5 : vector<18x1xf32>
    %7 = vector.broadcast %6 : vector<18x1xf32> to vector<18x32xf32>
    %8 = arith.subf %0, %7 : vector<18x32xf32>
    %9 = arith.mulf %8, %8 : vector<18x32xf32>
    %cst_6 = arith.constant dense<0.000000e+00> : vector<18xf32>
    %10 = vector.multi_reduction <add>, %9, %cst_6 [1] : vector<18x32xf32> to vector<18xf32>
    %11 = vector.shape_cast %10 : vector<18xf32> to vector<18x1xf32>
    %cst_7 = arith.constant 3.200000e+01 : f32
    %12 = vector.broadcast %cst_7 : f32 to vector<18x1xf32>
    %13 = arith.divf %11, %12 : vector<18x1xf32>
    %14 = vector.broadcast %6 : vector<18x1xf32> to vector<18x32xf32>
    %15 = arith.subf %0, %14 : vector<18x32xf32>
    %cst_8 = arith.constant 9.99999974E-6 : f32
    %16 = vector.broadcast %cst_8 : f32 to vector<18x1xf32>
    %17 = arith.addf %13, %16 : vector<18x1xf32>
    %18 = math.rsqrt %17 : vector<18x1xf32>
    %19 = vector.broadcast %18 : vector<18x1xf32> to vector<18x32xf32>
    %20 = arith.mulf %15, %19 : vector<18x32xf32>
    %21 = vector.broadcast %1 : vector<1x32xf32> to vector<18x32xf32>
    %22 = arith.mulf %20, %21 : vector<18x32xf32>
    %23 = vector.broadcast %2 : vector<1x32xf32> to vector<18x32xf32>
    %24 = arith.addf %22, %23 : vector<18x32xf32>
    %c0_9 = arith.constant 0 : index
    %c0_10 = arith.constant 0 : index
    %25 = vector.load %arg4[%c0_9, %c0_10] : memref<32x128xf32, #tpu.memory_space<vmem>>, vector<32x128xf32>
    %cst_11 = arith.constant dense<0.000000e+00> : vector<18x128xf32>
    %26 = tpu.matmul %24, %25, %cst_11 {dimension_numbers = #tpu.dot_dimension_numbers<[1], [0], [0], [1], [0, 0, 1, 1], [], []>} : vector<18x32xf32>, vector<32x128xf32>, vector<18x128xf32> -> vector<18x128xf32>
    %c0_12 = arith.constant 0 : index
    %c0_13 = arith.constant 0 : index
    %27 = vector.load %arg5[%c0_12, %c0_13] : memref<1x128xf32, #tpu.memory_space<vmem>>, vector<1x128xf32>
    %28 = vector.broadcast %27 : vector<1x128xf32> to vector<18x128xf32>
    %29 = arith.addf %26, %28 : vector<18x128xf32>
    %30 = arith.negf %29 : vector<18x128xf32>
    %31 = math.exp %30 : vector<18x128xf32>
    %cst_14 = arith.constant 1.000000e+00 : f32
    %32 = vector.broadcast %cst_14 : f32 to vector<18x128xf32>
    %33 = arith.addf %32, %31 : vector<18x128xf32>
    %34 = arith.divf %32, %33 : vector<18x128xf32>
    %35 = arith.mulf %29, %34 : vector<18x128xf32>
    %c0_15 = arith.constant 0 : index
    %c0_16 = arith.constant 0 : index
    %36 = vector.load %arg6[%c0_15, %c0_16] : memref<128x32xf32, #tpu.memory_space<vmem>>, vector<128x32xf32>
    %cst_17 = arith.constant dense<0.000000e+00> : vector<18x32xf32>
    %37 = tpu.matmul %35, %36, %cst_17 {dimension_numbers = #tpu.dot_dimension_numbers<[1], [0], [0], [1], [0, 0, 1, 1], [], []>} : vector<18x128xf32>, vector<128x32xf32>, vector<18x32xf32> -> vector<18x32xf32>
    %c0_18 = arith.constant 0 : index
    %c0_19 = arith.constant 0 : index
    %38 = vector.load %arg7[%c0_18, %c0_19] : memref<1x32xf32, #tpu.memory_space<vmem>>, vector<1x32xf32>
    %39 = vector.broadcast %38 : vector<1x32xf32> to vector<18x32xf32>
    %40 = arith.addf %37, %39 : vector<18x32xf32>
    %cst_20 = arith.constant 5.000000e-01 : f32
    %41 = vector.broadcast %cst_20 : f32 to vector<18x32xf32>
    %42 = arith.mulf %41, %40 : vector<18x32xf32>
    %43 = arith.addf %0, %42 : vector<18x32xf32>
    %c0_21 = arith.constant 0 : index
    %c0_22 = arith.constant 0 : index
    %44 = vector.load %arg8[%c0_21, %c0_22] : memref<1x32xf32, #tpu.memory_space<vmem>>, vector<1x32xf32>
    %c0_23 = arith.constant 0 : index
    %c0_24 = arith.constant 0 : index
    %45 = vector.load %arg9[%c0_23, %c0_24] : memref<1x32xf32, #tpu.memory_space<vmem>>, vector<1x32xf32>
    %cst_25 = arith.constant dense<0.000000e+00> : vector<18xf32>
    %46 = vector.multi_reduction <add>, %43, %cst_25 [1] : vector<18x32xf32> to vector<18xf32>
    %47 = vector.shape_cast %46 : vector<18xf32> to vector<18x1xf32>
    %cst_26 = arith.constant 3.200000e+01 : f32
    %48 = vector.broadcast %cst_26 : f32 to vector<18x1xf32>
    %49 = arith.divf %47, %48 : vector<18x1xf32>
    %50 = vector.broadcast %49 : vector<18x1xf32> to vector<18x32xf32>
    %51 = arith.subf %43, %50 : vector<18x32xf32>
    %52 = arith.mulf %51, %51 : vector<18x32xf32>
    %cst_27 = arith.constant dense<0.000000e+00> : vector<18xf32>
    %53 = vector.multi_reduction <add>, %52, %cst_27 [1] : vector<18x32xf32> to vector<18xf32>
    %54 = vector.shape_cast %53 : vector<18xf32> to vector<18x1xf32>
    %cst_28 = arith.constant 3.200000e+01 : f32
    %55 = vector.broadcast %cst_28 : f32 to vector<18x1xf32>
    %56 = arith.divf %54, %55 : vector<18x1xf32>
    %57 = vector.broadcast %49 : vector<18x1xf32> to vector<18x32xf32>
    %58 = arith.subf %43, %57 : vector<18x32xf32>
    %cst_29 = arith.constant 9.99999974E-6 : f32
    %59 = vector.broadcast %cst_29 : f32 to vector<18x1xf32>
    %60 = arith.addf %56, %59 : vector<18x1xf32>
    %61 = math.rsqrt %60 : vector<18x1xf32>
    %62 = vector.broadcast %61 : vector<18x1xf32> to vector<18x32xf32>
    %63 = arith.mulf %58, %62 : vector<18x32xf32>
    %64 = vector.broadcast %44 : vector<1x32xf32> to vector<18x32xf32>
    %65 = arith.mulf %63, %64 : vector<18x32xf32>
    %66 = vector.broadcast %45 : vector<1x32xf32> to vector<18x32xf32>
    %67 = arith.addf %65, %66 : vector<18x32xf32>
    %c0_30 = arith.constant 0 : index
    %c0_31 = arith.constant 0 : index
    %68 = vector.load %arg10[%c0_30, %c0_31] : memref<18x32xf32, #tpu.memory_space<vmem>>, vector<18x32xf32>
    tpu.vector_store %arg10[%c0_30, %c0_31], %67 {strides = array<i32>} : memref<18x32xf32, #tpu.memory_space<vmem>>, vector<18x32xf32>,
    return
  }
  func.func @transform_0(%arg0: i32) -> (i32, i32) {
    %c0_i32 = arith.constant 0 : i32
    %c0_i32_0 = arith.constant 0 : i32
    return %arg0, %c0_i32 : i32, i32
  }
  func.func @transform_1(%arg0: i32) -> (i32, i32) {
    %c0_i32 = arith.constant 0 : i32
    %c0_i32_0 = arith.constant 0 : i32
    %c0_i32_1 = arith.constant 0 : i32
    return %c0_i32, %c0_i32_0 : i32, i32
  }
  func.func @transform_2(%arg0: i32) -> (i32, i32) {
    %c0_i32 = arith.constant 0 : i32
    %c0_i32_0 = arith.constant 0 : i32
    %c0_i32_1 = arith.constant 0 : i32
    return %c0_i32, %c0_i32_0 : i32, i32
  }
  func.func @transform_3(%arg0: i32) -> (i32, i32) {
    %c0_i32 = arith.constant 0 : i32
    %c0_i32_0 = arith.constant 0 : i32
    %c0_i32_1 = arith.constant 0 : i32
    return %c0_i32, %c0_i32_0 : i32, i32
  }
  func.func @transform_4(%arg0: i32) -> (i32, i32) {
    %c0_i32 = arith.constant 0 : i32
    %c0_i32_0 = arith.constant 0 : i32
    %c0_i32_1 = arith.constant 0 : i32
    return %c0_i32, %c0_i32_0 : i32, i32
  }
  func.func @transform_5(%arg0: i32) -> (i32, i32) {
    %c0_i32 = arith.constant 0 : i32
    %c0_i32_0 = arith.constant 0 : i32
    %c0_i32_1 = arith.constant 0 : i32
    return %c0_i32, %c0_i32_0 : i32, i32
  }
  func.func @transform_6(%arg0: i32) -> (i32, i32) {
    %c0_i32 = arith.constant 0 : i32
    %c0_i32_0 = arith.constant 0 : i32
    %c0_i32_1 = arith.constant 0 : i32
    return %c0_i32, %c0_i32_0 : i32, i32
  }
  func.func @transform_7(%arg0: i32) -> (i32, i32) {
    %c0_i32 = arith.constant 0 : i32
    %c0_i32_0 = arith.constant 0 : i32
    %c0_i32_1 = arith.constant 0 : i32
    return %c0_i32, %c0_i32_0 : i32, i32
  }
  func.func @transform_8(%arg0: i32) -> (i32, i32) {
    %c0_i32 = arith.constant 0 : i32
    %c0_i32_0 = arith.constant 0 : i32
    %c0_i32_1 = arith.constant 0 : i32
    return %c0_i32, %c0_i32_0 : i32, i32
  }
  func.func @transform_9(%arg0: i32) -> (i32, i32) {
    %c0_i32 = arith.constant 0 : i32
    %c0_i32_0 = arith.constant 0 : i32
    return %arg0, %c0_i32 : i32, i32
  }
}

module attributes {stable_mosaic.version = 11 : i64} {
  func.func @_conv_module_kernel(%arg0: i32, %arg1: memref<1x9x32xf32, #tpu.memory_space<vmem>>, %arg2: memref<1x32xf32, #tpu.memory_space<vmem>>, %arg3: memref<1x32xf32, #tpu.memory_space<vmem>>, %arg4: memref<32x64xf32, #tpu.memory_space<vmem>>, %arg5: memref<1x64xf32, #tpu.memory_space<vmem>>, %arg6: memref<32x64xf32, #tpu.memory_space<vmem>>, %arg7: memref<1x64xf32, #tpu.memory_space<vmem>>, %arg8: memref<7x64xf32, #tpu.memory_space<vmem>>, %arg9: memref<1x64xf32, #tpu.memory_space<vmem>>, %arg10: memref<1x64xf32, #tpu.memory_space<vmem>>, %arg11: memref<1x64xf32, #tpu.memory_space<vmem>>, %arg12: memref<64x32xf32, #tpu.memory_space<vmem>>, %arg13: memref<1x32xf32, #tpu.memory_space<vmem>>, %arg14: memref<1x9x32xf32, #tpu.memory_space<vmem>>, %arg15: memref<15x64xf32, #tpu.memory_space<vmem>>) attributes {dimension_semantics = [#tpu.dimension_semantics<parallel>], iteration_bounds = array<i64: 2>, scalar_prefetch = 0 : i64, scratch_operands = 1 : i64, tpu.core_type = #tpu.core_type<tc>, window_params = [{transform_indices = @transform_0, window_bounds = array<i64: 1, 9, 32>}, {pipeline_mode = #tpu.pipeline_mode<synchronous>, transform_indices = @transform_1, window_bounds = array<i64: 1, 32>}, {pipeline_mode = #tpu.pipeline_mode<synchronous>, transform_indices = @transform_2, window_bounds = array<i64: 1, 32>}, {pipeline_mode = #tpu.pipeline_mode<synchronous>, transform_indices = @transform_3, window_bounds = array<i64: 32, 64>}, {pipeline_mode = #tpu.pipeline_mode<synchronous>, transform_indices = @transform_4, window_bounds = array<i64: 1, 64>}, {pipeline_mode = #tpu.pipeline_mode<synchronous>, transform_indices = @transform_5, window_bounds = array<i64: 32, 64>}, {pipeline_mode = #tpu.pipeline_mode<synchronous>, transform_indices = @transform_6, window_bounds = array<i64: 1, 64>}, {pipeline_mode = #tpu.pipeline_mode<synchronous>, transform_indices = @transform_7, window_bounds = array<i64: 7, 64>}, {pipeline_mode = #tpu.pipeline_mode<synchronous>, transform_indices = @transform_8, window_bounds = array<i64: 1, 64>}, {pipeline_mode = #tpu.pipeline_mode<synchronous>, transform_indices = @transform_9, window_bounds = array<i64: 1, 64>}, {pipeline_mode = #tpu.pipeline_mode<synchronous>, transform_indices = @transform_10, window_bounds = array<i64: 1, 64>}, {pipeline_mode = #tpu.pipeline_mode<synchronous>, transform_indices = @transform_11, window_bounds = array<i64: 64, 32>}, {pipeline_mode = #tpu.pipeline_mode<synchronous>, transform_indices = @transform_12, window_bounds = array<i64: 1, 32>}, {transform_indices = @transform_13, window_bounds = array<i64: 1, 9, 32>}]} {
    %c0 = arith.constant 0 : index
    %c0_0 = arith.constant 0 : index
    %c0_1 = arith.constant 0 : index
    %0 = vector.load %arg1[%c0, %c0_0, %c0_1] : memref<1x9x32xf32, #tpu.memory_space<vmem>>, vector<1x9x32xf32>
    %1 = vector.shape_cast %0 : vector<1x9x32xf32> to vector<9x32xf32>
    %c0_2 = arith.constant 0 : index
    %c0_3 = arith.constant 0 : index
    %2 = vector.load %arg2[%c0_2, %c0_3] : memref<1x32xf32, #tpu.memory_space<vmem>>, vector<1x32xf32>
    %c0_4 = arith.constant 0 : index
    %c0_5 = arith.constant 0 : index
    %3 = vector.load %arg3[%c0_4, %c0_5] : memref<1x32xf32, #tpu.memory_space<vmem>>, vector<1x32xf32>
    %cst = arith.constant dense<0.000000e+00> : vector<9xf32>
    %4 = vector.multi_reduction <add>, %1, %cst [1] : vector<9x32xf32> to vector<9xf32>
    %5 = vector.shape_cast %4 : vector<9xf32> to vector<9x1xf32>
    %cst_6 = arith.constant 3.200000e+01 : f32
    %6 = vector.broadcast %cst_6 : f32 to vector<9x1xf32>
    %7 = arith.divf %5, %6 : vector<9x1xf32>
    %8 = vector.broadcast %7 : vector<9x1xf32> to vector<9x32xf32>
    %9 = arith.subf %1, %8 : vector<9x32xf32>
    %10 = arith.mulf %9, %9 : vector<9x32xf32>
    %cst_7 = arith.constant dense<0.000000e+00> : vector<9xf32>
    %11 = vector.multi_reduction <add>, %10, %cst_7 [1] : vector<9x32xf32> to vector<9xf32>
    %12 = vector.shape_cast %11 : vector<9xf32> to vector<9x1xf32>
    %cst_8 = arith.constant 3.200000e+01 : f32
    %13 = vector.broadcast %cst_8 : f32 to vector<9x1xf32>
    %14 = arith.divf %12, %13 : vector<9x1xf32>
    %15 = vector.broadcast %7 : vector<9x1xf32> to vector<9x32xf32>
    %16 = arith.subf %1, %15 : vector<9x32xf32>
    %cst_9 = arith.constant 9.99999974E-6 : f32
    %17 = vector.broadcast %cst_9 : f32 to vector<9x1xf32>
    %18 = arith.addf %14, %17 : vector<9x1xf32>
    %19 = math.rsqrt %18 : vector<9x1xf32>
    %20 = vector.broadcast %19 : vector<9x1xf32> to vector<9x32xf32>
    %21 = arith.mulf %16, %20 : vector<9x32xf32>
    %22 = vector.broadcast %2 : vector<1x32xf32> to vector<9x32xf32>
    %23 = arith.mulf %21, %22 : vector<9x32xf32>
    %24 = vector.broadcast %3 : vector<1x32xf32> to vector<9x32xf32>
    %25 = arith.addf %23, %24 : vector<9x32xf32>
    %c0_10 = arith.constant 0 : index
    %c0_11 = arith.constant 0 : index
    %26 = vector.load %arg4[%c0_10, %c0_11] : memref<32x64xf32, #tpu.memory_space<vmem>>, vector<32x64xf32>
    %cst_12 = arith.constant dense<0.000000e+00> : vector<9x64xf32>
    %27 = tpu.matmul %25, %26, %cst_12 {dimension_numbers = #tpu.dot_dimension_numbers<[1], [0], [0], [1], [0, 0, 1, 1], [], []>} : vector<9x32xf32>, vector<32x64xf32>, vector<9x64xf32> -> vector<9x64xf32>
    %c0_13 = arith.constant 0 : index
    %c0_14 = arith.constant 0 : index
    %28 = vector.load %arg5[%c0_13, %c0_14] : memref<1x64xf32, #tpu.memory_space<vmem>>, vector<1x64xf32>
    %29 = vector.broadcast %28 : vector<1x64xf32> to vector<9x64xf32>
    %30 = arith.addf %27, %29 : vector<9x64xf32>
    %c0_15 = arith.constant 0 : index
    %c0_16 = arith.constant 0 : index
    %31 = vector.load %arg6[%c0_15, %c0_16] : memref<32x64xf32, #tpu.memory_space<vmem>>, vector<32x64xf32>
    %cst_17 = arith.constant dense<0.000000e+00> : vector<9x64xf32>
    %32 = tpu.matmul %25, %31, %cst_17 {dimension_numbers = #tpu.dot_dimension_numbers<[1], [0], [0], [1], [0, 0, 1, 1], [], []>} : vector<9x32xf32>, vector<32x64xf32>, vector<9x64xf32> -> vector<9x64xf32>
    %c0_18 = arith.constant 0 : index
    %c0_19 = arith.constant 0 : index
    %33 = vector.load %arg7[%c0_18, %c0_19] : memref<1x64xf32, #tpu.memory_space<vmem>>, vector<1x64xf32>
    %34 = vector.broadcast %33 : vector<1x64xf32> to vector<9x64xf32>
    %35 = arith.addf %32, %34 : vector<9x64xf32>
    %36 = arith.negf %35 : vector<9x64xf32>
    %37 = math.exp %36 : vector<9x64xf32>
    %cst_20 = arith.constant 1.000000e+00 : f32
    %38 = vector.broadcast %cst_20 : f32 to vector<9x64xf32>
    %39 = arith.addf %38, %37 : vector<9x64xf32>
    %40 = arith.divf %38, %39 : vector<9x64xf32>
    %41 = arith.mulf %30, %40 : vector<9x64xf32>
    %cst_21 = arith.constant 0.000000e+00 : f32
    %42 = vector.broadcast %cst_21 : f32 to vector<15x64xf32>
    %c0_22 = arith.constant 0 : index
    %c0_23 = arith.constant 0 : index
    %43 = vector.load %arg15[%c0_22, %c0_23] : memref<15x64xf32, #tpu.memory_space<vmem>>, vector<15x64xf32>
    tpu.vector_store %arg15[%c0_22, %c0_23], %42 {strides = array<i32>} : memref<15x64xf32, #tpu.memory_space<vmem>>, vector<15x64xf32>,
    %c3 = arith.constant 3 : index
    %c0_24 = arith.constant 0 : index
    %44 = vector.load %arg15[%c3, %c0_24] : memref<15x64xf32, #tpu.memory_space<vmem>>, vector<9x64xf32>
    tpu.vector_store %arg15[%c3, %c0_24], %41 {strides = array<i32>} : memref<15x64xf32, #tpu.memory_space<vmem>>, vector<9x64xf32>,
    %cst_25 = arith.constant 0.000000e+00 : f32
    %45 = vector.broadcast %cst_25 : f32 to vector<9x64xf32>
    %c0_26 = arith.constant 0 : index
    %c0_27 = arith.constant 0 : index
    %46 = vector.load %arg15[%c0_26, %c0_27] : memref<15x64xf32, #tpu.memory_space<vmem>>, vector<9x64xf32>
    %c0_28 = arith.constant 0 : index
    %c0_29 = arith.constant 0 : index
    %47 = vector.load %arg8[%c0_28, %c0_29] : memref<7x64xf32, #tpu.memory_space<vmem>>, vector<1x64xf32>
    %48 = vector.broadcast %47 : vector<1x64xf32> to vector<9x64xf32>
    %49 = arith.mulf %46, %48 : vector<9x64xf32>
    %50 = arith.addf %45, %49 : vector<9x64xf32>
    %c1 = arith.constant 1 : index
    %c0_30 = arith.constant 0 : index
    %51 = vector.load %arg15[%c1, %c0_30] : memref<15x64xf32, #tpu.memory_space<vmem>>, vector<9x64xf32>
    %c1_31 = arith.constant 1 : index
    %c0_32 = arith.constant 0 : index
    %52 = vector.load %arg8[%c1_31, %c0_32] : memref<7x64xf32, #tpu.memory_space<vmem>>, vector<1x64xf32>
    %53 = vector.broadcast %52 : vector<1x64xf32> to vector<9x64xf32>
    %54 = arith.mulf %51, %53 : vector<9x64xf32>
    %55 = arith.addf %50, %54 : vector<9x64xf32>
    %c2 = arith.constant 2 : index
    %c0_33 = arith.constant 0 : index
    %56 = vector.load %arg15[%c2, %c0_33] : memref<15x64xf32, #tpu.memory_space<vmem>>, vector<9x64xf32>
    %c2_34 = arith.constant 2 : index
    %c0_35 = arith.constant 0 : index
    %57 = vector.load %arg8[%c2_34, %c0_35] : memref<7x64xf32, #tpu.memory_space<vmem>>, vector<1x64xf32>
    %58 = vector.broadcast %57 : vector<1x64xf32> to vector<9x64xf32>
    %59 = arith.mulf %56, %58 : vector<9x64xf32>
    %60 = arith.addf %55, %59 : vector<9x64xf32>
    %c3_36 = arith.constant 3 : index
    %c0_37 = arith.constant 0 : index
    %61 = vector.load %arg15[%c3_36, %c0_37] : memref<15x64xf32, #tpu.memory_space<vmem>>, vector<9x64xf32>
    %c3_38 = arith.constant 3 : index
    %c0_39 = arith.constant 0 : index
    %62 = vector.load %arg8[%c3_38, %c0_39] : memref<7x64xf32, #tpu.memory_space<vmem>>, vector<1x64xf32>
    %63 = vector.broadcast %62 : vector<1x64xf32> to vector<9x64xf32>
    %64 = arith.mulf %61, %63 : vector<9x64xf32>
    %65 = arith.addf %60, %64 : vector<9x64xf32>
    %c4 = arith.constant 4 : index
    %c0_40 = arith.constant 0 : index
    %66 = vector.load %arg15[%c4, %c0_40] : memref<15x64xf32, #tpu.memory_space<vmem>>, vector<9x64xf32>
    %c4_41 = arith.constant 4 : index
    %c0_42 = arith.constant 0 : index
    %67 = vector.load %arg8[%c4_41, %c0_42] : memref<7x64xf32, #tpu.memory_space<vmem>>, vector<1x64xf32>
    %68 = vector.broadcast %67 : vector<1x64xf32> to vector<9x64xf32>
    %69 = arith.mulf %66, %68 : vector<9x64xf32>
    %70 = arith.addf %65, %69 : vector<9x64xf32>
    %c5 = arith.constant 5 : index
    %c0_43 = arith.constant 0 : index
    %71 = vector.load %arg15[%c5, %c0_43] : memref<15x64xf32, #tpu.memory_space<vmem>>, vector<9x64xf32>
    %c5_44 = arith.constant 5 : index
    %c0_45 = arith.constant 0 : index
    %72 = vector.load %arg8[%c5_44, %c0_45] : memref<7x64xf32, #tpu.memory_space<vmem>>, vector<1x64xf32>
    %73 = vector.broadcast %72 : vector<1x64xf32> to vector<9x64xf32>
    %74 = arith.mulf %71, %73 : vector<9x64xf32>
    %75 = arith.addf %70, %74 : vector<9x64xf32>
    %c6 = arith.constant 6 : index
    %c0_46 = arith.constant 0 : index
    %76 = vector.load %arg15[%c6, %c0_46] : memref<15x64xf32, #tpu.memory_space<vmem>>, vector<9x64xf32>
    %c6_47 = arith.constant 6 : index
    %c0_48 = arith.constant 0 : index
    %77 = vector.load %arg8[%c6_47, %c0_48] : memref<7x64xf32, #tpu.memory_space<vmem>>, vector<1x64xf32>
    %78 = vector.broadcast %77 : vector<1x64xf32> to vector<9x64xf32>
    %79 = arith.mulf %76, %78 : vector<9x64xf32>
    %80 = arith.addf %75, %79 : vector<9x64xf32>
    %c0_49 = arith.constant 0 : index
    %c0_50 = arith.constant 0 : index
    %81 = vector.load %arg9[%c0_49, %c0_50] : memref<1x64xf32, #tpu.memory_space<vmem>>, vector<1x64xf32>
    %82 = vector.broadcast %81 : vector<1x64xf32> to vector<9x64xf32>
    %83 = arith.addf %80, %82 : vector<9x64xf32>
    %c0_51 = arith.constant 0 : index
    %c0_52 = arith.constant 0 : index
    %84 = vector.load %arg10[%c0_51, %c0_52] : memref<1x64xf32, #tpu.memory_space<vmem>>, vector<1x64xf32>
    %85 = vector.broadcast %84 : vector<1x64xf32> to vector<9x64xf32>
    %86 = arith.mulf %83, %85 : vector<9x64xf32>
    %c0_53 = arith.constant 0 : index
    %c0_54 = arith.constant 0 : index
    %87 = vector.load %arg11[%c0_53, %c0_54] : memref<1x64xf32, #tpu.memory_space<vmem>>, vector<1x64xf32>
    %88 = vector.broadcast %87 : vector<1x64xf32> to vector<9x64xf32>
    %89 = arith.addf %86, %88 : vector<9x64xf32>
    %90 = arith.negf %89 : vector<9x64xf32>
    %91 = math.exp %90 : vector<9x64xf32>
    %cst_55 = arith.constant 1.000000e+00 : f32
    %92 = vector.broadcast %cst_55 : f32 to vector<9x64xf32>
    %93 = arith.addf %92, %91 : vector<9x64xf32>
    %94 = arith.divf %92, %93 : vector<9x64xf32>
    %95 = arith.mulf %89, %94 : vector<9x64xf32>
    %c0_56 = arith.constant 0 : index
    %c0_57 = arith.constant 0 : index
    %96 = vector.load %arg12[%c0_56, %c0_57] : memref<64x32xf32, #tpu.memory_space<vmem>>, vector<64x32xf32>
    %cst_58 = arith.constant dense<0.000000e+00> : vector<9x32xf32>
    %97 = tpu.matmul %95, %96, %cst_58 {dimension_numbers = #tpu.dot_dimension_numbers<[1], [0], [0], [1], [0, 0, 1, 1], [], []>} : vector<9x64xf32>, vector<64x32xf32>, vector<9x32xf32> -> vector<9x32xf32>
    %c0_59 = arith.constant 0 : index
    %c0_60 = arith.constant 0 : index
    %98 = vector.load %arg13[%c0_59, %c0_60] : memref<1x32xf32, #tpu.memory_space<vmem>>, vector<1x32xf32>
    %99 = vector.broadcast %98 : vector<1x32xf32> to vector<9x32xf32>
    %100 = arith.addf %97, %99 : vector<9x32xf32>
    %101 = arith.addf %1, %100 : vector<9x32xf32>
    %c0_61 = arith.constant 0 : index
    %c0_62 = arith.constant 0 : index
    %c0_63 = arith.constant 0 : index
    %102 = vector.load %arg14[%c0_61, %c0_62, %c0_63] : memref<1x9x32xf32, #tpu.memory_space<vmem>>, vector<1x9x32xf32>
    %103 = vector.shape_cast %102 : vector<1x9x32xf32> to vector<9x32xf32>
    %104 = vector.shape_cast %101 : vector<9x32xf32> to vector<1x9x32xf32>
    tpu.vector_store %arg14[%c0_61, %c0_62, %c0_63], %104 {strides = array<i32>} : memref<1x9x32xf32, #tpu.memory_space<vmem>>, vector<1x9x32xf32>,
    return
  }
  func.func @transform_0(%arg0: i32) -> (i32, i32, i32) {
    %c0_i32 = arith.constant 0 : i32
    %c0_i32_0 = arith.constant 0 : i32
    %c0_i32_1 = arith.constant 0 : i32
    return %arg0, %c0_i32, %c0_i32_0 : i32, i32, i32
  }
  func.func @transform_1(%arg0: i32) -> (i32, i32) {
    %c0_i32 = arith.constant 0 : i32
    %c0_i32_0 = arith.constant 0 : i32
    %c0_i32_1 = arith.constant 0 : i32
    return %c0_i32, %c0_i32_0 : i32, i32
  }
  func.func @transform_2(%arg0: i32) -> (i32, i32) {
    %c0_i32 = arith.constant 0 : i32
    %c0_i32_0 = arith.constant 0 : i32
    %c0_i32_1 = arith.constant 0 : i32
    return %c0_i32, %c0_i32_0 : i32, i32
  }
  func.func @transform_3(%arg0: i32) -> (i32, i32) {
    %c0_i32 = arith.constant 0 : i32
    %c0_i32_0 = arith.constant 0 : i32
    %c0_i32_1 = arith.constant 0 : i32
    return %c0_i32, %c0_i32_0 : i32, i32
  }
  func.func @transform_4(%arg0: i32) -> (i32, i32) {
    %c0_i32 = arith.constant 0 : i32
    %c0_i32_0 = arith.constant 0 : i32
    %c0_i32_1 = arith.constant 0 : i32
    return %c0_i32, %c0_i32_0 : i32, i32
  }
  func.func @transform_5(%arg0: i32) -> (i32, i32) {
    %c0_i32 = arith.constant 0 : i32
    %c0_i32_0 = arith.constant 0 : i32
    %c0_i32_1 = arith.constant 0 : i32
    return %c0_i32, %c0_i32_0 : i32, i32
  }
  func.func @transform_6(%arg0: i32) -> (i32, i32) {
    %c0_i32 = arith.constant 0 : i32
    %c0_i32_0 = arith.constant 0 : i32
    %c0_i32_1 = arith.constant 0 : i32
    return %c0_i32, %c0_i32_0 : i32, i32
  }
  func.func @transform_7(%arg0: i32) -> (i32, i32) {
    %c0_i32 = arith.constant 0 : i32
    %c0_i32_0 = arith.constant 0 : i32
    %c0_i32_1 = arith.constant 0 : i32
    return %c0_i32, %c0_i32_0 : i32, i32
  }
  func.func @transform_8(%arg0: i32) -> (i32, i32) {
    %c0_i32 = arith.constant 0 : i32
    %c0_i32_0 = arith.constant 0 : i32
    %c0_i32_1 = arith.constant 0 : i32
    return %c0_i32, %c0_i32_0 : i32, i32
  }
  func.func @transform_9(%arg0: i32) -> (i32, i32) {
    %c0_i32 = arith.constant 0 : i32
    %c0_i32_0 = arith.constant 0 : i32
    %c0_i32_1 = arith.constant 0 : i32
    return %c0_i32, %c0_i32_0 : i32, i32
  }
  func.func @transform_10(%arg0: i32) -> (i32, i32) {
    %c0_i32 = arith.constant 0 : i32
    %c0_i32_0 = arith.constant 0 : i32
    %c0_i32_1 = arith.constant 0 : i32
    return %c0_i32, %c0_i32_0 : i32, i32
  }
  func.func @transform_11(%arg0: i32) -> (i32, i32) {
    %c0_i32 = arith.constant 0 : i32
    %c0_i32_0 = arith.constant 0 : i32
    %c0_i32_1 = arith.constant 0 : i32
    return %c0_i32, %c0_i32_0 : i32, i32
  }
  func.func @transform_12(%arg0: i32) -> (i32, i32) {
    %c0_i32 = arith.constant 0 : i32
    %c0_i32_0 = arith.constant 0 : i32
    %c0_i32_1 = arith.constant 0 : i32
    return %c0_i32, %c0_i32_0 : i32, i32
  }
  func.func @transform_13(%arg0: i32) -> (i32, i32, i32) {
    %c0_i32 = arith.constant 0 : i32
    %c0_i32_0 = arith.constant 0 : i32
    %c0_i32_1 = arith.constant 0 : i32
    return %arg0, %c0_i32, %c0_i32_0 : i32, i32, i32
  }
}

module attributes {stable_mosaic.version = 11 : i64} {
  func.func @_fc_kernel(%arg0: i32, %arg1: memref<2x32xf32, #tpu.memory_space<vmem>>, %arg2: memref<32x2xf32, #tpu.memory_space<vmem>>, %arg3: memref<1x2xf32, #tpu.memory_space<vmem>>, %arg4: memref<2x2xf32, #tpu.memory_space<vmem>>) attributes {dimension_semantics = [#tpu.dimension_semantics<arbitrary>], iteration_bounds = array<i64: 1>, scalar_prefetch = 0 : i64, scratch_operands = 0 : i64, tpu.core_type = #tpu.core_type<tc>, window_params = [{pipeline_mode = #tpu.pipeline_mode<synchronous>, transform_indices = @transform_0, window_bounds = array<i64: 2, 32>}, {pipeline_mode = #tpu.pipeline_mode<synchronous>, transform_indices = @transform_1, window_bounds = array<i64: 32, 2>}, {pipeline_mode = #tpu.pipeline_mode<synchronous>, transform_indices = @transform_2, window_bounds = array<i64: 1, 2>}, {pipeline_mode = #tpu.pipeline_mode<synchronous>, transform_indices = @transform_3, window_bounds = array<i64: 2, 2>}]} {
    %c0 = arith.constant 0 : index
    %c0_0 = arith.constant 0 : index
    %0 = vector.load %arg1[%c0, %c0_0] : memref<2x32xf32, #tpu.memory_space<vmem>>, vector<2x32xf32>
    %c0_1 = arith.constant 0 : index
    %c0_2 = arith.constant 0 : index
    %1 = vector.load %arg2[%c0_1, %c0_2] : memref<32x2xf32, #tpu.memory_space<vmem>>, vector<32x2xf32>
    %cst = arith.constant dense<0.000000e+00> : vector<2x2xf32>
    %2 = tpu.matmul %0, %1, %cst {dimension_numbers = #tpu.dot_dimension_numbers<[1], [0], [0], [1], [0, 0, 1, 1], [], []>} : vector<2x32xf32>, vector<32x2xf32>, vector<2x2xf32> -> vector<2x2xf32>
    %c0_3 = arith.constant 0 : index
    %c0_4 = arith.constant 0 : index
    %3 = vector.load %arg3[%c0_3, %c0_4] : memref<1x2xf32, #tpu.memory_space<vmem>>, vector<1x2xf32>
    %4 = vector.broadcast %3 : vector<1x2xf32> to vector<2x2xf32>
    %5 = arith.addf %2, %4 : vector<2x2xf32>
    %c0_5 = arith.constant 0 : index
    %c0_6 = arith.constant 0 : index
    %6 = vector.load %arg4[%c0_5, %c0_6] : memref<2x2xf32, #tpu.memory_space<vmem>>, vector<2x2xf32>
    tpu.vector_store %arg4[%c0_5, %c0_6], %5 {strides = array<i32>} : memref<2x2xf32, #tpu.memory_space<vmem>>, vector<2x2xf32>,
    return
  }
  func.func @transform_0(%arg0: i32) -> (i32, i32) {
    %c0_i32 = arith.constant 0 : i32
    %c0_i32_0 = arith.constant 0 : i32
    %c0_i32_1 = arith.constant 0 : i32
    return %c0_i32, %c0_i32_0 : i32, i32
  }
  func.func @transform_1(%arg0: i32) -> (i32, i32) {
    %c0_i32 = arith.constant 0 : i32
    %c0_i32_0 = arith.constant 0 : i32
    %c0_i32_1 = arith.constant 0 : i32
    return %c0_i32, %c0_i32_0 : i32, i32
  }
  func.func @transform_2(%arg0: i32) -> (i32, i32) {
    %c0_i32 = arith.constant 0 : i32
    %c0_i32_0 = arith.constant 0 : i32
    %c0_i32_1 = arith.constant 0 : i32
    return %c0_i32, %c0_i32_0 : i32, i32
  }
  func.func @transform_3(%arg0: i32) -> (i32, i32) {
    %c0_i32 = arith.constant 0 : i32
    %c0_i32_0 = arith.constant 0 : i32
    %c0_i32_1 = arith.constant 0 : i32
    return %c0_i32, %c0_i32_0 : i32, i32
  }
}

</mosaic_0001>

<llo_original>
// kernel: xlsr_conformer_forward.10
$region0: #{xlsr_conformer_forward.10}
  #allocation0 [shape = 'u32[]', space=smem, size = 0x4, offset = 0x4, fixed_abs, tag = 'smem constant byte address 0x4 - core index']
  #allocation1 [shape = 'u32[144,128]{1,0:T(1,128)}', space=vmem, size = 0x12000, scoped, tag = 'internal scratch']
  #allocation2 [shape = 'f32[16,32]{1,0:T(8,128)}', space=vmem, size = 0x2000, scoped, tag = 'scratch operand']
  %s0 = inlined_call_operand.vmem [shape: f32[16,1024], index: 0, kind: input, shape index: {}]
  %s1 = inlined_call_operand.vmem [shape: f32[1024,32], index: 1, kind: input, shape index: {}]
  %s2 = inlined_call_operand.vmem [shape: f32[1,32], index: 2, kind: input, shape index: {}]
  %s3 = inlined_call_operand.vmem [shape: f32[16,32], index: 3, kind: output, shape index: {}]
  %s4 = sld [smem:[#allocation0]]
  $region76: #{xlsr_conformer_forward.10} parent=0
    _
  %s6 = ssub.s32 1, %s4
  %s7 = scalar_select 0, %s6, %s4
  $region1: #{xlsr_conformer_forward.10} parent=0
    #allocation3 [shape = 'u8[65536]{0}', space=vmem, size = 0x10000, scoped, tag = 'input window, operand 0']
    loop: start=0, step=1, limit=4
    $region2: #{xlsr_conformer_forward.10} parent=1 // loop_pre_header
      _
    $region3: #{xlsr_conformer_forward.10} parent=1 // loop_header
      %s9 = sphi 0, %s13
      %p10 = scmp.ge.s32.totalorder %s9, 4
      %s16 = sphi 0, %s28
      %s17 = sphi 0, %s24
      %s18 = sphi 0, %s16
      %s19 = sphi 0, %s17
      %s20 = sphi 0, %s18
      %s21 = sphi 0, %s19
      %s33 = sphi 0, %s35
      %s36 = sphi 0, %s33
      %s37 = sphi 0, %s36
      %s53 = sphi 0, %s37
      %s59 = sphi 0, %s61
      %s62 = sphi 0, %s59
      %s63 = sphi 0, %s62
      %s79 = sphi 0, %s63
      %s83 = sphi 0, %s83
      %s85 = sphi 0, %s83
      %s86 = sphi 0, %s85
      %s100 = sphi 0, %s86
      %s106 = sphi 0, %s108
      %s109 = sphi 0, %s106
      %s110 = sphi 0, %s109
      %s126 = sphi 0, %s110
    $region4: #{xlsr_conformer_forward.10} parent=1 // loop_header_branch
      %12 = sbr.rel (%p10) target = $region8
    $region5: #{xlsr_conformer_forward.10} parent=1 // loop_body
      %s14 = ssub.s32 %s9, 1
      %s15 = ssub.s32 %s9, 2
      %s22 = sadd.s32 1, %s17
      %p23 = scmp.ge.s32.totalorder %s22, 2
      %s24 = scalar_select %p23, 0, %s22
      %s25 = sadd.s32 1, %s16
      %s26 = scalar_select %p23, %s25, %s16
      %p27 = scmp.ge.s32.totalorder %s26, 1
      %s28 = scalar_select %p27, 0, %s26
      %s29 = ssub.s32 %s16, %s28
      %s30 = ssub.s32 %s17, %s24
      %s31 = sor.u32 %s29, %s30
      %p32 = scmp.eq.s32.totalorder %s31, 0
      %s34 = sadd.s32 %s33, 1
      %s35 = scalar_select %p32, %s33, %s34
      %p38 = pneg %p32
      %p39 = scmp.eq.s32.totalorder %s9, 1
      %p40 = por %p38, %p39
      %p41 = scmp.ne.s32.totalorder %s33, %s36
      %p42 = scmp.eq.s32.totalorder %s9, 0
      %p43 = por %p41, %p42
      %p44 = scmp.ne.s32.totalorder %s33, %s36
      %p45 = scmp.eq.s32.totalorder %s14, 1
      %p46 = por %p44, %p45
      %p47 = scmp.ne.s32.totalorder %s36, %s37
      %p48 = scmp.eq.s32.totalorder %s14, 0
      %p49 = por %p47, %p48
      %p50 = scmp.ne.s32.totalorder %s36, %s37
      %p51 = scmp.eq.s32.totalorder %s15, 1
      %p52 = por %p50, %p51
      %p54 = scmp.ne.s32.totalorder %s37, %s53
      %p55 = scmp.eq.s32.totalorder %s15, 0
      %p56 = por %p54, %p55
      %s57 = ssub.s32 %s17, %s24
      %p58 = scmp.eq.s32.totalorder %s57, 0
      %s60 = sadd.s32 %s59, 1
      %s61 = scalar_select %p58, %s59, %s60
      %p64 = pneg %p58
      %p65 = scmp.eq.s32.totalorder %s9, 1
      %p66 = por %p64, %p65
      %p67 = scmp.ne.s32.totalorder %s59, %s62
      %p68 = scmp.eq.s32.totalorder %s9, 0
      %p69 = por %p67, %p68
      %p70 = scmp.ne.s32.totalorder %s59, %s62
      %p71 = scmp.eq.s32.totalorder %s14, 1
      %p72 = por %p70, %p71
      %p73 = scmp.ne.s32.totalorder %s62, %s63
      %p74 = scmp.eq.s32.totalorder %s14, 0
      %p75 = por %p73, %p74
      %p76 = scmp.ne.s32.totalorder %s62, %s63
      %p77 = scmp.eq.s32.totalorder %s15, 1
      %p78 = por %p76, %p77
      %p80 = scmp.ne.s32.totalorder %s63, %s79
      %p81 = scmp.eq.s32.totalorder %s15, 0
      %p82 = por %p80, %p81
      %s84 = sadd.s32 %s83, 1
      %p87 = scmp.eq.s32.totalorder %s9, 1
      %p88 = scmp.ne.s32.totalorder %s83, %s85
      %p89 = scmp.eq.s32.totalorder %s9, 0
      %p90 = por %p88, %p89
      %p91 = scmp.ne.s32.totalorder %s83, %s85
      %p92 = scmp.eq.s32.totalorder %s14, 1
      %p93 = por %p91, %p92
      %p94 = scmp.ne.s32.totalorder %s85, %s86
      %p95 = scmp.eq.s32.totalorder %s14, 0
      %p96 = por %p94, %p95
      %p97 = scmp.ne.s32.totalorder %s85, %s86
      %p98 = scmp.eq.s32.totalorder %s15, 1
      %p99 = por %p97, %p98
      %p101 = scmp.ne.s32.totalorder %s86, %s100
      %p102 = scmp.eq.s32.totalorder %s15, 0
      %p103 = por %p101, %p102
      %s104 = ssub.s32 %s16, %s28
      %p105 = scmp.eq.s32.totalorder %s104, 0
      %s107 = sadd.s32 %s106, 1
      %s108 = scalar_select %p105, %s106, %s107
      %p111 = pneg %p105
      %p112 = scmp.eq.s32.totalorder %s9, 1
      %p113 = por %p111, %p112
      %p114 = scmp.ne.s32.totalorder %s106, %s109
      %p115 = scmp.eq.s32.totalorder %s9, 0
      %p116 = por %p114, %p115
      %p117 = scmp.ne.s32.totalorder %s106, %s109
      %p118 = scmp.eq.s32.totalorder %s14, 1
      %p119 = por %p117, %p118
      %p120 = scmp.ne.s32.totalorder %s109, %s110
      %p121 = scmp.eq.s32.totalorder %s14, 0
      %p122 = por %p120, %p121
      %p123 = scmp.ne.s32.totalorder %s109, %s110
      %p124 = scmp.eq.s32.totalorder %s15, 1
      %p125 = por %p123, %p124
      %p127 = scmp.ne.s32.totalorder %s110, %s126
      %p128 = scmp.eq.s32.totalorder %s15, 0
      %p129 = por %p127, %p128
      %p130 = scmp.le.s32.totalorder 1, %s9
      %p131 = scmp.lt.s32.totalorder %s9, 3
      %p132 = pnand %p130, %p131
      %p133 = pneg %p132
      // Predicated region
      $region9: #{xlsr_conformer_forward.10} parent=5 // pred_check
        _
      $region10: #{xlsr_conformer_forward.10} parent=5 // pred_check_branch
        %135 = sbr.rel (%p132) target = $region12
      $region11: #{xlsr_conformer_forward.10} parent=5 // pred_region
        %s136 = ssub.s32 %s9, 1
        // Predicated region
        $region13: #{xlsr_conformer_forward.10} parent=11 // pred_check
          %p137 = pneg %p96
        $region14: #{xlsr_conformer_forward.10} parent=11 // pred_check_branch
          %139 = sbr.rel (%p137) target = $region16
        $region15: #{xlsr_conformer_forward.10} parent=11 // pred_region
          _
        $region16: #{xlsr_conformer_forward.10} parent=11 // pred_fallthru
          _
      $region12: #{xlsr_conformer_forward.10} parent=5 // pred_fallthru
        _
      %p140 = scmp.lt.s32.totalorder %s9, 2
      // Predicated region
      $region17: #{xlsr_conformer_forward.10} parent=5 // pred_check
        %p141 = pneg %p140
      $region18: #{xlsr_conformer_forward.10} parent=5 // pred_check_branch
        %143 = sbr.rel (%p141) target = $region20
      $region19: #{xlsr_conformer_forward.10} parent=5 // pred_region
        // Predicated region
        $region21: #{xlsr_conformer_forward.10} parent=19 // pred_check
          %p144 = pneg %p43
        $region22: #{xlsr_conformer_forward.10} parent=19 // pred_check_branch
          %146 = sbr.rel (%p144) target = $region24
        $region23: #{xlsr_conformer_forward.10} parent=19 // pred_region
          %s147 = sand.u32 %s33, 1
          %s148 = sand.u32 %s33, 1
          %s149 = smul.addr %s148, 64
          %s150 = scalar_lea.vmem [#allocation3], %s149
          %s151 = smul.u32 2, %s16
          %s152 = smul.u32 4, %s17
          %s153 = smul.addr %s151, 8
          %s154 = sadd.s32 %s152, %s153
          %s155 = smul.addr %s154, 8
          %s156 = scalar_lea.vmem %s0, %s155
          // Predicated region
          $region25: #{xlsr_conformer_forward.10} parent=23 // pred_check
            _
          $region26: #{xlsr_conformer_forward.10} parent=23 // pred_check_branch
            %158 = sbr.rel (0) target = $region28
          $region27: #{xlsr_conformer_forward.10} parent=23 // pred_region
            // Predicated region
            $region29: #{xlsr_conformer_forward.10} parent=27 // pred_check
              _
            $region30: #{xlsr_conformer_forward.10} parent=27 // pred_check_branch
              %160 = sbr.rel (0) target = $region32
            $region31: #{xlsr_conformer_forward.10} parent=27 // pred_region
              loop: start=0, step=1, limit=1
              $region33: #{xlsr_conformer_forward.10} parent=31 // loop_pre_header
                _
              $region34: #{xlsr_conformer_forward.10} parent=31 // loop_header
                %s162 = sphi 0, %s166
                %p163 = scmp.ge.s32.totalorder %s162, 1
                %s167 = sphi %s156, %s156
                %s168 = sphi %s150, %s150
              $region35: #{xlsr_conformer_forward.10} parent=31 // loop_header_branch
                %165 = sbr.rel (%p163) target = $region39
              $region36: #{xlsr_conformer_forward.10} parent=31 // loop_body
                %v169 = vld [vmem:[%s167] sm:$0xff]
                %170 = vst [vmem:[%s168] sm:$0xff] %v169
                %v171 = vld [vmem:[%s167 + $0x8] sm:$0xff]
                %172 = vst [vmem:[%s168 + $0x8] sm:$0xff] %v171
                %v173 = vld [vmem:[%s167 + $0x10] sm:$0xff]
                %174 = vst [vmem:[%s168 + $0x10] sm:$0xff] %v173
                %v175 = vld [vmem:[%s167 + $0x18] sm:$0xff]
                %176 = vst [vmem:[%s168 + $0x18] sm:$0xff] %v175
                %v177 = vld [vmem:[%s167 + $0x40] sm:$0xff]
                %178 = vst [vmem:[%s168 + $0x20] sm:$0xff] %v177
                %v179 = vld [vmem:[%s167 + $0x48] sm:$0xff]
                %180 = vst [vmem:[%s168 + $0x28] sm:$0xff] %v179
                %v181 = vld [vmem:[%s167 + $0x50] sm:$0xff]
                %182 = vst [vmem:[%s168 + $0x30] sm:$0xff] %v181
                %v183 = vld [vmem:[%s167 + $0x58] sm:$0xff]
                %184 = vst [vmem:[%s168 + $0x38] sm:$0xff] %v183
              $region37: #{xlsr_conformer_forward.10} parent=31 // loop_footer
                %s166 = sadd.s32 1, %s162
              $region38: #{xlsr_conformer_forward.10} parent=31 // loop_footer_branch
                %161 = sbr.rel target = $region34
              $region39: #{xlsr_conformer_forward.10} parent=31 // loop_exit
                _
            $region32: #{xlsr_conformer_forward.10} parent=27 // pred_fallthru
              _
            // Predicated region
            $region40: #{xlsr_conformer_forward.10} parent=27 // pred_check
              _
            $region41: #{xlsr_conformer_forward.10} parent=27 // pred_check_branch
              %186 = sbr.rel target = $region43
            $region42: #{xlsr_conformer_forward.10} parent=27 // pred_region
              _
            $region43: #{xlsr_conformer_forward.10} parent=27 // pred_fallthru
              _
          $region28: #{xlsr_conformer_forward.10} parent=23 // pred_fallthru
            _
          %187 = vnop
        $region24: #{xlsr_conformer_forward.10} parent=19 // pred_fallthru
          _
        // Predicated region
        $region44: #{xlsr_conformer_forward.10} parent=19 // pred_check
          %p188 = pneg %p69
        $region45: #{xlsr_conformer_forward.10} parent=19 // pred_check_branch
          %190 = sbr.rel (%p188) target = $region47
        $region46: #{xlsr_conformer_forward.10} parent=19 // pred_region
          %s191 = smul.u32 64, %s17
          %p192 = scmp.lt.s32.totalorder %s191, 127
          %s193 = scalar_select %p192, %s191, 127
          %s194 = smul.addr %s193, 8
          %s195 = scalar_lea.vmem %s1, %s194
          %s196 = smul.u32 64, %s17
        $region47: #{xlsr_conformer_forward.10} parent=19 // pred_fallthru
          _
      $region20: #{xlsr_conformer_forward.10} parent=5 // pred_fallthru
        _
      %p197 = scmp.le.s32.totalorder 1, %s9
      %p198 = scmp.lt.s32.totalorder %s9, 3
      %p199 = pnand %p197, %p198
      %p200 = pneg %p199
      // Predicated region
      $region48: #{xlsr_conformer_forward.10} parent=5 // pred_check
        _
      $region49: #{xlsr_conformer_forward.10} parent=5 // pred_check_branch
        %202 = sbr.rel (%p199) target = $region51
      $region50: #{xlsr_conformer_forward.10} parent=5 // pred_region
        %s203 = ssub.s32 %s9, 1
        %s204 = sand.u32 %s36, 1
        %s205 = sand.u32 %s36, 1
        %s206 = smul.addr %s205, 64
        %s207 = scalar_lea.vmem [#allocation3], %s206
        // Predicated region
        $region52: #{xlsr_conformer_forward.10} parent=50 // pred_check
          %p208 = pneg %p49
        $region53: #{xlsr_conformer_forward.10} parent=50 // pred_check_branch
          %210 = sbr.rel (%p208) target = $region55
        $region54: #{xlsr_conformer_forward.10} parent=50 // pred_region
          _
        $region55: #{xlsr_conformer_forward.10} parent=50 // pred_fallthru
          _
        %s211 = sand.u32 %s36, 1
        %s212 = sand.u32 %s36, 1
        %s213 = smul.addr %s212, 64
        %s214 = scalar_lea.vmem [#allocation3], %s213
        %p215 = pneg %p49
        %p216 = pneg %p46
        %s217 = smul.u32 64, %s19
        %p218 = scmp.lt.s32.totalorder %s217, 127
        %s219 = scalar_select %p218, %s217, 127
        %s220 = smul.addr %s219, 8
        %s221 = scalar_lea.vmem %s1, %s220
        %p222 = pneg %p75
        %p223 = pneg %p72
        %p224 = pneg %p96
        %p225 = pneg %p93
        %p226 = pneg %p122
        %p227 = pneg %p119
        %s228 = smul.u32 2, %s18
        %p229 = scmp.lt.s32.totalorder %s228, 1
        %s230 = scalar_select %p229, %s228, 1
        %s231 = smul.addr %s230, 8
        %s232 = scalar_lea.vmem %s3, %s231
        %s233 = smul.u32 2, %s18
        %s234 = smul.u32 4, %s19
        %s235 = smul.u32 64, %s19
        %p236 = scmp.lt.s32.totalorder %s235, 127
        %s237 = scalar_select %p236, %s235, 127
        %s238 = smul.addr %s237, 8
        %s239 = scalar_lea.vmem %s1, %s238
        %s240 = smul.u32 64, %s19
        %s241 = smul.u32 2, %s18
        %p242 = scmp.lt.s32.totalorder %s241, 1
        %s243 = scalar_select %p242, %s241, 1
        %s244 = smul.addr %s243, 8
        %s245 = scalar_lea.vmem %s3, %s244
        %s246 = smul.u32 2, %s18
        %p247 = scmp.eq.s32.totalorder %s19, 0
        // Predicated region
        $region56: #{xlsr_conformer_forward.10} parent=50 // pred_check
          %p248 = pneg %p247
        $region57: #{xlsr_conformer_forward.10} parent=50 // pred_check_branch
          %250 = sbr.rel (%p248) target = $region59
        $region58: #{xlsr_conformer_forward.10} parent=50 // pred_region
          %vm251 = vcmask 261120
          %252 = vst.msk [vmem:[#allocation2] sm:$0xff] %vm251, 0.0
          %253 = vst.msk [vmem:[#allocation2 + $0x8] sm:$0xff] %vm251, 0.0
        $region59: #{xlsr_conformer_forward.10} parent=50 // pred_fallthru
          _
        %v254 = vld [vmem:[#allocation2] sm:$0xff]
        %v255 = vld [vmem:[#allocation2 + $0x8] sm:$0xff]
        %v256 = vld [vmem:[%s207] sm:$0xff]
        %v257 = vld [vmem:[%s207 + $0x8] sm:$0xff]
        %v258 = vld [vmem:[%s207 + $0x10] sm:$0xff]
        %v259 = vld [vmem:[%s207 + $0x18] sm:$0xff]
        %v260 = vld [vmem:[%s207 + $0x20] sm:$0xff]
        %v261 = vld [vmem:[%s207 + $0x28] sm:$0xff]
        %v262 = vld [vmem:[%s207 + $0x30] sm:$0xff]
        %v263 = vld [vmem:[%s207 + $0x38] sm:$0xff]
        %v264 = vld [vmem:[%s239] sm:$0xff]
        %v265 = vld [vmem:[%s239 + $0x8] sm:$0xff]
        %v266 = vld [vmem:[%s239 + $0x10] sm:$0xff]
        %v267 = vld [vmem:[%s239 + $0x18] sm:$0xff]
        %v268 = vld [vmem:[%s239 + $0x20] sm:$0xff]
        %v269 = vld [vmem:[%s239 + $0x28] sm:$0xff]
        %v270 = vld [vmem:[%s239 + $0x30] sm:$0xff]
        %v271 = vld [vmem:[%s239 + $0x38] sm:$0xff]
        %v272 = vld [vmem:[%s239 + $0x40] sm:$0xff]
        %v273 = vld [vmem:[%s239 + $0x48] sm:$0xff]
        %v274 = vld [vmem:[%s239 + $0x50] sm:$0xff]
        %v275 = vld [vmem:[%s239 + $0x58] sm:$0xff]
        %v276 = vld [vmem:[%s239 + $0x60] sm:$0xff]
        %v277 = vld [vmem:[%s239 + $0x68] sm:$0xff]
        %v278 = vld [vmem:[%s239 + $0x70] sm:$0xff]
        %v279 = vld [vmem:[%s239 + $0x78] sm:$0xff]
        %v280 = vld [vmem:[%s239 + $0x80] sm:$0xff]
        %v281 = vld [vmem:[%s239 + $0x88] sm:$0xff]
        %v282 = vld [vmem:[%s239 + $0x90] sm:$0xff]
        %v283 = vld [vmem:[%s239 + $0x98] sm:$0xff]
        %v284 = vld [vmem:[%s239 + $0xa0] sm:$0xff]
        %v285 = vld [vmem:[%s239 + $0xa8] sm:$0xff]
        %v286 = vld [vmem:[%s239 + $0xb0] sm:$0xff]
        %v287 = vld [vmem:[%s239 + $0xb8] sm:$0xff]
        %v288 = vld [vmem:[%s239 + $0xc0] sm:$0xff]
        %v289 = vld [vmem:[%s239 + $0xc8] sm:$0xff]
        %v290 = vld [vmem:[%s239 + $0xd0] sm:$0xff]
        %v291 = vld [vmem:[%s239 + $0xd8] sm:$0xff]
        %v292 = vld [vmem:[%s239 + $0xe0] sm:$0xff]
        %v293 = vld [vmem:[%s239 + $0xe8] sm:$0xff]
        %v294 = vld [vmem:[%s239 + $0xf0] sm:$0xff]
        %v295 = vld [vmem:[%s239 + $0xf8] sm:$0xff]
        %v296 = vld [vmem:[%s239 + $0x100] sm:$0xff]
        %v297 = vld [vmem:[%s239 + $0x108] sm:$0xff]
        %v298 = vld [vmem:[%s239 + $0x110] sm:$0xff]
        %v299 = vld [vmem:[%s239 + $0x118] sm:$0xff]
        %v300 = vld [vmem:[%s239 + $0x120] sm:$0xff]
        %v301 = vld [vmem:[%s239 + $0x128] sm:$0xff]
        %v302 = vld [vmem:[%s239 + $0x130] sm:$0xff]
        %v303 = vld [vmem:[%s239 + $0x138] sm:$0xff]
        %v304 = vld [vmem:[%s239 + $0x140] sm:$0xff]
        %v305 = vld [vmem:[%s239 + $0x148] sm:$0xff]
        %v306 = vld [vmem:[%s239 + $0x150] sm:$0xff]
        %v307 = vld [vmem:[%s239 + $0x158] sm:$0xff]
        %v308 = vld [vmem:[%s239 + $0x160] sm:$0xff]
        %v309 = vld [vmem:[%s239 + $0x168] sm:$0xff]
        %v310 = vld [vmem:[%s239 + $0x170] sm:$0xff]
        %v311 = vld [vmem:[%s239 + $0x178] sm:$0xff]
        %v312 = vld [vmem:[%s239 + $0x180] sm:$0xff]
        %v313 = vld [vmem:[%s239 + $0x188] sm:$0xff]
        %v314 = vld [vmem:[%s239 + $0x190] sm:$0xff]
        %v315 = vld [vmem:[%s239 + $0x198] sm:$0xff]
        %v316 = vld [vmem:[%s239 + $0x1a0] sm:$0xff]
        %v317 = vld [vmem:[%s239 + $0x1a8] sm:$0xff]
        %v318 = vld [vmem:[%s239 + $0x1b0] sm:$0xff]
        %v319 = vld [vmem:[%s239 + $0x1b8] sm:$0xff]
        %v320 = vld [vmem:[%s239 + $0x1c0] sm:$0xff]
        %v321 = vld [vmem:[%s239 + $0x1c8] sm:$0xff]
        %v322 = vld [vmem:[%s239 + $0x1d0] sm:$0xff]
        %v323 = vld [vmem:[%s239 + $0x1d8] sm:$0xff]
        %v324 = vld [vmem:[%s239 + $0x1e0] sm:$0xff]
        %v325 = vld [vmem:[%s239 + $0x1e8] sm:$0xff]
        %v326 = vld [vmem:[%s239 + $0x1f0] sm:$0xff]
        %v327 = vld [vmem:[%s239 + $0x1f8] sm:$0xff]
        %328 = vmatprep.subr.mxu0 0.0
        %329 = vmatpush1.msra.mxu0 %v264
        %330 = vmatprep.subr.mxu0 0.0
        %331 = vmatpush1.msra.mxu0 %v265
        %332 = vmatprep.subr.mxu0 0.0
        %333 = vmatpush1.msra.mxu0 %v266
        %334 = vmatprep.subr.mxu0 0.0
        %335 = vmatpush1.msra.mxu0 %v267
        %336 = vmatprep.subr.mxu0 0.0
        %337 = vmatpush1.msra.mxu0 %v268
        %338 = vmatprep.subr.mxu0 0.0
        %339 = vmatpush1.msra.mxu0 %v269
        %340 = vmatprep.subr.mxu0 0.0
        %341 = vmatpush1.msra.mxu0 %v270
        %342 = vmatprep.subr.mxu0 0.0
        %343 = vmatpush1.msra.mxu0 %v271
        %344 = vmatprep.subr.mxu0 0.0
        %345 = vmatpush1.msra.mxu0 %v272
        %346 = vmatprep.subr.mxu0 0.0
        %347 = vmatpush1.msra.mxu0 %v273
        %348 = vmatprep.subr.mxu0 0.0
        %349 = vmatpush1.msra.mxu0 %v274
        %350 = vmatprep.subr.mxu0 0.0
        %351 = vmatpush1.msra.mxu0 %v275
        %352 = vmatprep.subr.mxu0 0.0
        %353 = vmatpush1.msra.mxu0 %v276
        %354 = vmatprep.subr.mxu0 0.0
        %355 = vmatpush1.msra.mxu0 %v277
        %356 = vmatprep.subr.mxu0 0.0
        %357 = vmatpush1.msra.mxu0 %v278
        %358 = vmatprep.subr.mxu0 0.0
        %359 = vmatpush1.msra.mxu0 %v279
        %360 = vmatprep.subr.mxu0 0.0
        %361 = vmatpush1.msra.mxu0 %v280
        %362 = vmatprep.subr.mxu0 0.0
        %363 = vmatpush1.msra.mxu0 %v281
        %364 = vmatprep.subr.mxu0 0.0
        %365 = vmatpush1.msra.mxu0 %v282
        %366 = vmatprep.subr.mxu0 0.0
        %367 = vmatpush1.msra.mxu0 %v283
        %368 = vmatprep.subr.mxu0 0.0
        %369 = vmatpush1.msra.mxu0 %v284
        %370 = vmatprep.subr.mxu0 0.0
        %371 = vmatpush1.msra.mxu0 %v285
        %372 = vmatprep.subr.mxu0 0.0
        %373 = vmatpush1.msra.mxu0 %v286
        %374 = vmatprep.subr.mxu0 0.0
        %375 = vmatpush1.msra.mxu0 %v287
        %376 = vmatprep.subr.mxu0 0.0
        %377 = vmatpush1.msra.mxu0 %v288
        %378 = vmatprep.subr.mxu0 0.0
        %379 = vmatpush1.msra.mxu0 %v289
        %380 = vmatprep.subr.mxu0 0.0
        %381 = vmatpush1.msra.mxu0 %v290
        %382 = vmatprep.subr.mxu0 0.0
        %383 = vmatpush1.msra.mxu0 %v291
        %384 = vmatprep.subr.mxu0 0.0
        %385 = vmatpush1.msra.mxu0 %v292
        %386 = vmatprep.subr.mxu0 0.0
        %387 = vmatpush1.msra.mxu0 %v293
        %388 = vmatprep.subr.mxu0 0.0
        %389 = vmatpush1.msra.mxu0 %v294
        %390 = vmatprep.subr.mxu0 0.0
        %391 = vmatpush1.msra.mxu0 %v295
        %392 = vmatprep.mubr.f32.mxu0 %v257
        %393 = vmatmul.mubr.f32.gmra.mrb[0].mxu0 %v256
        %v394 = vpop.f32.mrb[0].mxu0
        %v395 = vadd.f32 0.0, %v394
        %v396 = vpop.f32.mrb[0].mxu0
        %397 = vmatprep.mubr.f32.mxu0 %v261
        %398 = vmatmul.mubr.f32.gmra.mrb[0].mxu0 %v260
        %v399 = vpop.f32.mrb[0].mxu0
        %v400 = vadd.f32 0.0, %v399
        %v401 = vpop.f32.mrb[0].mxu0
        %402 = vdwg.mxu0
        %403 = vmatprep.subr.mxu0 0.0
        %404 = vmatpush1.msra.mxu0 %v296
        %405 = vmatprep.subr.mxu0 0.0
        %406 = vmatpush1.msra.mxu0 %v297
        %407 = vmatprep.subr.mxu0 0.0
        %408 = vmatpush1.msra.mxu0 %v298
        %409 = vmatprep.subr.mxu0 0.0
        %410 = vmatpush1.msra.mxu0 %v299
        %411 = vmatprep.subr.mxu0 0.0
        %412 = vmatpush1.msra.mxu0 %v300
        %413 = vmatprep.subr.mxu0 0.0
        %414 = vmatpush1.msra.mxu0 %v301
        %415 = vmatprep.subr.mxu0 0.0
        %416 = vmatpush1.msra.mxu0 %v302
        %417 = vmatprep.subr.mxu0 0.0
        %418 = vmatpush1.msra.mxu0 %v303
        %419 = vmatprep.subr.mxu0 0.0
        %420 = vmatpush1.msra.mxu0 %v304
        %421 = vmatprep.subr.mxu0 0.0
        %422 = vmatpush1.msra.mxu0 %v305
        %423 = vmatprep.subr.mxu0 0.0
        %424 = vmatpush1.msra.mxu0 %v306
        %425 = vmatprep.subr.mxu0 0.0
        %426 = vmatpush1.msra.mxu0 %v307
        %427 = vmatprep.subr.mxu0 0.0
        %428 = vmatpush1.msra.mxu0 %v308
        %429 = vmatprep.subr.mxu0 0.0
        %430 = vmatpush1.msra.mxu0 %v309
        %431 = vmatprep.subr.mxu0 0.0
        %432 = vmatpush1.msra.mxu0 %v310
        %433 = vmatprep.subr.mxu0 0.0
        %434 = vmatpush1.msra.mxu0 %v311
        %435 = vmatprep.subr.mxu0 0.0
        %436 = vmatpush1.msra.mxu0 %v312
        %437 = vmatprep.subr.mxu0 0.0
        %438 = vmatpush1.msra.mxu0 %v313
        %439 = vmatprep.subr.mxu0 0.0
        %440 = vmatpush1.msra.mxu0 %v314
        %441 = vmatprep.subr.mxu0 0.0
        %442 = vmatpush1.msra.mxu0 %v315
        %443 = vmatprep.subr.mxu0 0.0
        %444 = vmatpush1.msra.mxu0 %v316
        %445 = vmatprep.subr.mxu0 0.0
        %446 = vmatpush1.msra.mxu0 %v317
        %447 = vmatprep.subr.mxu0 0.0
        %448 = vmatpush1.msra.mxu0 %v318
        %449 = vmatprep.subr.mxu0 0.0
        %450 = vmatpush1.msra.mxu0 %v319
        %451 = vmatprep.subr.mxu0 0.0
        %452 = vmatpush1.msra.mxu0 %v320
        %453 = vmatprep.subr.mxu0 0.0
        %454 = vmatpush1.msra.mxu0 %v321
        %455 = vmatprep.subr.mxu0 0.0
        %456 = vmatpush1.msra.mxu0 %v322
        %457 = vmatprep.subr.mxu0 0.0
        %458 = vmatpush1.msra.mxu0 %v323
        %459 = vmatprep.subr.mxu0 0.0
        %460 = vmatpush1.msra.mxu0 %v324
        %461 = vmatprep.subr.mxu0 0.0
        %462 = vmatpush1.msra.mxu0 %v325
        %463 = vmatprep.subr.mxu0 0.0
        %464 = vmatpush1.msra.mxu0 %v326
        %465 = vmatprep.subr.mxu0 0.0
        %466 = vmatpush1.msra.mxu0 %v327
        %467 = vmatprep.mubr.f32.mxu0 %v259
        %468 = vmatmul.mubr.f32.gmra.mrb[0].mxu0 %v258
        %v469 = vpop.f32.mrb[0].mxu0
        %v470 = vadd.f32 %v395, %v469
        %v471 = vpop.f32.mrb[0].mxu0
        %472 = vmatprep.mubr.f32.mxu0 %v263
        %473 = vmatmul.mubr.f32.gmra.mrb[0].mxu0 %v262
        %v474 = vpop.f32.mrb[0].mxu0
        %v475 = vadd.f32 %v400, %v474
        %v476 = vpop.f32.mrb[0].mxu0
        %477 = vdwg.mxu0
        %v478 = vadd.f32 %v254, %v470
        %v479 = vadd.f32 %v255, %v475
        %vm480 = vcmask 261120
        %481 = vst.msk [vmem:[#allocation2] sm:$0xff] %vm480, %v478
        %482 = vst.msk [vmem:[#allocation2 + $0x8] sm:$0xff] %vm480, %v479
        %p483 = scmp.eq.s32.totalorder %s19, 1
        // Predicated region
        $region60: #{xlsr_conformer_forward.10} parent=50 // pred_check
          %p484 = pneg %p483
        $region61: #{xlsr_conformer_forward.10} parent=50 // pred_check_branch
          %486 = sbr.rel (%p484) target = $region63
        $region62: #{xlsr_conformer_forward.10} parent=50 // pred_region
          %v487 = vld [vmem:[#allocation2] sm:$0xff]
          %v488 = vld [vmem:[#allocation2 + $0x8] sm:$0xff]
          %v489 = vld [vmem:[%s2] sm:$0x1]
          %v491 = vlaneseq
          %v492 = vshrl.u32 %v491, 7
          %v493 = vsub.s32 0, %v492
          %v494 = vrot.slane %v489, %v493
          %v496 = vadd.f32 %v487, %v494
          %v497 = vadd.f32 %v488, %v494
          %v498 = vmul.f32 %v496, 0.999995
          %v499 = vmul.f32 %v497, 0.999995
          %v500 = vadd.f32 %v498, 0.0
          %v501 = vadd.f32 %v499, 0.0
          %vm502 = vcmp.gt.f32.partialorder %v500, 0.0
          %vm503 = vcmp.gt.f32.partialorder %v501, 0.0
          %v504 = vmul.f32 %v500, 1.442695
          %v505 = vpow.pop %v504
          %v506 = vmul.f32 %v501, 1.442695
          %v507 = vpow.pop %v506
          %v508 = vsub.f32 %v505, 1.0
          %v509 = vsub.f32 %v507, 1.0
          %v510 = vmul.f32 %v508, 1.6732632
          %v511 = vmul.f32 %v509, 1.6732632
          %v512 = vsel %vm502, %v500, %v510
          %v513 = vsel %vm503, %v501, %v511
          %v514 = vmul.f32 %v512, 1.050701
          %v515 = vmul.f32 %v513, 1.050701
          %516 = vst.msk [vmem:[%s245] sm:$0xff] %vm480, %v514
          %517 = vst.msk [vmem:[%s245 + $0x8] sm:$0xff] %vm480, %v515
        $region63: #{xlsr_conformer_forward.10} parent=50 // pred_fallthru
          _
        %s518 = smul.u32 2, %s18
        %p519 = scmp.lt.s32.totalorder %s518, 1
        %s520 = scalar_select %p519, %s518, 1
        %s521 = smul.addr %s520, 8
        %s522 = scalar_lea.vmem %s3, %s521
        // Predicated region
        $region64: #{xlsr_conformer_forward.10} parent=50 // pred_check
          %p523 = pneg %p119
        $region65: #{xlsr_conformer_forward.10} parent=50 // pred_check_branch
          %525 = sbr.rel (%p523) target = $region67
        $region66: #{xlsr_conformer_forward.10} parent=50 // pred_region
          %s526 = smul.u32 2, %s18
        $region67: #{xlsr_conformer_forward.10} parent=50 // pred_fallthru
          _
        // Predicated region
        $region68: #{xlsr_conformer_forward.10} parent=50 // pred_check
          %p527 = pneg %p119
        $region69: #{xlsr_conformer_forward.10} parent=50 // pred_check_branch
          %529 = sbr.rel (%p527) target = $region71
        $region70: #{xlsr_conformer_forward.10} parent=50 // pred_region
          %s530 = smul.u32 2, %s18
          %p531 = scmp.lt.s32.totalorder %s530, 1
          %s532 = scalar_select %p531, %s530, 1
          %s533 = smul.addr %s532, 8
          %s534 = scalar_lea.vmem %s3, %s533
        $region71: #{xlsr_conformer_forward.10} parent=50 // pred_fallthru
          _
      $region51: #{xlsr_conformer_forward.10} parent=5 // pred_fallthru
        _
      %p535 = scmp.le.s32.totalorder 2, %s9
      // Predicated region
      $region72: #{xlsr_conformer_forward.10} parent=5 // pred_check
        %p536 = pneg %p535
      $region73: #{xlsr_conformer_forward.10} parent=5 // pred_check_branch
        %538 = sbr.rel (%p536) target = $region75
      $region74: #{xlsr_conformer_forward.10} parent=5 // pred_region
        %s539 = ssub.s32 %s9, 2
      $region75: #{xlsr_conformer_forward.10} parent=5 // pred_fallthru
        _
    $region6: #{xlsr_conformer_forward.10} parent=1 // loop_footer
      %s13 = sadd.s32 1, %s9
    $region7: #{xlsr_conformer_forward.10} parent=1 // loop_footer_branch
      %8 = sbr.rel target = $region3
    $region8: #{xlsr_conformer_forward.10} parent=1 // loop_exit
      _

// kernel: xlsr_conformer_forward.11
$region0: #{xlsr_conformer_forward.11}
  #allocation0 [shape = 'u32[]', space=smem, size = 0x4, offset = 0x4, fixed_abs, tag = 'smem constant byte address 0x4 - core index']
  #allocation1 [shape = 'u32[144,128]{1,0:T(1,128)}', space=vmem, size = 0x12000, scoped, tag = 'internal scratch']
  %s0 = inlined_call_operand.vmem [shape: f32[18,32], index: 0, kind: input, shape index: {}]
  %s1 = inlined_call_operand.vmem [shape: f32[1,32], index: 1, kind: input, shape index: {}]
  %s2 = inlined_call_operand.vmem [shape: f32[1,32], index: 2, kind: input, shape index: {}]
  %s3 = inlined_call_operand.vmem [shape: f32[32,128], index: 3, kind: input, shape index: {}]
  %s4 = inlined_call_operand.vmem [shape: f32[1,128], index: 4, kind: input, shape index: {}]
  %s5 = inlined_call_operand.vmem [shape: f32[128,32], index: 5, kind: input, shape index: {}]
  %s6 = inlined_call_operand.vmem [shape: f32[1,32], index: 6, kind: input, shape index: {}]
  %s7 = inlined_call_operand.vmem [shape: f32[1,32], index: 7, kind: input, shape index: {}]
  %s8 = inlined_call_operand.vmem [shape: f32[1,32], index: 8, kind: input, shape index: {}]
  %s9 = inlined_call_operand.vmem [shape: f32[32,32], index: 9, kind: input, shape index: {}]
  %s10 = inlined_call_operand.vmem [shape: f32[32,32], index: 10, kind: input, shape index: {}]
  %s11 = inlined_call_operand.vmem [shape: f32[32,32], index: 11, kind: input, shape index: {}]
  %s12 = inlined_call_operand.vmem [shape: f32[18,32], index: 12, kind: output, shape index: {0}]
  %s13 = inlined_call_operand.vmem [shape: f32[18,32], index: 13, kind: output, shape index: {1}]
  %s14 = inlined_call_operand.vmem [shape: f32[18,32], index: 14, kind: output, shape index: {2}]
  %s15 = inlined_call_operand.vmem [shape: f32[18,32], index: 15, kind: output, shape index: {3}]
  %16 = xla_tuple %s12, %s13, %s14, %s15
  %s17 = sld [smem:[#allocation0]]
  $region82: #{xlsr_conformer_forward.11} parent=0
    _
  %s19 = ssub.s32 1, %s17
  %s20 = scalar_select 0, %s19, %s17
  // Predicated region
  $region2: #{xlsr_conformer_forward.11} parent=0 // pred_check
    _
  $region3: #{xlsr_conformer_forward.11} parent=0 // pred_check_branch
    %22 = sbr.rel (0) target = $region5
  $region4: #{xlsr_conformer_forward.11} parent=0 // pred_region
    _
  $region5: #{xlsr_conformer_forward.11} parent=0 // pred_fallthru
    _
  // Predicated region
  $region6: #{xlsr_conformer_forward.11} parent=0 // pred_check
    _
  $region7: #{xlsr_conformer_forward.11} parent=0 // pred_check_branch
    %24 = sbr.rel (0) target = $region9
  $region8: #{xlsr_conformer_forward.11} parent=0 // pred_region
    _
  $region9: #{xlsr_conformer_forward.11} parent=0 // pred_fallthru
    _
  // Predicated region
  $region10: #{xlsr_conformer_forward.11} parent=0 // pred_check
    _
  $region11: #{xlsr_conformer_forward.11} parent=0 // pred_check_branch
    %26 = sbr.rel (0) target = $region13
  $region12: #{xlsr_conformer_forward.11} parent=0 // pred_region
    _
  $region13: #{xlsr_conformer_forward.11} parent=0 // pred_fallthru
    _
  // Predicated region
  $region14: #{xlsr_conformer_forward.11} parent=0 // pred_check
    _
  $region15: #{xlsr_conformer_forward.11} parent=0 // pred_check_branch
    %28 = sbr.rel (0) target = $region17
  $region16: #{xlsr_conformer_forward.11} parent=0 // pred_region
    _
  $region17: #{xlsr_conformer_forward.11} parent=0 // pred_fallthru
    _
  // Predicated region
  $region18: #{xlsr_conformer_forward.11} parent=0 // pred_check
    _
  $region19: #{xlsr_conformer_forward.11} parent=0 // pred_check_branch
    %30 = sbr.rel (0) target = $region21
  $region20: #{xlsr_conformer_forward.11} parent=0 // pred_region
    _
  $region21: #{xlsr_conformer_forward.11} parent=0 // pred_fallthru
    _
  // Predicated region
  $region22: #{xlsr_conformer_forward.11} parent=0 // pred_check
    _
  $region23: #{xlsr_conformer_forward.11} parent=0 // pred_check_branch
    %32 = sbr.rel (0) target = $region25
  $region24: #{xlsr_conformer_forward.11} parent=0 // pred_region
    _
  $region25: #{xlsr_conformer_forward.11} parent=0 // pred_fallthru
    _
  // Predicated region
  $region26: #{xlsr_conformer_forward.11} parent=0 // pred_check
    _
  $region27: #{xlsr_conformer_forward.11} parent=0 // pred_check_branch
    %34 = sbr.rel (0) target = $region29
  $region28: #{xlsr_conformer_forward.11} parent=0 // pred_region
    _
  $region29: #{xlsr_conformer_forward.11} parent=0 // pred_fallthru
    _
  // Predicated region
  $region30: #{xlsr_conformer_forward.11} parent=0 // pred_check
    _
  $region31: #{xlsr_conformer_forward.11} parent=0 // pred_check_branch
    %36 = sbr.rel (0) target = $region33
  $region32: #{xlsr_conformer_forward.11} parent=0 // pred_region
    _
  $region33: #{xlsr_conformer_forward.11} parent=0 // pred_fallthru
    _
  // Predicated region
  $region34: #{xlsr_conformer_forward.11} parent=0 // pred_check
    _
  $region35: #{xlsr_conformer_forward.11} parent=0 // pred_check_branch
    %38 = sbr.rel (0) target = $region37
  $region36: #{xlsr_conformer_forward.11} parent=0 // pred_region
    _
  $region37: #{xlsr_conformer_forward.11} parent=0 // pred_fallthru
    _
  // Predicated region
  $region38: #{xlsr_conformer_forward.11} parent=0 // pred_check
    _
  $region39: #{xlsr_conformer_forward.11} parent=0 // pred_check_branch
    %40 = sbr.rel (0) target = $region41
  $region40: #{xlsr_conformer_forward.11} parent=0 // pred_region
    _
  $region41: #{xlsr_conformer_forward.11} parent=0 // pred_fallthru
    _
  // Predicated region
  $region42: #{xlsr_conformer_forward.11} parent=0 // pred_check
    _
  $region43: #{xlsr_conformer_forward.11} parent=0 // pred_check_branch
    %42 = sbr.rel (0) target = $region45
  $region44: #{xlsr_conformer_forward.11} parent=0 // pred_region
    _
  $region45: #{xlsr_conformer_forward.11} parent=0 // pred_fallthru
    _
  // Predicated region
  $region46: #{xlsr_conformer_forward.11} parent=0 // pred_check
    _
  $region47: #{xlsr_conformer_forward.11} parent=0 // pred_check_branch
    %44 = sbr.rel (0) target = $region49
  $region48: #{xlsr_conformer_forward.11} parent=0 // pred_region
    _
  $region49: #{xlsr_conformer_forward.11} parent=0 // pred_fallthru
    _
  %v45 = vld [vmem:[%s0] sm:$0xff]
  %v46 = vld [vmem:[%s0 + $0x8] sm:$0xff]
  %v47 = vld [vmem:[%s0 + $0x10] sm:$0x3]
  %v48 = vld [vmem:[%s1] sm:$0x1]
  %v49 = vld [vmem:[%s2] sm:$0x1]
  %vm50 = vcmask 261120
  %v51 = vsel %vm50, %v45, 0.0
  %52 = vadd.xlane.f32.xlu0 %v51
  %v53 = vpop.xlane.xlu0 %52
  %v54 = vsel %vm50, %v46, 0.0
  %55 = vadd.xlane.f32.xlu0 %v54
  %v56 = vpop.xlane.xlu0 %55
  %vm57 = vcmask 254976
  %v58 = vsel %vm57, %v47, 0.0
  %59 = vadd.xlane.f32.xlu0 %v58
  %v60 = vpop.xlane.xlu0 %59
  %v61 = vrcp.pop 32.0
  %v62 = vmul.f32 %v53, %v61
  %v63 = vmul.f32 %v56, %v61
  %v64 = vmul.f32 %v60, %v61
  %v65 = vsub.f32 %v45, %v62
  %v66 = vsub.f32 %v46, %v63
  %v67 = vsub.f32 %v47, %v64
  %v68 = vmul.f32 %v65, %v65
  %v69 = vmul.f32 %v66, %v66
  %v70 = vmul.f32 %v67, %v67
  %v71 = vsel %vm50, %v68, 0.0
  %72 = vadd.xlane.f32.xlu0 %v71
  %v73 = vpop.xlane.xlu0 %72
  %v74 = vsel %vm50, %v69, 0.0
  %75 = vadd.xlane.f32.xlu0 %v74
  %v76 = vpop.xlane.xlu0 %75
  %v77 = vsel %vm57, %v70, 0.0
  %78 = vadd.xlane.f32.xlu0 %v77
  %v79 = vpop.xlane.xlu0 %78
  %v80 = vmul.f32 %v73, %v61
  %v81 = vmul.f32 %v76, %v61
  %v82 = vmul.f32 %v79, %v61
  %v83 = vadd.f32 %v80, 1e-05
  %v84 = vadd.f32 %v81, 1e-05
  %v85 = vadd.f32 %v82, 1e-05
  %v86 = vrsqrt.pop %v83
  %v87 = vrsqrt.pop %v84
  %v88 = vrsqrt.pop %v85
  %v89 = vmul.f32 %v65, %v86
  %v90 = vmul.f32 %v66, %v87
  %v91 = vmul.f32 %v67, %v88
  %v93 = vlaneseq
  %v94 = vshrl.u32 %v93, 7
  %v95 = vsub.s32 0, %v94
  %v96 = vrot.slane %v48, %v95
  %v98 = vmul.f32 %v89, %v96
  %v99 = vmul.f32 %v90, %v96
  %v100 = vmul.f32 %v91, %v96
  %v102 = vlaneseq
  %v103 = vshrl.u32 %v102, 7
  %v104 = vsub.s32 0, %v103
  %v105 = vrot.slane %v49, %v104
  %v107 = vadd.f32 %v98, %v105
  %v108 = vadd.f32 %v99, %v105
  %v109 = vadd.f32 %v100, %v105
  %v110 = vld [vmem:[%s3] sm:$0xff]
  %v111 = vld [vmem:[%s3 + $0x8] sm:$0xff]
  %v112 = vld [vmem:[%s3 + $0x10] sm:$0xff]
  %v113 = vld [vmem:[%s3 + $0x18] sm:$0xff]
  %v114 = vld [vmem:[%s4] sm:$0x1]
  %v116 = vlaneseq
  %v117 = vshrl.u32 %v116, 7
  %v118 = vsub.s32 0, %v117
  %v119 = vrot.slane %v114, %v118
  %v122 = vsel %vm50, %v107, 0
  %v125 = vsel %vm50, %v108, 0
  %v128 = vsel %vm50, %v109, 0
  %130 = vmatprep.subr.mxu0 0.0
  %131 = vmatpush1.msra.mxu0 %v110
  %132 = vmatprep.subr.mxu0 0.0
  %133 = vmatpush1.msra.mxu0 %v111
  %134 = vmatprep.subr.mxu0 0.0
  %135 = vmatpush1.msra.mxu0 %v112
  %136 = vmatprep.subr.mxu0 0.0
  %137 = vmatpush1.msra.mxu0 %v113
  %138 = vmatprep.subr.mxu0 0.0
  %139 = vmatpush1.msra.mxu0 0.0
  %140 = vmatprep.subr.mxu0 0.0
  %141 = vmatpush1.msra.mxu0 0.0
  %142 = vmatprep.subr.mxu0 0.0
  %143 = vmatpush1.msra.mxu0 0.0
  %144 = vmatprep.subr.mxu0 0.0
  %145 = vmatpush1.msra.mxu0 0.0
  %146 = vmatprep.subr.mxu0 0.0
  %147 = vmatpush1.msra.mxu0 0.0
  %148 = vmatprep.subr.mxu0 0.0
  %149 = vmatpush1.msra.mxu0 0.0
  %150 = vmatprep.subr.mxu0 0.0
  %151 = vmatpush1.msra.mxu0 0.0
  %152 = vmatprep.subr.mxu0 0.0
  %153 = vmatpush1.msra.mxu0 0.0
  %154 = vmatprep.subr.mxu0 0.0
  %155 = vmatpush1.msra.mxu0 0.0
  %156 = vmatprep.subr.mxu0 0.0
  %157 = vmatpush1.msra.mxu0 0.0
  %158 = vmatprep.subr.mxu0 0.0
  %159 = vmatpush1.msra.mxu0 0.0
  %160 = vmatprep.subr.mxu0 0.0
  %161 = vmatpush1.msra.mxu0 0.0
  %162 = vmatprep.subr.mxu0 0.0
  %163 = vmatpush1.msra.mxu0 0.0
  %164 = vmatprep.subr.mxu0 0.0
  %165 = vmatpush1.msra.mxu0 0.0
  %166 = vmatprep.subr.mxu0 0.0
  %167 = vmatpush1.msra.mxu0 0.0
  %168 = vmatprep.subr.mxu0 0.0
  %169 = vmatpush1.msra.mxu0 0.0
  %170 = vmatprep.subr.mxu0 0.0
  %171 = vmatpush1.msra.mxu0 0.0
  %172 = vmatprep.subr.mxu0 0.0
  %173 = vmatpush1.msra.mxu0 0.0
  %174 = vmatprep.subr.mxu0 0.0
  %175 = vmatpush1.msra.mxu0 0.0
  %176 = vmatprep.subr.mxu0 0.0
  %177 = vmatpush1.msra.mxu0 0.0
  %178 = vmatprep.subr.mxu0 0.0
  %179 = vmatpush1.msra.mxu0 0.0
  %180 = vmatprep.subr.mxu0 0.0
  %181 = vmatpush1.msra.mxu0 0.0
  %182 = vmatprep.subr.mxu0 0.0
  %183 = vmatpush1.msra.mxu0 0.0
  %184 = vmatprep.subr.mxu0 0.0
  %185 = vmatpush1.msra.mxu0 0.0
  %186 = vmatprep.subr.mxu0 0.0
  %187 = vmatpush1.msra.mxu0 0.0
  %188 = vmatprep.subr.mxu0 0.0
  %189 = vmatpush1.msra.mxu0 0.0
  %190 = vmatprep.subr.mxu0 0.0
  %191 = vmatpush1.msra.mxu0 0.0
  %192 = vmatprep.subr.mxu0 0.0
  %193 = vmatpush1.msra.mxu0 0.0
  %194 = vmatprep.mubr.f32.mxu0 0.0
  %195 = vmatmul.mubr.f32.gmra.mrb[0].mxu0 %v122
  %v196 = vpop.f32.mrb[0].mxu0
  %v197 = vadd.f32 %v119, %v196
  %v198 = vpop.f32.mrb[0].mxu0
  %199 = vmatprep.mubr.f32.mxu0 0.0
  %200 = vmatmul.mubr.f32.gmra.mrb[0].mxu0 %v125
  %v201 = vpop.f32.mrb[0].mxu0
  %v202 = vadd.f32 %v119, %v201
  %v203 = vpop.f32.mrb[0].mxu0
  %204 = vmatprep.mubr.f32.mxu0 0.0
  %205 = vmatmul.mubr.f32.gmra.mrb[0].mxu0 %v128
  %v206 = vpop.f32.mrb[0].mxu0
  %v207 = vadd.f32 %v119, %v206
  %v208 = vpop.f32.mrb[0].mxu0
  %209 = vdwg.mxu0
  %v210 = vxor.u32 %v197, 2147483648
  %v211 = vxor.u32 %v202, 2147483648
  %v212 = vxor.u32 %v207, 2147483648
  %v213 = vmul.f32 %v210, 1.442695
  %v214 = vpow.pop %v213
  %v215 = vmul.f32 %v211, 1.442695
  %v216 = vpow.pop %v215
  %v217 = vmul.f32 %v212, 1.442695
  %v218 = vpow.pop %v217
  %v219 = vadd.f32 %v214, 1.0
  %v220 = vadd.f32 %v216, 1.0
  %v221 = vadd.f32 %v218, 1.0
  %v222 = vrcp.pop %v219
  %v223 = vmul.f32 1.0, %v222
  %v224 = vrcp.pop %v220
  %v225 = vmul.f32 1.0, %v224
  %v226 = vrcp.pop %v221
  %v227 = vmul.f32 1.0, %v226
  %v228 = vmul.f32 %v197, %v223
  %v229 = vmul.f32 %v202, %v225
  %v230 = vmul.f32 %v207, %v227
  %v231 = vld [vmem:[%s5] sm:$0xff]
  %v232 = vld [vmem:[%s5 + $0x8] sm:$0xff]
  %v233 = vld [vmem:[%s5 + $0x10] sm:$0xff]
  %v234 = vld [vmem:[%s5 + $0x18] sm:$0xff]
  %v235 = vld [vmem:[%s5 + $0x20] sm:$0xff]
  %v236 = vld [vmem:[%s5 + $0x28] sm:$0xff]
  %v237 = vld [vmem:[%s5 + $0x30] sm:$0xff]
  %v238 = vld [vmem:[%s5 + $0x38] sm:$0xff]
  %v239 = vld [vmem:[%s5 + $0x40] sm:$0xff]
  %v240 = vld [vmem:[%s5 + $0x48] sm:$0xff]
  %v241 = vld [vmem:[%s5 + $0x50] sm:$0xff]
  %v242 = vld [vmem:[%s5 + $0x58] sm:$0xff]
  %v243 = vld [vmem:[%s5 + $0x60] sm:$0xff]
  %v244 = vld [vmem:[%s5 + $0x68] sm:$0xff]
  %v245 = vld [vmem:[%s5 + $0x70] sm:$0xff]
  %v246 = vld [vmem:[%s5 + $0x78] sm:$0xff]
  %v247 = vld [vmem:[%s6] sm:$0x1]
  %v249 = vlaneseq
  %v250 = vshrl.u32 %v249, 7
  %v251 = vsub.s32 0, %v250
  %v252 = vrot.slane %v247, %v251
  %254 = vmatprep.subr.mxu0 0.0
  %255 = vmatpush1.msra.mxu0 %v231
  %256 = vmatprep.subr.mxu0 0.0
  %257 = vmatpush1.msra.mxu0 %v232
  %258 = vmatprep.subr.mxu0 0.0
  %259 = vmatpush1.msra.mxu0 %v233
  %260 = vmatprep.subr.mxu0 0.0
  %261 = vmatpush1.msra.mxu0 %v234
  %262 = vmatprep.subr.mxu0 0.0
  %263 = vmatpush1.msra.mxu0 %v235
  %264 = vmatprep.subr.mxu0 0.0
  %265 = vmatpush1.msra.mxu0 %v236
  %266 = vmatprep.subr.mxu0 0.0
  %267 = vmatpush1.msra.mxu0 %v237
  %268 = vmatprep.subr.mxu0 0.0
  %269 = vmatpush1.msra.mxu0 %v238
  %270 = vmatprep.subr.mxu0 0.0
  %271 = vmatpush1.msra.mxu0 %v239
  %272 = vmatprep.subr.mxu0 0.0
  %273 = vmatpush1.msra.mxu0 %v240
  %274 = vmatprep.subr.mxu0 0.0
  %275 = vmatpush1.msra.mxu0 %v241
  %276 = vmatprep.subr.mxu0 0.0
  %277 = vmatpush1.msra.mxu0 %v242
  %278 = vmatprep.subr.mxu0 0.0
  %279 = vmatpush1.msra.mxu0 %v243
  %280 = vmatprep.subr.mxu0 0.0
  %281 = vmatpush1.msra.mxu0 %v244
  %282 = vmatprep.subr.mxu0 0.0
  %283 = vmatpush1.msra.mxu0 %v245
  %284 = vmatprep.subr.mxu0 0.0
  %285 = vmatpush1.msra.mxu0 %v246
  %286 = vmatprep.subr.mxu0 0.0
  %287 = vmatpush1.msra.mxu0 0.0
  %288 = vmatprep.subr.mxu0 0.0
  %289 = vmatpush1.msra.mxu0 0.0
  %290 = vmatprep.subr.mxu0 0.0
  %291 = vmatpush1.msra.mxu0 0.0
  %292 = vmatprep.subr.mxu0 0.0
  %293 = vmatpush1.msra.mxu0 0.0
  %294 = vmatprep.subr.mxu0 0.0
  %295 = vmatpush1.msra.mxu0 0.0
  %296 = vmatprep.subr.mxu0 0.0
  %297 = vmatpush1.msra.mxu0 0.0
  %298 = vmatprep.subr.mxu0 0.0
  %299 = vmatpush1.msra.mxu0 0.0
  %300 = vmatprep.subr.mxu0 0.0
  %301 = vmatpush1.msra.mxu0 0.0
  %302 = vmatprep.subr.mxu0 0.0
  %303 = vmatpush1.msra.mxu0 0.0
  %304 = vmatprep.subr.mxu0 0.0
  %305 = vmatpush1.msra.mxu0 0.0
  %306 = vmatprep.subr.mxu0 0.0
  %307 = vmatpush1.msra.mxu0 0.0
  %308 = vmatprep.subr.mxu0 0.0
  %309 = vmatpush1.msra.mxu0 0.0
  %310 = vmatprep.subr.mxu0 0.0
  %311 = vmatpush1.msra.mxu0 0.0
  %312 = vmatprep.subr.mxu0 0.0
  %313 = vmatpush1.msra.mxu0 0.0
  %314 = vmatprep.subr.mxu0 0.0
  %315 = vmatpush1.msra.mxu0 0.0
  %316 = vmatprep.subr.mxu0 0.0
  %317 = vmatpush1.msra.mxu0 0.0
  %318 = vmatprep.mubr.f32.mxu0 0.0
  %319 = vmatmul.mubr.f32.gmra.mrb[0].mxu0 %v228
  %v320 = vpop.f32.mrb[0].mxu0
  %v321 = vadd.f32 %v252, %v320
  %v322 = vpop.f32.mrb[0].mxu0
  %323 = vmatprep.mubr.f32.mxu0 0.0
  %324 = vmatmul.mubr.f32.gmra.mrb[0].mxu0 %v229
  %v325 = vpop.f32.mrb[0].mxu0
  %v326 = vadd.f32 %v252, %v325
  %v327 = vpop.f32.mrb[0].mxu0
  %328 = vmatprep.mubr.f32.mxu0 0.0
  %329 = vmatmul.mubr.f32.gmra.mrb[0].mxu0 %v230
  %v330 = vpop.f32.mrb[0].mxu0
  %v331 = vadd.f32 %v252, %v330
  %v332 = vpop.f32.mrb[0].mxu0
  %333 = vdwg.mxu0
  %v334 = vmul.f32 %v321, 0.5
  %v335 = vmul.f32 %v326, 0.5
  %v336 = vmul.f32 %v331, 0.5
  %v337 = vadd.f32 %v45, %v334
  %v338 = vadd.f32 %v46, %v335
  %v339 = vadd.f32 %v47, %v336
  %340 = vst.msk [vmem:[%s12] sm:$0xff] %vm50, %v337
  %341 = vst.msk [vmem:[%s12 + $0x8] sm:$0xff] %vm50, %v338
  %342 = vst.msk [vmem:[%s12 + $0x10] sm:$0x3] %vm57, %v339
  %v343 = vld [vmem:[%s7] sm:$0x1]
  %v344 = vld [vmem:[%s8] sm:$0x1]
  %v345 = vsel %vm50, %v337, 0.0
  %346 = vadd.xlane.f32.xlu0 %v345
  %v347 = vpop.xlane.xlu0 %346
  %v348 = vsel %vm50, %v338, 0.0
  %349 = vadd.xlane.f32.xlu0 %v348
  %v350 = vpop.xlane.xlu0 %349
  %v351 = vsel %vm57, %v339, 0.0
  %352 = vadd.xlane.f32.xlu0 %v351
  %v353 = vpop.xlane.xlu0 %352
  %v354 = vmul.f32 %v347, %v61
  %v355 = vmul.f32 %v350, %v61
  %v356 = vmul.f32 %v353, %v61
  %v357 = vsub.f32 %v337, %v354
  %v358 = vsub.f32 %v338, %v355
  %v359 = vsub.f32 %v339, %v356
  %v360 = vmul.f32 %v357, %v357
  %v361 = vmul.f32 %v358, %v358
  %v362 = vmul.f32 %v359, %v359
  %v363 = vsel %vm50, %v360, 0.0
  %364 = vadd.xlane.f32.xlu0 %v363
  %v365 = vpop.xlane.xlu0 %364
  %v366 = vsel %vm50, %v361, 0.0
  %367 = vadd.xlane.f32.xlu0 %v366
  %v368 = vpop.xlane.xlu0 %367
  %v369 = vsel %vm57, %v362, 0.0
  %370 = vadd.xlane.f32.xlu0 %v369
  %v371 = vpop.xlane.xlu0 %370
  %v372 = vmul.f32 %v365, %v61
  %v373 = vmul.f32 %v368, %v61
  %v374 = vmul.f32 %v371, %v61
  %v375 = vadd.f32 %v372, 1e-05
  %v376 = vadd.f32 %v373, 1e-05
  %v377 = vadd.f32 %v374, 1e-05
  %v378 = vrsqrt.pop %v375
  %v379 = vrsqrt.pop %v376
  %v380 = vrsqrt.pop %v377
  %v381 = vmul.f32 %v357, %v378
  %v382 = vmul.f32 %v358, %v379
  %v383 = vmul.f32 %v359, %v380
  %v385 = vlaneseq
  %v386 = vshrl.u32 %v385, 7
  %v387 = vsub.s32 0, %v386
  %v388 = vrot.slane %v343, %v387
  %v390 = vmul.f32 %v381, %v388
  %v391 = vmul.f32 %v382, %v388
  %v392 = vmul.f32 %v383, %v388
  %v394 = vlaneseq
  %v395 = vshrl.u32 %v394, 7
  %v396 = vsub.s32 0, %v395
  %v397 = vrot.slane %v344, %v396
  %v399 = vadd.f32 %v390, %v397
  %v400 = vadd.f32 %v391, %v397
  %v401 = vadd.f32 %v392, %v397
  %v402 = vld [vmem:[%s9] sm:$0xff]
  %v403 = vld [vmem:[%s9 + $0x8] sm:$0xff]
  %v404 = vld [vmem:[%s9 + $0x10] sm:$0xff]
  %v405 = vld [vmem:[%s9 + $0x18] sm:$0xff]
  %v407 = vsel %vm50, %v399, 0
  %v410 = vsel %vm50, %v400, 0
  %v413 = vsel %vm50, %v401, 0
  %415 = vmatprep.subr.mxu0 0.0
  %416 = vmatpush1.msra.mxu0 %v402
  %417 = vmatprep.subr.mxu0 0.0
  %418 = vmatpush1.msra.mxu0 %v403
  %419 = vmatprep.subr.mxu0 0.0
  %420 = vmatpush1.msra.mxu0 %v404
  %421 = vmatprep.subr.mxu0 0.0
  %422 = vmatpush1.msra.mxu0 %v405
  %423 = vmatprep.subr.mxu0 0.0
  %424 = vmatpush1.msra.mxu0 0.0
  %425 = vmatprep.subr.mxu0 0.0
  %426 = vmatpush1.msra.mxu0 0.0
  %427 = vmatprep.subr.mxu0 0.0
  %428 = vmatpush1.msra.mxu0 0.0
  %429 = vmatprep.subr.mxu0 0.0
  %430 = vmatpush1.msra.mxu0 0.0
  %431 = vmatprep.subr.mxu0 0.0
  %432 = vmatpush1.msra.mxu0 0.0
  %433 = vmatprep.subr.mxu0 0.0
  %434 = vmatpush1.msra.mxu0 0.0
  %435 = vmatprep.subr.mxu0 0.0
  %436 = vmatpush1.msra.mxu0 0.0
  %437 = vmatprep.subr.mxu0 0.0
  %438 = vmatpush1.msra.mxu0 0.0
  %439 = vmatprep.subr.mxu0 0.0
  %440 = vmatpush1.msra.mxu0 0.0
  %441 = vmatprep.subr.mxu0 0.0
  %442 = vmatpush1.msra.mxu0 0.0
  %443 = vmatprep.subr.mxu0 0.0
  %444 = vmatpush1.msra.mxu0 0.0
  %445 = vmatprep.subr.mxu0 0.0
  %446 = vmatpush1.msra.mxu0 0.0
  %447 = vmatprep.subr.mxu0 0.0
  %448 = vmatpush1.msra.mxu0 0.0
  %449 = vmatprep.subr.mxu0 0.0
  %450 = vmatpush1.msra.mxu0 0.0
  %451 = vmatprep.subr.mxu0 0.0
  %452 = vmatpush1.msra.mxu0 0.0
  %453 = vmatprep.subr.mxu0 0.0
  %454 = vmatpush1.msra.mxu0 0.0
  %455 = vmatprep.subr.mxu0 0.0
  %456 = vmatpush1.msra.mxu0 0.0
  %457 = vmatprep.subr.mxu0 0.0
  %458 = vmatpush1.msra.mxu0 0.0
  %459 = vmatprep.subr.mxu0 0.0
  %460 = vmatpush1.msra.mxu0 0.0
  %461 = vmatprep.subr.mxu0 0.0
  %462 = vmatpush1.msra.mxu0 0.0
  %463 = vmatprep.subr.mxu0 0.0
  %464 = vmatpush1.msra.mxu0 0.0
  %465 = vmatprep.subr.mxu0 0.0
  %466 = vmatpush1.msra.mxu0 0.0
  %467 = vmatprep.subr.mxu0 0.0
  %468 = vmatpush1.msra.mxu0 0.0
  %469 = vmatprep.subr.mxu0 0.0
  %470 = vmatpush1.msra.mxu0 0.0
  %471 = vmatprep.subr.mxu0 0.0
  %472 = vmatpush1.msra.mxu0 0.0
  %473 = vmatprep.subr.mxu0 0.0
  %474 = vmatpush1.msra.mxu0 0.0
  %475 = vmatprep.subr.mxu0 0.0
  %476 = vmatpush1.msra.mxu0 0.0
  %477 = vmatprep.subr.mxu0 0.0
  %478 = vmatpush1.msra.mxu0 0.0
  %479 = vmatprep.mubr.f32.mxu0 0.0
  %480 = vmatmul.mubr.f32.gmra.mrb[0].mxu0 %v407
  %v481 = vpop.f32.mrb[0].mxu0
  %v482 = vadd.f32 0.0, %v481
  %v483 = vpop.f32.mrb[0].mxu0
  %484 = vmatprep.mubr.f32.mxu0 0.0
  %485 = vmatmul.mubr.f32.gmra.mrb[0].mxu0 %v410
  %v486 = vpop.f32.mrb[0].mxu0
  %v487 = vadd.f32 0.0, %v486
  %v488 = vpop.f32.mrb[0].mxu0
  %489 = vmatprep.mubr.f32.mxu0 0.0
  %490 = vmatmul.mubr.f32.gmra.mrb[0].mxu0 %v413
  %v491 = vpop.f32.mrb[0].mxu0
  %v492 = vadd.f32 0.0, %v491
  %v493 = vpop.f32.mrb[0].mxu0
  %494 = vdwg.mxu0
  %495 = vst.msk [vmem:[%s13] sm:$0xff] %vm50, %v482
  %496 = vst.msk [vmem:[%s13 + $0x8] sm:$0xff] %vm50, %v487
  %497 = vst.msk [vmem:[%s13 + $0x10] sm:$0x3] %vm57, %v492
  %v498 = vld [vmem:[%s10] sm:$0xff]
  %v499 = vld [vmem:[%s10 + $0x8] sm:$0xff]
  %v500 = vld [vmem:[%s10 + $0x10] sm:$0xff]
  %v501 = vld [vmem:[%s10 + $0x18] sm:$0xff]
  %502 = vmatprep.subr.mxu0 0.0
  %503 = vmatpush1.msra.mxu0 %v498
  %504 = vmatprep.subr.mxu0 0.0
  %505 = vmatpush1.msra.mxu0 %v499
  %506 = vmatprep.subr.mxu0 0.0
  %507 = vmatpush1.msra.mxu0 %v500
  %508 = vmatprep.subr.mxu0 0.0
  %509 = vmatpush1.msra.mxu0 %v501
  %510 = vmatprep.subr.mxu0 0.0
  %511 = vmatpush1.msra.mxu0 0.0
  %512 = vmatprep.subr.mxu0 0.0
  %513 = vmatpush1.msra.mxu0 0.0
  %514 = vmatprep.subr.mxu0 0.0
  %515 = vmatpush1.msra.mxu0 0.0
  %516 = vmatprep.subr.mxu0 0.0
  %517 = vmatpush1.msra.mxu0 0.0
  %518 = vmatprep.subr.mxu0 0.0
  %519 = vmatpush1.msra.mxu0 0.0
  %520 = vmatprep.subr.mxu0 0.0
  %521 = vmatpush1.msra.mxu0 0.0
  %522 = vmatprep.subr.mxu0 0.0
  %523 = vmatpush1.msra.mxu0 0.0
  %524 = vmatprep.subr.mxu0 0.0
  %525 = vmatpush1.msra.mxu0 0.0
  %526 = vmatprep.subr.mxu0 0.0
  %527 = vmatpush1.msra.mxu0 0.0
  %528 = vmatprep.subr.mxu0 0.0
  %529 = vmatpush1.msra.mxu0 0.0
  %530 = vmatprep.subr.mxu0 0.0
  %531 = vmatpush1.msra.mxu0 0.0
  %532 = vmatprep.subr.mxu0 0.0
  %533 = vmatpush1.msra.mxu0 0.0
  %534 = vmatprep.subr.mxu0 0.0
  %535 = vmatpush1.msra.mxu0 0.0
  %536 = vmatprep.subr.mxu0 0.0
  %537 = vmatpush1.msra.mxu0 0.0
  %538 = vmatprep.subr.mxu0 0.0
  %539 = vmatpush1.msra.mxu0 0.0
  %540 = vmatprep.subr.mxu0 0.0
  %541 = vmatpush1.msra.mxu0 0.0
  %542 = vmatprep.subr.mxu0 0.0
  %543 = vmatpush1.msra.mxu0 0.0
  %544 = vmatprep.subr.mxu0 0.0
  %545 = vmatpush1.msra.mxu0 0.0
  %546 = vmatprep.subr.mxu0 0.0
  %547 = vmatpush1.msra.mxu0 0.0
  %548 = vmatprep.subr.mxu0 0.0
  %549 = vmatpush1.msra.mxu0 0.0
  %550 = vmatprep.subr.mxu0 0.0
  %551 = vmatpush1.msra.mxu0 0.0
  %552 = vmatprep.subr.mxu0 0.0
  %553 = vmatpush1.msra.mxu0 0.0
  %554 = vmatprep.subr.mxu0 0.0
  %555 = vmatpush1.msra.mxu0 0.0
  %556 = vmatprep.subr.mxu0 0.0
  %557 = vmatpush1.msra.mxu0 0.0
  %558 = vmatprep.subr.mxu0 0.0
  %559 = vmatpush1.msra.mxu0 0.0
  %560 = vmatprep.subr.mxu0 0.0
  %561 = vmatpush1.msra.mxu0 0.0
  %562 = vmatprep.subr.mxu0 0.0
  %563 = vmatpush1.msra.mxu0 0.0
  %564 = vmatprep.subr.mxu0 0.0
  %565 = vmatpush1.msra.mxu0 0.0
  %566 = vmatprep.mubr.f32.mxu0 0.0
  %567 = vmatmul.mubr.f32.gmra.mrb[0].mxu0 %v407
  %v568 = vpop.f32.mrb[0].mxu0
  %v569 = vadd.f32 0.0, %v568
  %v570 = vpop.f32.mrb[0].mxu0
  %571 = vmatprep.mubr.f32.mxu0 0.0
  %572 = vmatmul.mubr.f32.gmra.mrb[0].mxu0 %v410
  %v573 = vpop.f32.mrb[0].mxu0
  %v574 = vadd.f32 0.0, %v573
  %v575 = vpop.f32.mrb[0].mxu0
  %576 = vmatprep.mubr.f32.mxu0 0.0
  %577 = vmatmul.mubr.f32.gmra.mrb[0].mxu0 %v413
  %v578 = vpop.f32.mrb[0].mxu0
  %v579 = vadd.f32 0.0, %v578
  %v580 = vpop.f32.mrb[0].mxu0
  %581 = vdwg.mxu0
  %582 = vst.msk [vmem:[%s14] sm:$0xff] %vm50, %v569
  %583 = vst.msk [vmem:[%s14 + $0x8] sm:$0xff] %vm50, %v574
  %584 = vst.msk [vmem:[%s14 + $0x10] sm:$0x3] %vm57, %v579
  %v585 = vld [vmem:[%s11] sm:$0xff]
  %v586 = vld [vmem:[%s11 + $0x8] sm:$0xff]
  %v587 = vld [vmem:[%s11 + $0x10] sm:$0xff]
  %v588 = vld [vmem:[%s11 + $0x18] sm:$0xff]
  %589 = vmatprep.subr.mxu0 0.0
  %590 = vmatpush1.msra.mxu0 %v585
  %591 = vmatprep.subr.mxu0 0.0
  %592 = vmatpush1.msra.mxu0 %v586
  %593 = vmatprep.subr.mxu0 0.0
  %594 = vmatpush1.msra.mxu0 %v587
  %595 = vmatprep.subr.mxu0 0.0
  %596 = vmatpush1.msra.mxu0 %v588
  %597 = vmatprep.subr.mxu0 0.0
  %598 = vmatpush1.msra.mxu0 0.0
  %599 = vmatprep.subr.mxu0 0.0
  %600 = vmatpush1.msra.mxu0 0.0
  %601 = vmatprep.subr.mxu0 0.0
  %602 = vmatpush1.msra.mxu0 0.0
  %603 = vmatprep.subr.mxu0 0.0
  %604 = vmatpush1.msra.mxu0 0.0
  %605 = vmatprep.subr.mxu0 0.0
  %606 = vmatpush1.msra.mxu0 0.0
  %607 = vmatprep.subr.mxu0 0.0
  %608 = vmatpush1.msra.mxu0 0.0
  %609 = vmatprep.subr.mxu0 0.0
  %610 = vmatpush1.msra.mxu0 0.0
  %611 = vmatprep.subr.mxu0 0.0
  %612 = vmatpush1.msra.mxu0 0.0
  %613 = vmatprep.subr.mxu0 0.0
  %614 = vmatpush1.msra.mxu0 0.0
  %615 = vmatprep.subr.mxu0 0.0
  %616 = vmatpush1.msra.mxu0 0.0
  %617 = vmatprep.subr.mxu0 0.0
  %618 = vmatpush1.msra.mxu0 0.0
  %619 = vmatprep.subr.mxu0 0.0
  %620 = vmatpush1.msra.mxu0 0.0
  %621 = vmatprep.subr.mxu0 0.0
  %622 = vmatpush1.msra.mxu0 0.0
  %623 = vmatprep.subr.mxu0 0.0
  %624 = vmatpush1.msra.mxu0 0.0
  %625 = vmatprep.subr.mxu0 0.0
  %626 = vmatpush1.msra.mxu0 0.0
  %627 = vmatprep.subr.mxu0 0.0
  %628 = vmatpush1.msra.mxu0 0.0
  %629 = vmatprep.subr.mxu0 0.0
  %630 = vmatpush1.msra.mxu0 0.0
  %631 = vmatprep.subr.mxu0 0.0
  %632 = vmatpush1.msra.mxu0 0.0
  %633 = vmatprep.subr.mxu0 0.0
  %634 = vmatpush1.msra.mxu0 0.0
  %635 = vmatprep.subr.mxu0 0.0
  %636 = vmatpush1.msra.mxu0 0.0
  %637 = vmatprep.subr.mxu0 0.0
  %638 = vmatpush1.msra.mxu0 0.0
  %639 = vmatprep.subr.mxu0 0.0
  %640 = vmatpush1.msra.mxu0 0.0
  %641 = vmatprep.subr.mxu0 0.0
  %642 = vmatpush1.msra.mxu0 0.0
  %643 = vmatprep.subr.mxu0 0.0
  %644 = vmatpush1.msra.mxu0 0.0
  %645 = vmatprep.subr.mxu0 0.0
  %646 = vmatpush1.msra.mxu0 0.0
  %647 = vmatprep.subr.mxu0 0.0
  %648 = vmatpush1.msra.mxu0 0.0
  %649 = vmatprep.subr.mxu0 0.0
  %650 = vmatpush1.msra.mxu0 0.0
  %651 = vmatprep.subr.mxu0 0.0
  %652 = vmatpush1.msra.mxu0 0.0
  %653 = vmatprep.mubr.f32.mxu0 0.0
  %654 = vmatmul.mubr.f32.gmra.mrb[0].mxu0 %v407
  %v655 = vpop.f32.mrb[0].mxu0
  %v656 = vadd.f32 0.0, %v655
  %v657 = vpop.f32.mrb[0].mxu0
  %658 = vmatprep.mubr.f32.mxu0 0.0
  %659 = vmatmul.mubr.f32.gmra.mrb[0].mxu0 %v410
  %v660 = vpop.f32.mrb[0].mxu0
  %v661 = vadd.f32 0.0, %v660
  %v662 = vpop.f32.mrb[0].mxu0
  %663 = vmatprep.mubr.f32.mxu0 0.0
  %664 = vmatmul.mubr.f32.gmra.mrb[0].mxu0 %v413
  %v665 = vpop.f32.mrb[0].mxu0
  %v666 = vadd.f32 0.0, %v665
  %v667 = vpop.f32.mrb[0].mxu0
  %668 = vdwg.mxu0
  %669 = vst.msk [vmem:[%s15] sm:$0xff] %vm50, %v656
  %670 = vst.msk [vmem:[%s15 + $0x8] sm:$0xff] %vm50, %v661
  %671 = vst.msk [vmem:[%s15 + $0x10] sm:$0x3] %vm57, %v666
  // Predicated region
  $region50: #{xlsr_conformer_forward.11} parent=0 // pred_check
    _
  $region51: #{xlsr_conformer_forward.11} parent=0 // pred_check_branch
    %673 = sbr.rel (0) target = $region53
  $region52: #{xlsr_conformer_forward.11} parent=0 // pred_region
    _
  $region53: #{xlsr_conformer_forward.11} parent=0 // pred_fallthru
    _
  // Predicated region
  $region54: #{xlsr_conformer_forward.11} parent=0 // pred_check
    _
  $region55: #{xlsr_conformer_forward.11} parent=0 // pred_check_branch
    %675 = sbr.rel (0) target = $region57
  $region56: #{xlsr_conformer_forward.11} parent=0 // pred_region
    _
  $region57: #{xlsr_conformer_forward.11} parent=0 // pred_fallthru
    _
  // Predicated region
  $region58: #{xlsr_conformer_forward.11} parent=0 // pred_check
    _
  $region59: #{xlsr_conformer_forward.11} parent=0 // pred_check_branch
    %677 = sbr.rel (0) target = $region61
  $region60: #{xlsr_conformer_forward.11} parent=0 // pred_region
    _
  $region61: #{xlsr_conformer_forward.11} parent=0 // pred_fallthru
    _
  // Predicated region
  $region62: #{xlsr_conformer_forward.11} parent=0 // pred_check
    _
  $region63: #{xlsr_conformer_forward.11} parent=0 // pred_check_branch
    %679 = sbr.rel (0) target = $region65
  $region64: #{xlsr_conformer_forward.11} parent=0 // pred_region
    _
  $region65: #{xlsr_conformer_forward.11} parent=0 // pred_fallthru
    _
  // Predicated region
  $region66: #{xlsr_conformer_forward.11} parent=0 // pred_check
    _
  $region67: #{xlsr_conformer_forward.11} parent=0 // pred_check_branch
    %681 = sbr.rel (0) target = $region69
  $region68: #{xlsr_conformer_forward.11} parent=0 // pred_region
    _
  $region69: #{xlsr_conformer_forward.11} parent=0 // pred_fallthru
    _
  // Predicated region
  $region70: #{xlsr_conformer_forward.11} parent=0 // pred_check
    _
  $region71: #{xlsr_conformer_forward.11} parent=0 // pred_check_branch
    %683 = sbr.rel (0) target = $region73
  $region72: #{xlsr_conformer_forward.11} parent=0 // pred_region
    _
  $region73: #{xlsr_conformer_forward.11} parent=0 // pred_fallthru
    _
  // Predicated region
  $region74: #{xlsr_conformer_forward.11} parent=0 // pred_check
    _
  $region75: #{xlsr_conformer_forward.11} parent=0 // pred_check_branch
    %685 = sbr.rel (0) target = $region77
  $region76: #{xlsr_conformer_forward.11} parent=0 // pred_region
    _
  $region77: #{xlsr_conformer_forward.11} parent=0 // pred_fallthru
    _
  // Predicated region
  $region78: #{xlsr_conformer_forward.11} parent=0 // pred_check
    _
  $region79: #{xlsr_conformer_forward.11} parent=0 // pred_check_branch
    %687 = sbr.rel (0) target = $region81
  $region80: #{xlsr_conformer_forward.11} parent=0 // pred_region
    _
  $region81: #{xlsr_conformer_forward.11} parent=0 // pred_fallthru
    _

// kernel: xlsr_conformer_forward.14
$region0: #{xlsr_conformer_forward.14}
  #allocation0 [shape = 'u32[]', space=smem, size = 0x4, offset = 0x4, fixed_abs, tag = 'smem constant byte address 0x4 - core index']
  #allocation1 [shape = 'u32[144,128]{1,0:T(1,128)}', space=vmem, size = 0x12000, scoped, tag = 'internal scratch']
  %s0 = inlined_call_operand.vmem [shape: f32[18,32], index: 0, kind: input, shape index: {}]
  %s1 = inlined_call_operand.vmem [shape: f32[1,32], index: 1, kind: input, shape index: {}]
  %s2 = inlined_call_operand.vmem [shape: f32[1,32], index: 2, kind: input, shape index: {}]
  %s3 = inlined_call_operand.vmem [shape: f32[32,128], index: 3, kind: input, shape index: {}]
  %s4 = inlined_call_operand.vmem [shape: f32[1,128], index: 4, kind: input, shape index: {}]
  %s5 = inlined_call_operand.vmem [shape: f32[128,32], index: 5, kind: input, shape index: {}]
  %s6 = inlined_call_operand.vmem [shape: f32[1,32], index: 6, kind: input, shape index: {}]
  %s7 = inlined_call_operand.vmem [shape: f32[1,32], index: 7, kind: input, shape index: {}]
  %s8 = inlined_call_operand.vmem [shape: f32[1,32], index: 8, kind: input, shape index: {}]
  %s9 = inlined_call_operand.vmem [shape: f32[18,32], index: 9, kind: output, shape index: {}]
  %s10 = sld [smem:[#allocation0]]
  $region46: #{xlsr_conformer_forward.14} parent=0
    _
  %s12 = ssub.s32 1, %s10
  %s13 = scalar_select 0, %s12, %s10
  // Predicated region
  $region2: #{xlsr_conformer_forward.14} parent=0 // pred_check
    _
  $region3: #{xlsr_conformer_forward.14} parent=0 // pred_check_branch
    %15 = sbr.rel (0) target = $region5
  $region4: #{xlsr_conformer_forward.14} parent=0 // pred_region
    _
  $region5: #{xlsr_conformer_forward.14} parent=0 // pred_fallthru
    _
  // Predicated region
  $region6: #{xlsr_conformer_forward.14} parent=0 // pred_check
    _
  $region7: #{xlsr_conformer_forward.14} parent=0 // pred_check_branch
    %17 = sbr.rel (0) target = $region9
  $region8: #{xlsr_conformer_forward.14} parent=0 // pred_region
    _
  $region9: #{xlsr_conformer_forward.14} parent=0 // pred_fallthru
    _
  // Predicated region
  $region10: #{xlsr_conformer_forward.14} parent=0 // pred_check
    _
  $region11: #{xlsr_conformer_forward.14} parent=0 // pred_check_branch
    %19 = sbr.rel (0) target = $region13
  $region12: #{xlsr_conformer_forward.14} parent=0 // pred_region
    _
  $region13: #{xlsr_conformer_forward.14} parent=0 // pred_fallthru
    _
  // Predicated region
  $region14: #{xlsr_conformer_forward.14} parent=0 // pred_check
    _
  $region15: #{xlsr_conformer_forward.14} parent=0 // pred_check_branch
    %21 = sbr.rel (0) target = $region17
  $region16: #{xlsr_conformer_forward.14} parent=0 // pred_region
    _
  $region17: #{xlsr_conformer_forward.14} parent=0 // pred_fallthru
    _
  // Predicated region
  $region18: #{xlsr_conformer_forward.14} parent=0 // pred_check
    _
  $region19: #{xlsr_conformer_forward.14} parent=0 // pred_check_branch
    %23 = sbr.rel (0) target = $region21
  $region20: #{xlsr_conformer_forward.14} parent=0 // pred_region
    _
  $region21: #{xlsr_conformer_forward.14} parent=0 // pred_fallthru
    _
  // Predicated region
  $region22: #{xlsr_conformer_forward.14} parent=0 // pred_check
    _
  $region23: #{xlsr_conformer_forward.14} parent=0 // pred_check_branch
    %25 = sbr.rel (0) target = $region25
  $region24: #{xlsr_conformer_forward.14} parent=0 // pred_region
    _
  $region25: #{xlsr_conformer_forward.14} parent=0 // pred_fallthru
    _
  // Predicated region
  $region26: #{xlsr_conformer_forward.14} parent=0 // pred_check
    _
  $region27: #{xlsr_conformer_forward.14} parent=0 // pred_check_branch
    %27 = sbr.rel (0) target = $region29
  $region28: #{xlsr_conformer_forward.14} parent=0 // pred_region
    _
  $region29: #{xlsr_conformer_forward.14} parent=0 // pred_fallthru
    _
  // Predicated region
  $region30: #{xlsr_conformer_forward.14} parent=0 // pred_check
    _
  $region31: #{xlsr_conformer_forward.14} parent=0 // pred_check_branch
    %29 = sbr.rel (0) target = $region33
  $region32: #{xlsr_conformer_forward.14} parent=0 // pred_region
    _
  $region33: #{xlsr_conformer_forward.14} parent=0 // pred_fallthru
    _
  // Predicated region
  $region34: #{xlsr_conformer_forward.14} parent=0 // pred_check
    _
  $region35: #{xlsr_conformer_forward.14} parent=0 // pred_check_branch
    %31 = sbr.rel (0) target = $region37
  $region36: #{xlsr_conformer_forward.14} parent=0 // pred_region
    _
  $region37: #{xlsr_conformer_forward.14} parent=0 // pred_fallthru
    _
  %v32 = vld [vmem:[%s0] sm:$0xff]
  %v33 = vld [vmem:[%s0 + $0x8] sm:$0xff]
  %v34 = vld [vmem:[%s0 + $0x10] sm:$0x3]
  %v35 = vld [vmem:[%s1] sm:$0x1]
  %v36 = vld [vmem:[%s2] sm:$0x1]
  %vm37 = vcmask 261120
  %v38 = vsel %vm37, %v32, 0.0
  %39 = vadd.xlane.f32.xlu0 %v38
  %v40 = vpop.xlane.xlu0 %39
  %v41 = vsel %vm37, %v33, 0.0
  %42 = vadd.xlane.f32.xlu0 %v41
  %v43 = vpop.xlane.xlu0 %42
  %vm44 = vcmask 254976
  %v45 = vsel %vm44, %v34, 0.0
  %46 = vadd.xlane.f32.xlu0 %v45
  %v47 = vpop.xlane.xlu0 %46
  %v48 = vrcp.pop 32.0
  %v49 = vmul.f32 %v40, %v48
  %v50 = vmul.f32 %v43, %v48
  %v51 = vmul.f32 %v47, %v48
  %v52 = vsub.f32 %v32, %v49
  %v53 = vsub.f32 %v33, %v50
  %v54 = vsub.f32 %v34, %v51
  %v55 = vmul.f32 %v52, %v52
  %v56 = vmul.f32 %v53, %v53
  %v57 = vmul.f32 %v54, %v54
  %v58 = vsel %vm37, %v55, 0.0
  %59 = vadd.xlane.f32.xlu0 %v58
  %v60 = vpop.xlane.xlu0 %59
  %v61 = vsel %vm37, %v56, 0.0
  %62 = vadd.xlane.f32.xlu0 %v61
  %v63 = vpop.xlane.xlu0 %62
  %v64 = vsel %vm44, %v57, 0.0
  %65 = vadd.xlane.f32.xlu0 %v64
  %v66 = vpop.xlane.xlu0 %65
  %v67 = vmul.f32 %v60, %v48
  %v68 = vmul.f32 %v63, %v48
  %v69 = vmul.f32 %v66, %v48
  %v70 = vadd.f32 %v67, 1e-05
  %v71 = vadd.f32 %v68, 1e-05
  %v72 = vadd.f32 %v69, 1e-05
  %v73 = vrsqrt.pop %v70
  %v74 = vrsqrt.pop %v71
  %v75 = vrsqrt.pop %v72
  %v76 = vmul.f32 %v52, %v73
  %v77 = vmul.f32 %v53, %v74
  %v78 = vmul.f32 %v54, %v75
  %v80 = vlaneseq
  %v81 = vshrl.u32 %v80, 7
  %v82 = vsub.s32 0, %v81
  %v83 = vrot.slane %v35, %v82
  %v85 = vmul.f32 %v76, %v83
  %v86 = vmul.f32 %v77, %v83
  %v87 = vmul.f32 %v78, %v83
  %v89 = vlaneseq
  %v90 = vshrl.u32 %v89, 7
  %v91 = vsub.s32 0, %v90
  %v92 = vrot.slane %v36, %v91
  %v94 = vadd.f32 %v85, %v92
  %v95 = vadd.f32 %v86, %v92
  %v96 = vadd.f32 %v87, %v92
  %v97 = vld [vmem:[%s3] sm:$0xff]
  %v98 = vld [vmem:[%s3 + $0x8] sm:$0xff]
  %v99 = vld [vmem:[%s3 + $0x10] sm:$0xff]
  %v100 = vld [vmem:[%s3 + $0x18] sm:$0xff]
  %v101 = vld [vmem:[%s4] sm:$0x1]
  %v103 = vlaneseq
  %v104 = vshrl.u32 %v103, 7
  %v105 = vsub.s32 0, %v104
  %v106 = vrot.slane %v101, %v105
  %v109 = vsel %vm37, %v94, 0
  %v112 = vsel %vm37, %v95, 0
  %v115 = vsel %vm37, %v96, 0
  %117 = vmatprep.subr.mxu0 0.0
  %118 = vmatpush1.msra.mxu0 %v97
  %119 = vmatprep.subr.mxu0 0.0
  %120 = vmatpush1.msra.mxu0 %v98
  %121 = vmatprep.subr.mxu0 0.0
  %122 = vmatpush1.msra.mxu0 %v99
  %123 = vmatprep.subr.mxu0 0.0
  %124 = vmatpush1.msra.mxu0 %v100
  %125 = vmatprep.subr.mxu0 0.0
  %126 = vmatpush1.msra.mxu0 0.0
  %127 = vmatprep.subr.mxu0 0.0
  %128 = vmatpush1.msra.mxu0 0.0
  %129 = vmatprep.subr.mxu0 0.0
  %130 = vmatpush1.msra.mxu0 0.0
  %131 = vmatprep.subr.mxu0 0.0
  %132 = vmatpush1.msra.mxu0 0.0
  %133 = vmatprep.subr.mxu0 0.0
  %134 = vmatpush1.msra.mxu0 0.0
  %135 = vmatprep.subr.mxu0 0.0
  %136 = vmatpush1.msra.mxu0 0.0
  %137 = vmatprep.subr.mxu0 0.0
  %138 = vmatpush1.msra.mxu0 0.0
  %139 = vmatprep.subr.mxu0 0.0
  %140 = vmatpush1.msra.mxu0 0.0
  %141 = vmatprep.subr.mxu0 0.0
  %142 = vmatpush1.msra.mxu0 0.0
  %143 = vmatprep.subr.mxu0 0.0
  %144 = vmatpush1.msra.mxu0 0.0
  %145 = vmatprep.subr.mxu0 0.0
  %146 = vmatpush1.msra.mxu0 0.0
  %147 = vmatprep.subr.mxu0 0.0
  %148 = vmatpush1.msra.mxu0 0.0
  %149 = vmatprep.subr.mxu0 0.0
  %150 = vmatpush1.msra.mxu0 0.0
  %151 = vmatprep.subr.mxu0 0.0
  %152 = vmatpush1.msra.mxu0 0.0
  %153 = vmatprep.subr.mxu0 0.0
  %154 = vmatpush1.msra.mxu0 0.0
  %155 = vmatprep.subr.mxu0 0.0
  %156 = vmatpush1.msra.mxu0 0.0
  %157 = vmatprep.subr.mxu0 0.0
  %158 = vmatpush1.msra.mxu0 0.0
  %159 = vmatprep.subr.mxu0 0.0
  %160 = vmatpush1.msra.mxu0 0.0
  %161 = vmatprep.subr.mxu0 0.0
  %162 = vmatpush1.msra.mxu0 0.0
  %163 = vmatprep.subr.mxu0 0.0
  %164 = vmatpush1.msra.mxu0 0.0
  %165 = vmatprep.subr.mxu0 0.0
  %166 = vmatpush1.msra.mxu0 0.0
  %167 = vmatprep.subr.mxu0 0.0
  %168 = vmatpush1.msra.mxu0 0.0
  %169 = vmatprep.subr.mxu0 0.0
  %170 = vmatpush1.msra.mxu0 0.0
  %171 = vmatprep.subr.mxu0 0.0
  %172 = vmatpush1.msra.mxu0 0.0
  %173 = vmatprep.subr.mxu0 0.0
  %174 = vmatpush1.msra.mxu0 0.0
  %175 = vmatprep.subr.mxu0 0.0
  %176 = vmatpush1.msra.mxu0 0.0
  %177 = vmatprep.subr.mxu0 0.0
  %178 = vmatpush1.msra.mxu0 0.0
  %179 = vmatprep.subr.mxu0 0.0
  %180 = vmatpush1.msra.mxu0 0.0
  %181 = vmatprep.mubr.f32.mxu0 0.0
  %182 = vmatmul.mubr.f32.gmra.mrb[0].mxu0 %v109
  %v183 = vpop.f32.mrb[0].mxu0
  %v184 = vadd.f32 %v106, %v183
  %v185 = vpop.f32.mrb[0].mxu0
  %186 = vmatprep.mubr.f32.mxu0 0.0
  %187 = vmatmul.mubr.f32.gmra.mrb[0].mxu0 %v112
  %v188 = vpop.f32.mrb[0].mxu0
  %v189 = vadd.f32 %v106, %v188
  %v190 = vpop.f32.mrb[0].mxu0
  %191 = vmatprep.mubr.f32.mxu0 0.0
  %192 = vmatmul.mubr.f32.gmra.mrb[0].mxu0 %v115
  %v193 = vpop.f32.mrb[0].mxu0
  %v194 = vadd.f32 %v106, %v193
  %v195 = vpop.f32.mrb[0].mxu0
  %196 = vdwg.mxu0
  %v197 = vxor.u32 %v184, 2147483648
  %v198 = vxor.u32 %v189, 2147483648
  %v199 = vxor.u32 %v194, 2147483648
  %v200 = vmul.f32 %v197, 1.442695
  %v201 = vpow.pop %v200
  %v202 = vmul.f32 %v198, 1.442695
  %v203 = vpow.pop %v202
  %v204 = vmul.f32 %v199, 1.442695
  %v205 = vpow.pop %v204
  %v206 = vadd.f32 %v201, 1.0
  %v207 = vadd.f32 %v203, 1.0
  %v208 = vadd.f32 %v205, 1.0
  %v209 = vrcp.pop %v206
  %v210 = vmul.f32 1.0, %v209
  %v211 = vrcp.pop %v207
  %v212 = vmul.f32 1.0, %v211
  %v213 = vrcp.pop %v208
  %v214 = vmul.f32 1.0, %v213
  %v215 = vmul.f32 %v184, %v210
  %v216 = vmul.f32 %v189, %v212
  %v217 = vmul.f32 %v194, %v214
  %v218 = vld [vmem:[%s5] sm:$0xff]
  %v219 = vld [vmem:[%s5 + $0x8] sm:$0xff]
  %v220 = vld [vmem:[%s5 + $0x10] sm:$0xff]
  %v221 = vld [vmem:[%s5 + $0x18] sm:$0xff]
  %v222 = vld [vmem:[%s5 + $0x20] sm:$0xff]
  %v223 = vld [vmem:[%s5 + $0x28] sm:$0xff]
  %v224 = vld [vmem:[%s5 + $0x30] sm:$0xff]
  %v225 = vld [vmem:[%s5 + $0x38] sm:$0xff]
  %v226 = vld [vmem:[%s5 + $0x40] sm:$0xff]
  %v227 = vld [vmem:[%s5 + $0x48] sm:$0xff]
  %v228 = vld [vmem:[%s5 + $0x50] sm:$0xff]
  %v229 = vld [vmem:[%s5 + $0x58] sm:$0xff]
  %v230 = vld [vmem:[%s5 + $0x60] sm:$0xff]
  %v231 = vld [vmem:[%s5 + $0x68] sm:$0xff]
  %v232 = vld [vmem:[%s5 + $0x70] sm:$0xff]
  %v233 = vld [vmem:[%s5 + $0x78] sm:$0xff]
  %v234 = vld [vmem:[%s6] sm:$0x1]
  %v236 = vlaneseq
  %v237 = vshrl.u32 %v236, 7
  %v238 = vsub.s32 0, %v237
  %v239 = vrot.slane %v234, %v238
  %241 = vmatprep.subr.mxu0 0.0
  %242 = vmatpush1.msra.mxu0 %v218
  %243 = vmatprep.subr.mxu0 0.0
  %244 = vmatpush1.msra.mxu0 %v219
  %245 = vmatprep.subr.mxu0 0.0
  %246 = vmatpush1.msra.mxu0 %v220
  %247 = vmatprep.subr.mxu0 0.0
  %248 = vmatpush1.msra.mxu0 %v221
  %249 = vmatprep.subr.mxu0 0.0
  %250 = vmatpush1.msra.mxu0 %v222
  %251 = vmatprep.subr.mxu0 0.0
  %252 = vmatpush1.msra.mxu0 %v223
  %253 = vmatprep.subr.mxu0 0.0
  %254 = vmatpush1.msra.mxu0 %v224
  %255 = vmatprep.subr.mxu0 0.0
  %256 = vmatpush1.msra.mxu0 %v225
  %257 = vmatprep.subr.mxu0 0.0
  %258 = vmatpush1.msra.mxu0 %v226
  %259 = vmatprep.subr.mxu0 0.0
  %260 = vmatpush1.msra.mxu0 %v227
  %261 = vmatprep.subr.mxu0 0.0
  %262 = vmatpush1.msra.mxu0 %v228
  %263 = vmatprep.subr.mxu0 0.0
  %264 = vmatpush1.msra.mxu0 %v229
  %265 = vmatprep.subr.mxu0 0.0
  %266 = vmatpush1.msra.mxu0 %v230
  %267 = vmatprep.subr.mxu0 0.0
  %268 = vmatpush1.msra.mxu0 %v231
  %269 = vmatprep.subr.mxu0 0.0
  %270 = vmatpush1.msra.mxu0 %v232
  %271 = vmatprep.subr.mxu0 0.0
  %272 = vmatpush1.msra.mxu0 %v233
  %273 = vmatprep.subr.mxu0 0.0
  %274 = vmatpush1.msra.mxu0 0.0
  %275 = vmatprep.subr.mxu0 0.0
  %276 = vmatpush1.msra.mxu0 0.0
  %277 = vmatprep.subr.mxu0 0.0
  %278 = vmatpush1.msra.mxu0 0.0
  %279 = vmatprep.subr.mxu0 0.0
  %280 = vmatpush1.msra.mxu0 0.0
  %281 = vmatprep.subr.mxu0 0.0
  %282 = vmatpush1.msra.mxu0 0.0
  %283 = vmatprep.subr.mxu0 0.0
  %284 = vmatpush1.msra.mxu0 0.0
  %285 = vmatprep.subr.mxu0 0.0
  %286 = vmatpush1.msra.mxu0 0.0
  %287 = vmatprep.subr.mxu0 0.0
  %288 = vmatpush1.msra.mxu0 0.0
  %289 = vmatprep.subr.mxu0 0.0
  %290 = vmatpush1.msra.mxu0 0.0
  %291 = vmatprep.subr.mxu0 0.0
  %292 = vmatpush1.msra.mxu0 0.0
  %293 = vmatprep.subr.mxu0 0.0
  %294 = vmatpush1.msra.mxu0 0.0
  %295 = vmatprep.subr.mxu0 0.0
  %296 = vmatpush1.msra.mxu0 0.0
  %297 = vmatprep.subr.mxu0 0.0
  %298 = vmatpush1.msra.mxu0 0.0
  %299 = vmatprep.subr.mxu0 0.0
  %300 = vmatpush1.msra.mxu0 0.0
  %301 = vmatprep.subr.mxu0 0.0
  %302 = vmatpush1.msra.mxu0 0.0
  %303 = vmatprep.subr.mxu0 0.0
  %304 = vmatpush1.msra.mxu0 0.0
  %305 = vmatprep.mubr.f32.mxu0 0.0
  %306 = vmatmul.mubr.f32.gmra.mrb[0].mxu0 %v215
  %v307 = vpop.f32.mrb[0].mxu0
  %v308 = vadd.f32 %v239, %v307
  %v309 = vpop.f32.mrb[0].mxu0
  %310 = vmatprep.mubr.f32.mxu0 0.0
  %311 = vmatmul.mubr.f32.gmra.mrb[0].mxu0 %v216
  %v312 = vpop.f32.mrb[0].mxu0
  %v313 = vadd.f32 %v239, %v312
  %v314 = vpop.f32.mrb[0].mxu0
  %315 = vmatprep.mubr.f32.mxu0 0.0
  %316 = vmatmul.mubr.f32.gmra.mrb[0].mxu0 %v217
  %v317 = vpop.f32.mrb[0].mxu0
  %v318 = vadd.f32 %v239, %v317
  %v319 = vpop.f32.mrb[0].mxu0
  %320 = vdwg.mxu0
  %v321 = vmul.f32 %v308, 0.5
  %v322 = vmul.f32 %v313, 0.5
  %v323 = vmul.f32 %v318, 0.5
  %v324 = vadd.f32 %v32, %v321
  %v325 = vadd.f32 %v33, %v322
  %v326 = vadd.f32 %v34, %v323
  %v327 = vld [vmem:[%s7] sm:$0x1]
  %v328 = vld [vmem:[%s8] sm:$0x1]
  %v329 = vsel %vm37, %v324, 0.0
  %330 = vadd.xlane.f32.xlu0 %v329
  %v331 = vpop.xlane.xlu0 %330
  %v332 = vsel %vm37, %v325, 0.0
  %333 = vadd.xlane.f32.xlu0 %v332
  %v334 = vpop.xlane.xlu0 %333
  %v335 = vsel %vm44, %v326, 0.0
  %336 = vadd.xlane.f32.xlu0 %v335
  %v337 = vpop.xlane.xlu0 %336
  %v338 = vmul.f32 %v331, %v48
  %v339 = vmul.f32 %v334, %v48
  %v340 = vmul.f32 %v337, %v48
  %v341 = vsub.f32 %v324, %v338
  %v342 = vsub.f32 %v325, %v339
  %v343 = vsub.f32 %v326, %v340
  %v344 = vmul.f32 %v341, %v341
  %v345 = vmul.f32 %v342, %v342
  %v346 = vmul.f32 %v343, %v343
  %v347 = vsel %vm37, %v344, 0.0
  %348 = vadd.xlane.f32.xlu0 %v347
  %v349 = vpop.xlane.xlu0 %348
  %v350 = vsel %vm37, %v345, 0.0
  %351 = vadd.xlane.f32.xlu0 %v350
  %v352 = vpop.xlane.xlu0 %351
  %v353 = vsel %vm44, %v346, 0.0
  %354 = vadd.xlane.f32.xlu0 %v353
  %v355 = vpop.xlane.xlu0 %354
  %v356 = vmul.f32 %v349, %v48
  %v357 = vmul.f32 %v352, %v48
  %v358 = vmul.f32 %v355, %v48
  %v359 = vadd.f32 %v356, 1e-05
  %v360 = vadd.f32 %v357, 1e-05
  %v361 = vadd.f32 %v358, 1e-05
  %v362 = vrsqrt.pop %v359
  %v363 = vrsqrt.pop %v360
  %v364 = vrsqrt.pop %v361
  %v365 = vmul.f32 %v341, %v362
  %v366 = vmul.f32 %v342, %v363
  %v367 = vmul.f32 %v343, %v364
  %v369 = vlaneseq
  %v370 = vshrl.u32 %v369, 7
  %v371 = vsub.s32 0, %v370
  %v372 = vrot.slane %v327, %v371
  %v374 = vmul.f32 %v365, %v372
  %v375 = vmul.f32 %v366, %v372
  %v376 = vmul.f32 %v367, %v372
  %v378 = vlaneseq
  %v379 = vshrl.u32 %v378, 7
  %v380 = vsub.s32 0, %v379
  %v381 = vrot.slane %v328, %v380
  %v383 = vadd.f32 %v374, %v381
  %v384 = vadd.f32 %v375, %v381
  %v385 = vadd.f32 %v376, %v381
  %386 = vst.msk [vmem:[%s9] sm:$0xff] %vm37, %v383
  %387 = vst.msk [vmem:[%s9 + $0x8] sm:$0xff] %vm37, %v384
  %388 = vst.msk [vmem:[%s9 + $0x10] sm:$0x3] %vm44, %v385
  // Predicated region
  $region38: #{xlsr_conformer_forward.14} parent=0 // pred_check
    _
  $region39: #{xlsr_conformer_forward.14} parent=0 // pred_check_branch
    %390 = sbr.rel (0) target = $region41
  $region40: #{xlsr_conformer_forward.14} parent=0 // pred_region
    _
  $region41: #{xlsr_conformer_forward.14} parent=0 // pred_fallthru
    _
  // Predicated region
  $region42: #{xlsr_conformer_forward.14} parent=0 // pred_check
    _
  $region43: #{xlsr_conformer_forward.14} parent=0 // pred_check_branch
    %392 = sbr.rel (0) target = $region45
  $region44: #{xlsr_conformer_forward.14} parent=0 // pred_region
    _
  $region45: #{xlsr_conformer_forward.14} parent=0 // pred_fallthru
    _

// kernel: xlsr_conformer_forward.13
$region0: #{xlsr_conformer_forward.13}
  #allocation0 [shape = 'u32[]', space=smem, size = 0x4, offset = 0x4, fixed_abs, tag = 'smem constant byte address 0x4 - core index']
  #allocation1 [shape = 'u32[144,128]{1,0:T(1,128)}', space=vmem, size = 0x12000, scoped, tag = 'internal scratch']
  #allocation2 [shape = 'f32[15,64]{1,0:T(8,128)}', space=vmem, size = 0x2000, scoped, tag = 'scratch operand']
  %s0 = inlined_call_operand.vmem [shape: f32[2,9,32], index: 0, kind: input, shape index: {}]
  %s1 = inlined_call_operand.vmem [shape: f32[1,32], index: 1, kind: input, shape index: {}]
  %s2 = inlined_call_operand.vmem [shape: f32[1,32], index: 2, kind: input, shape index: {}]
  %s3 = inlined_call_operand.vmem [shape: f32[32,64], index: 3, kind: input, shape index: {}]
  %s4 = inlined_call_operand.vmem [shape: f32[1,64], index: 4, kind: input, shape index: {}]
  %s5 = inlined_call_operand.vmem [shape: f32[32,64], index: 5, kind: input, shape index: {}]
  %s6 = inlined_call_operand.vmem [shape: f32[1,64], index: 6, kind: input, shape index: {}]
  %s7 = inlined_call_operand.vmem [shape: f32[7,64], index: 7, kind: input, shape index: {}]
  %s8 = inlined_call_operand.vmem [shape: f32[1,64], index: 8, kind: input, shape index: {}]
  %s9 = inlined_call_operand.vmem [shape: f32[1,64], index: 9, kind: input, shape index: {}]
  %s10 = inlined_call_operand.vmem [shape: f32[1,64], index: 10, kind: input, shape index: {}]
  %s11 = inlined_call_operand.vmem [shape: f32[64,32], index: 11, kind: input, shape index: {}]
  %s12 = inlined_call_operand.vmem [shape: f32[1,32], index: 12, kind: input, shape index: {}]
  %s13 = inlined_call_operand.vmem [shape: f32[2,9,32], index: 13, kind: output, shape index: {}]
  %s14 = sld [smem:[#allocation0]]
  $region85: #{xlsr_conformer_forward.13} parent=0
    _
  %s16 = ssub.s32 1, %s14
  %s17 = scalar_select 0, %s16, %s14
  loop: start=0, step=1, limit=4
  $region2: #{xlsr_conformer_forward.13} parent=0 // loop_pre_header
    _
  $region3: #{xlsr_conformer_forward.13} parent=0 // loop_header
    %s19 = sphi 0, %s23
    %p20 = scmp.ge.s32.totalorder %s19, 4
    %s29 = sphi 0, %s31
    %s32 = sphi 0, %s29
    %s33 = sphi 0, %s32
    %s49 = sphi 0, %s33
    %s53 = sphi 0, %s53
    %s55 = sphi 0, %s53
    %s56 = sphi 0, %s55
    %s70 = sphi 0, %s56
    %s74 = sphi 0, %s74
    %s76 = sphi 0, %s74
    %s77 = sphi 0, %s76
    %s91 = sphi 0, %s77
    %s95 = sphi 0, %s95
    %s97 = sphi 0, %s95
    %s98 = sphi 0, %s97
    %s112 = sphi 0, %s98
    %s116 = sphi 0, %s116
    %s118 = sphi 0, %s116
    %s119 = sphi 0, %s118
    %s133 = sphi 0, %s119
    %s137 = sphi 0, %s137
    %s139 = sphi 0, %s137
    %s140 = sphi 0, %s139
    %s154 = sphi 0, %s140
    %s158 = sphi 0, %s158
    %s160 = sphi 0, %s158
    %s161 = sphi 0, %s160
    %s175 = sphi 0, %s161
    %s179 = sphi 0, %s179
    %s181 = sphi 0, %s179
    %s182 = sphi 0, %s181
    %s196 = sphi 0, %s182
    %s200 = sphi 0, %s200
    %s202 = sphi 0, %s200
    %s203 = sphi 0, %s202
    %s217 = sphi 0, %s203
    %s221 = sphi 0, %s221
    %s223 = sphi 0, %s221
    %s224 = sphi 0, %s223
    %s238 = sphi 0, %s224
    %s242 = sphi 0, %s242
    %s244 = sphi 0, %s242
    %s245 = sphi 0, %s244
    %s259 = sphi 0, %s245
    %s263 = sphi 0, %s263
    %s265 = sphi 0, %s263
    %s266 = sphi 0, %s265
    %s280 = sphi 0, %s266
    %s284 = sphi 0, %s284
    %s286 = sphi 0, %s284
    %s287 = sphi 0, %s286
    %s301 = sphi 0, %s287
    %s307 = sphi 0, %s309
    %s310 = sphi 0, %s307
    %s311 = sphi 0, %s310
    %s327 = sphi 0, %s311
  $region4: #{xlsr_conformer_forward.13} parent=0 // loop_header_branch
    %22 = sbr.rel (%p20) target = $region8
  $region5: #{xlsr_conformer_forward.13} parent=0 // loop_body
    %s24 = ssub.s32 %s19, 1
    %s25 = ssub.s32 %s19, 2
    %s26 = sadd.s32 %s19, 1
    %s27 = ssub.s32 %s19, %s26
    %p28 = scmp.eq.s32.totalorder %s27, 0
    %s30 = sadd.s32 %s29, 1
    %s31 = scalar_select %p28, %s29, %s30
    %p34 = pneg %p28
    %p35 = scmp.eq.s32.totalorder %s19, 1
    %p36 = por %p34, %p35
    %p37 = scmp.ne.s32.totalorder %s29, %s32
    %p38 = scmp.eq.s32.totalorder %s19, 0
    %p39 = por %p37, %p38
    %p40 = scmp.ne.s32.totalorder %s29, %s32
    %p41 = scmp.eq.s32.totalorder %s24, 1
    %p42 = por %p40, %p41
    %p43 = scmp.ne.s32.totalorder %s32, %s33
    %p44 = scmp.eq.s32.totalorder %s24, 0
    %p45 = por %p43, %p44
    %p46 = scmp.ne.s32.totalorder %s32, %s33
    %p47 = scmp.eq.s32.totalorder %s25, 1
    %p48 = por %p46, %p47
    %p50 = scmp.ne.s32.totalorder %s33, %s49
    %p51 = scmp.eq.s32.totalorder %s25, 0
    %p52 = por %p50, %p51
    %s54 = sadd.s32 %s53, 1
    %p57 = scmp.eq.s32.totalorder %s19, 1
    %p58 = scmp.ne.s32.totalorder %s53, %s55
    %p59 = scmp.eq.s32.totalorder %s19, 0
    %p60 = por %p58, %p59
    %p61 = scmp.ne.s32.totalorder %s53, %s55
    %p62 = scmp.eq.s32.totalorder %s24, 1
    %p63 = por %p61, %p62
    %p64 = scmp.ne.s32.totalorder %s55, %s56
    %p65 = scmp.eq.s32.totalorder %s24, 0
    %p66 = por %p64, %p65
    %p67 = scmp.ne.s32.totalorder %s55, %s56
    %p68 = scmp.eq.s32.totalorder %s25, 1
    %p69 = por %p67, %p68
    %p71 = scmp.ne.s32.totalorder %s56, %s70
    %p72 = scmp.eq.s32.totalorder %s25, 0
    %p73 = por %p71, %p72
    %s75 = sadd.s32 %s74, 1
    %p78 = scmp.eq.s32.totalorder %s19, 1
    %p79 = scmp.ne.s32.totalorder %s74, %s76
    %p80 = scmp.eq.s32.totalorder %s19, 0
    %p81 = por %p79, %p80
    %p82 = scmp.ne.s32.totalorder %s74, %s76
    %p83 = scmp.eq.s32.totalorder %s24, 1
    %p84 = por %p82, %p83
    %p85 = scmp.ne.s32.totalorder %s76, %s77
    %p86 = scmp.eq.s32.totalorder %s24, 0
    %p87 = por %p85, %p86
    %p88 = scmp.ne.s32.totalorder %s76, %s77
    %p89 = scmp.eq.s32.totalorder %s25, 1
    %p90 = por %p88, %p89
    %p92 = scmp.ne.s32.totalorder %s77, %s91
    %p93 = scmp.eq.s32.totalorder %s25, 0
    %p94 = por %p92, %p93
    %s96 = sadd.s32 %s95, 1
    %p99 = scmp.eq.s32.totalorder %s19, 1
    %p100 = scmp.ne.s32.totalorder %s95, %s97
    %p101 = scmp.eq.s32.totalorder %s19, 0
    %p102 = por %p100, %p101
    %p103 = scmp.ne.s32.totalorder %s95, %s97
    %p104 = scmp.eq.s32.totalorder %s24, 1
    %p105 = por %p103, %p104
    %p106 = scmp.ne.s32.totalorder %s97, %s98
    %p107 = scmp.eq.s32.totalorder %s24, 0
    %p108 = por %p106, %p107
    %p109 = scmp.ne.s32.totalorder %s97, %s98
    %p110 = scmp.eq.s32.totalorder %s25, 1
    %p111 = por %p109, %p110
    %p113 = scmp.ne.s32.totalorder %s98, %s112
    %p114 = scmp.eq.s32.totalorder %s25, 0
    %p115 = por %p113, %p114
    %s117 = sadd.s32 %s116, 1
    %p120 = scmp.eq.s32.totalorder %s19, 1
    %p121 = scmp.ne.s32.totalorder %s116, %s118
    %p122 = scmp.eq.s32.totalorder %s19, 0
    %p123 = por %p121, %p122
    %p124 = scmp.ne.s32.totalorder %s116, %s118
    %p125 = scmp.eq.s32.totalorder %s24, 1
    %p126 = por %p124, %p125
    %p127 = scmp.ne.s32.totalorder %s118, %s119
    %p128 = scmp.eq.s32.totalorder %s24, 0
    %p129 = por %p127, %p128
    %p130 = scmp.ne.s32.totalorder %s118, %s119
    %p131 = scmp.eq.s32.totalorder %s25, 1
    %p132 = por %p130, %p131
    %p134 = scmp.ne.s32.totalorder %s119, %s133
    %p135 = scmp.eq.s32.totalorder %s25, 0
    %p136 = por %p134, %p135
    %s138 = sadd.s32 %s137, 1
    %p141 = scmp.eq.s32.totalorder %s19, 1
    %p142 = scmp.ne.s32.totalorder %s137, %s139
    %p143 = scmp.eq.s32.totalorder %s19, 0
    %p144 = por %p142, %p143
    %p145 = scmp.ne.s32.totalorder %s137, %s139
    %p146 = scmp.eq.s32.totalorder %s24, 1
    %p147 = por %p145, %p146
    %p148 = scmp.ne.s32.totalorder %s139, %s140
    %p149 = scmp.eq.s32.totalorder %s24, 0
    %p150 = por %p148, %p149
    %p151 = scmp.ne.s32.totalorder %s139, %s140
    %p152 = scmp.eq.s32.totalorder %s25, 1
    %p153 = por %p151, %p152
    %p155 = scmp.ne.s32.totalorder %s140, %s154
    %p156 = scmp.eq.s32.totalorder %s25, 0
    %p157 = por %p155, %p156
    %s159 = sadd.s32 %s158, 1
    %p162 = scmp.eq.s32.totalorder %s19, 1
    %p163 = scmp.ne.s32.totalorder %s158, %s160
    %p164 = scmp.eq.s32.totalorder %s19, 0
    %p165 = por %p163, %p164
    %p166 = scmp.ne.s32.totalorder %s158, %s160
    %p167 = scmp.eq.s32.totalorder %s24, 1
    %p168 = por %p166, %p167
    %p169 = scmp.ne.s32.totalorder %s160, %s161
    %p170 = scmp.eq.s32.totalorder %s24, 0
    %p171 = por %p169, %p170
    %p172 = scmp.ne.s32.totalorder %s160, %s161
    %p173 = scmp.eq.s32.totalorder %s25, 1
    %p174 = por %p172, %p173
    %p176 = scmp.ne.s32.totalorder %s161, %s175
    %p177 = scmp.eq.s32.totalorder %s25, 0
    %p178 = por %p176, %p177
    %s180 = sadd.s32 %s179, 1
    %p183 = scmp.eq.s32.totalorder %s19, 1
    %p184 = scmp.ne.s32.totalorder %s179, %s181
    %p185 = scmp.eq.s32.totalorder %s19, 0
    %p186 = por %p184, %p185
    %p187 = scmp.ne.s32.totalorder %s179, %s181
    %p188 = scmp.eq.s32.totalorder %s24, 1
    %p189 = por %p187, %p188
    %p190 = scmp.ne.s32.totalorder %s181, %s182
    %p191 = scmp.eq.s32.totalorder %s24, 0
    %p192 = por %p190, %p191
    %p193 = scmp.ne.s32.totalorder %s181, %s182
    %p194 = scmp.eq.s32.totalorder %s25, 1
    %p195 = por %p193, %p194
    %p197 = scmp.ne.s32.totalorder %s182, %s196
    %p198 = scmp.eq.s32.totalorder %s25, 0
    %p199 = por %p197, %p198
    %s201 = sadd.s32 %s200, 1
    %p204 = scmp.eq.s32.totalorder %s19, 1
    %p205 = scmp.ne.s32.totalorder %s200, %s202
    %p206 = scmp.eq.s32.totalorder %s19, 0
    %p207 = por %p205, %p206
    %p208 = scmp.ne.s32.totalorder %s200, %s202
    %p209 = scmp.eq.s32.totalorder %s24, 1
    %p210 = por %p208, %p209
    %p211 = scmp.ne.s32.totalorder %s202, %s203
    %p212 = scmp.eq.s32.totalorder %s24, 0
    %p213 = por %p211, %p212
    %p214 = scmp.ne.s32.totalorder %s202, %s203
    %p215 = scmp.eq.s32.totalorder %s25, 1
    %p216 = por %p214, %p215
    %p218 = scmp.ne.s32.totalorder %s203, %s217
    %p219 = scmp.eq.s32.totalorder %s25, 0
    %p220 = por %p218, %p219
    %s222 = sadd.s32 %s221, 1
    %p225 = scmp.eq.s32.totalorder %s19, 1
    %p226 = scmp.ne.s32.totalorder %s221, %s223
    %p227 = scmp.eq.s32.totalorder %s19, 0
    %p228 = por %p226, %p227
    %p229 = scmp.ne.s32.totalorder %s221, %s223
    %p230 = scmp.eq.s32.totalorder %s24, 1
    %p231 = por %p229, %p230
    %p232 = scmp.ne.s32.totalorder %s223, %s224
    %p233 = scmp.eq.s32.totalorder %s24, 0
    %p234 = por %p232, %p233
    %p235 = scmp.ne.s32.totalorder %s223, %s224
    %p236 = scmp.eq.s32.totalorder %s25, 1
    %p237 = por %p235, %p236
    %p239 = scmp.ne.s32.totalorder %s224, %s238
    %p240 = scmp.eq.s32.totalorder %s25, 0
    %p241 = por %p239, %p240
    %s243 = sadd.s32 %s242, 1
    %p246 = scmp.eq.s32.totalorder %s19, 1
    %p247 = scmp.ne.s32.totalorder %s242, %s244
    %p248 = scmp.eq.s32.totalorder %s19, 0
    %p249 = por %p247, %p248
    %p250 = scmp.ne.s32.totalorder %s242, %s244
    %p251 = scmp.eq.s32.totalorder %s24, 1
    %p252 = por %p250, %p251
    %p253 = scmp.ne.s32.totalorder %s244, %s245
    %p254 = scmp.eq.s32.totalorder %s24, 0
    %p255 = por %p253, %p254
    %p256 = scmp.ne.s32.totalorder %s244, %s245
    %p257 = scmp.eq.s32.totalorder %s25, 1
    %p258 = por %p256, %p257
    %p260 = scmp.ne.s32.totalorder %s245, %s259
    %p261 = scmp.eq.s32.totalorder %s25, 0
    %p262 = por %p260, %p261
    %s264 = sadd.s32 %s263, 1
    %p267 = scmp.eq.s32.totalorder %s19, 1
    %p268 = scmp.ne.s32.totalorder %s263, %s265
    %p269 = scmp.eq.s32.totalorder %s19, 0
    %p270 = por %p268, %p269
    %p271 = scmp.ne.s32.totalorder %s263, %s265
    %p272 = scmp.eq.s32.totalorder %s24, 1
    %p273 = por %p271, %p272
    %p274 = scmp.ne.s32.totalorder %s265, %s266
    %p275 = scmp.eq.s32.totalorder %s24, 0
    %p276 = por %p274, %p275
    %p277 = scmp.ne.s32.totalorder %s265, %s266
    %p278 = scmp.eq.s32.totalorder %s25, 1
    %p279 = por %p277, %p278
    %p281 = scmp.ne.s32.totalorder %s266, %s280
    %p282 = scmp.eq.s32.totalorder %s25, 0
    %p283 = por %p281, %p282
    %s285 = sadd.s32 %s284, 1
    %p288 = scmp.eq.s32.totalorder %s19, 1
    %p289 = scmp.ne.s32.totalorder %s284, %s286
    %p290 = scmp.eq.s32.totalorder %s19, 0
    %p291 = por %p289, %p290
    %p292 = scmp.ne.s32.totalorder %s284, %s286
    %p293 = scmp.eq.s32.totalorder %s24, 1
    %p294 = por %p292, %p293
    %p295 = scmp.ne.s32.totalorder %s286, %s287
    %p296 = scmp.eq.s32.totalorder %s24, 0
    %p297 = por %p295, %p296
    %p298 = scmp.ne.s32.totalorder %s286, %s287
    %p299 = scmp.eq.s32.totalorder %s25, 1
    %p300 = por %p298, %p299
    %p302 = scmp.ne.s32.totalorder %s287, %s301
    %p303 = scmp.eq.s32.totalorder %s25, 0
    %p304 = por %p302, %p303
    %s305 = ssub.s32 %s19, %s26
    %p306 = scmp.eq.s32.totalorder %s305, 0
    %s308 = sadd.s32 %s307, 1
    %s309 = scalar_select %p306, %s307, %s308
    %p312 = pneg %p306
    %p313 = scmp.eq.s32.totalorder %s19, 1
    %p314 = por %p312, %p313
    %p315 = scmp.ne.s32.totalorder %s307, %s310
    %p316 = scmp.eq.s32.totalorder %s19, 0
    %p317 = por %p315, %p316
    %p318 = scmp.ne.s32.totalorder %s307, %s310
    %p319 = scmp.eq.s32.totalorder %s24, 1
    %p320 = por %p318, %p319
    %p321 = scmp.ne.s32.totalorder %s310, %s311
    %p322 = scmp.eq.s32.totalorder %s24, 0
    %p323 = por %p321, %p322
    %p324 = scmp.ne.s32.totalorder %s310, %s311
    %p325 = scmp.eq.s32.totalorder %s25, 1
    %p326 = por %p324, %p325
    %p328 = scmp.ne.s32.totalorder %s311, %s327
    %p329 = scmp.eq.s32.totalorder %s25, 0
    %p330 = por %p328, %p329
    %p331 = scmp.le.s32.totalorder 1, %s19
    %p332 = scmp.lt.s32.totalorder %s19, 3
    %p333 = pnand %p331, %p332
    %p334 = pneg %p333
    // Predicated region
    $region9: #{xlsr_conformer_forward.13} parent=5 // pred_check
      _
    $region10: #{xlsr_conformer_forward.13} parent=5 // pred_check_branch
      %336 = sbr.rel (%p333) target = $region12
    $region11: #{xlsr_conformer_forward.13} parent=5 // pred_region
      %s337 = ssub.s32 %s19, 1
      // Predicated region
      $region13: #{xlsr_conformer_forward.13} parent=11 // pred_check
        %p338 = pneg %p66
      $region14: #{xlsr_conformer_forward.13} parent=11 // pred_check_branch
        %340 = sbr.rel (%p338) target = $region16
      $region15: #{xlsr_conformer_forward.13} parent=11 // pred_region
        _
      $region16: #{xlsr_conformer_forward.13} parent=11 // pred_fallthru
        _
      // Predicated region
      $region17: #{xlsr_conformer_forward.13} parent=11 // pred_check
        %p341 = pneg %p87
      $region18: #{xlsr_conformer_forward.13} parent=11 // pred_check_branch
        %343 = sbr.rel (%p341) target = $region20
      $region19: #{xlsr_conformer_forward.13} parent=11 // pred_region
        _
      $region20: #{xlsr_conformer_forward.13} parent=11 // pred_fallthru
        _
      // Predicated region
      $region21: #{xlsr_conformer_forward.13} parent=11 // pred_check
        %p344 = pneg %p108
      $region22: #{xlsr_conformer_forward.13} parent=11 // pred_check_branch
        %346 = sbr.rel (%p344) target = $region24
      $region23: #{xlsr_conformer_forward.13} parent=11 // pred_region
        _
      $region24: #{xlsr_conformer_forward.13} parent=11 // pred_fallthru
        _
      // Predicated region
      $region25: #{xlsr_conformer_forward.13} parent=11 // pred_check
        %p347 = pneg %p129
      $region26: #{xlsr_conformer_forward.13} parent=11 // pred_check_branch
        %349 = sbr.rel (%p347) target = $region28
      $region27: #{xlsr_conformer_forward.13} parent=11 // pred_region
        _
      $region28: #{xlsr_conformer_forward.13} parent=11 // pred_fallthru
        _
      // Predicated region
      $region29: #{xlsr_conformer_forward.13} parent=11 // pred_check
        %p350 = pneg %p150
      $region30: #{xlsr_conformer_forward.13} parent=11 // pred_check_branch
        %352 = sbr.rel (%p350) target = $region32
      $region31: #{xlsr_conformer_forward.13} parent=11 // pred_region
        _
      $region32: #{xlsr_conformer_forward.13} parent=11 // pred_fallthru
        _
      // Predicated region
      $region33: #{xlsr_conformer_forward.13} parent=11 // pred_check
        %p353 = pneg %p171
      $region34: #{xlsr_conformer_forward.13} parent=11 // pred_check_branch
        %355 = sbr.rel (%p353) target = $region36
      $region35: #{xlsr_conformer_forward.13} parent=11 // pred_region
        _
      $region36: #{xlsr_conformer_forward.13} parent=11 // pred_fallthru
        _
      // Predicated region
      $region37: #{xlsr_conformer_forward.13} parent=11 // pred_check
        %p356 = pneg %p192
      $region38: #{xlsr_conformer_forward.13} parent=11 // pred_check_branch
        %358 = sbr.rel (%p356) target = $region40
      $region39: #{xlsr_conformer_forward.13} parent=11 // pred_region
        _
      $region40: #{xlsr_conformer_forward.13} parent=11 // pred_fallthru
        _
      // Predicated region
      $region41: #{xlsr_conformer_forward.13} parent=11 // pred_check
        %p359 = pneg %p213
      $region42: #{xlsr_conformer_forward.13} parent=11 // pred_check_branch
        %361 = sbr.rel (%p359) target = $region44
      $region43: #{xlsr_conformer_forward.13} parent=11 // pred_region
        _
      $region44: #{xlsr_conformer_forward.13} parent=11 // pred_fallthru
        _
      // Predicated region
      $region45: #{xlsr_conformer_forward.13} parent=11 // pred_check
        %p362 = pneg %p234
      $region46: #{xlsr_conformer_forward.13} parent=11 // pred_check_branch
        %364 = sbr.rel (%p362) target = $region48
      $region47: #{xlsr_conformer_forward.13} parent=11 // pred_region
        _
      $region48: #{xlsr_conformer_forward.13} parent=11 // pred_fallthru
        _
      // Predicated region
      $region49: #{xlsr_conformer_forward.13} parent=11 // pred_check
        %p365 = pneg %p255
      $region50: #{xlsr_conformer_forward.13} parent=11 // pred_check_branch
        %367 = sbr.rel (%p365) target = $region52
      $region51: #{xlsr_conformer_forward.13} parent=11 // pred_region
        _
      $region52: #{xlsr_conformer_forward.13} parent=11 // pred_fallthru
        _
      // Predicated region
      $region53: #{xlsr_conformer_forward.13} parent=11 // pred_check
        %p368 = pneg %p276
      $region54: #{xlsr_conformer_forward.13} parent=11 // pred_check_branch
        %370 = sbr.rel (%p368) target = $region56
      $region55: #{xlsr_conformer_forward.13} parent=11 // pred_region
        _
      $region56: #{xlsr_conformer_forward.13} parent=11 // pred_fallthru
        _
      // Predicated region
      $region57: #{xlsr_conformer_forward.13} parent=11 // pred_check
        %p371 = pneg %p297
      $region58: #{xlsr_conformer_forward.13} parent=11 // pred_check_branch
        %373 = sbr.rel (%p371) target = $region60
      $region59: #{xlsr_conformer_forward.13} parent=11 // pred_region
        _
      $region60: #{xlsr_conformer_forward.13} parent=11 // pred_fallthru
        _
    $region12: #{xlsr_conformer_forward.13} parent=5 // pred_fallthru
      _
    %p374 = scmp.lt.s32.totalorder %s19, 2
    // Predicated region
    $region61: #{xlsr_conformer_forward.13} parent=5 // pred_check
      %p375 = pneg %p374
    $region62: #{xlsr_conformer_forward.13} parent=5 // pred_check_branch
      %377 = sbr.rel (%p375) target = $region64
    $region63: #{xlsr_conformer_forward.13} parent=5 // pred_region
      // Predicated region
      $region65: #{xlsr_conformer_forward.13} parent=63 // pred_check
        %p378 = pneg %p39
      $region66: #{xlsr_conformer_forward.13} parent=63 // pred_check_branch
        %380 = sbr.rel (%p378) target = $region68
      $region67: #{xlsr_conformer_forward.13} parent=63 // pred_region
        %p381 = scmp.lt.s32.totalorder %s19, 1
        %s382 = scalar_select %p381, %s19, 1
        %s383 = smul.addr %s382, 2
        %s384 = smul.addr %s383, 8
        %s385 = scalar_lea.vmem %s0, %s384
      $region68: #{xlsr_conformer_forward.13} parent=63 // pred_fallthru
        _
    $region64: #{xlsr_conformer_forward.13} parent=5 // pred_fallthru
      _
    %p386 = scmp.le.s32.totalorder 1, %s19
    %p387 = scmp.lt.s32.totalorder %s19, 3
    %p388 = pnand %p386, %p387
    %p389 = pneg %p388
    // Predicated region
    $region69: #{xlsr_conformer_forward.13} parent=5 // pred_check
      _
    $region70: #{xlsr_conformer_forward.13} parent=5 // pred_check_branch
      %391 = sbr.rel (%p388) target = $region72
    $region71: #{xlsr_conformer_forward.13} parent=5 // pred_region
      %s392 = ssub.s32 %s19, 1
      %p393 = scmp.lt.s32.totalorder %s24, 1
      %s394 = scalar_select %p393, %s24, 1
      %s395 = smul.addr %s394, 2
      %s396 = smul.addr %s395, 8
      %s397 = scalar_lea.vmem %s0, %s396
      %p398 = pneg %p45
      %p399 = pneg %p42
      %p400 = pneg %p66
      %p401 = pneg %p63
      %p402 = pneg %p87
      %p403 = pneg %p84
      %p404 = pneg %p108
      %p405 = pneg %p105
      %p406 = pneg %p129
      %p407 = pneg %p126
      %p408 = pneg %p150
      %p409 = pneg %p147
      %p410 = pneg %p171
      %p411 = pneg %p168
      %p412 = pneg %p192
      %p413 = pneg %p189
      %p414 = pneg %p213
      %p415 = pneg %p210
      %p416 = pneg %p234
      %p417 = pneg %p231
      %p418 = pneg %p255
      %p419 = pneg %p252
      %p420 = pneg %p276
      %p421 = pneg %p273
      %p422 = pneg %p297
      %p423 = pneg %p294
      %p424 = pneg %p323
      %p425 = pneg %p320
      %p426 = scmp.lt.s32.totalorder %s24, 1
      %s427 = scalar_select %p426, %s24, 1
      %s428 = smul.addr %s427, 2
      %s429 = smul.addr %s428, 8
      %s430 = scalar_lea.vmem %s13, %s429
      %p431 = scmp.lt.s32.totalorder %s24, 1
      %s432 = scalar_select %p431, %s24, 1
      %s433 = smul.addr %s432, 2
      %s434 = smul.addr %s433, 8
      %s435 = scalar_lea.vmem %s0, %s434
      %p436 = scmp.lt.s32.totalorder %s24, 1
      %s437 = scalar_select %p436, %s24, 1
      %s438 = smul.addr %s437, 2
      %s439 = smul.addr %s438, 8
      %s440 = scalar_lea.vmem %s13, %s439
      %v441 = vld [vmem:[%s435] sm:$0xff]
      %v442 = vld [vmem:[%s435 + $0x8] sm:$0x1]
      %v443 = vld [vmem:[%s1] sm:$0x1]
      %v444 = vld [vmem:[%s2] sm:$0x1]
      %vm445 = vcmask 261120
      %v446 = vsel %vm445, %v441, 0.0
      %447 = vadd.xlane.f32.xlu0 %v446
      %v448 = vpop.xlane.xlu0 %447
      %vm449 = vcmask 253952
      %v450 = vsel %vm449, %v442, 0.0
      %451 = vadd.xlane.f32.xlu0 %v450
      %v452 = vpop.xlane.xlu0 %451
      %v453 = vrcp.pop 32.0
      %v454 = vmul.f32 %v448, %v453
      %v455 = vmul.f32 %v452, %v453
      %v456 = vsub.f32 %v441, %v454
      %v457 = vsub.f32 %v442, %v455
      %v458 = vmul.f32 %v456, %v456
      %v459 = vmul.f32 %v457, %v457
      %v460 = vsel %vm445, %v458, 0.0
      %461 = vadd.xlane.f32.xlu0 %v460
      %v462 = vpop.xlane.xlu0 %461
      %v463 = vsel %vm449, %v459, 0.0
      %464 = vadd.xlane.f32.xlu0 %v463
      %v465 = vpop.xlane.xlu0 %464
      %v466 = vmul.f32 %v462, %v453
      %v467 = vmul.f32 %v465, %v453
      %v468 = vadd.f32 %v466, 1e-05
      %v469 = vadd.f32 %v467, 1e-05
      %v470 = vrsqrt.pop %v468
      %v471 = vrsqrt.pop %v469
      %v472 = vmul.f32 %v456, %v470
      %v473 = vmul.f32 %v457, %v471
      %v475 = vlaneseq
      %v476 = vshrl.u32 %v475, 7
      %v477 = vsub.s32 0, %v476
      %v478 = vrot.slane %v443, %v477
      %v480 = vmul.f32 %v472, %v478
      %v481 = vmul.f32 %v473, %v478
      %v483 = vlaneseq
      %v484 = vshrl.u32 %v483, 7
      %v485 = vsub.s32 0, %v484
      %v486 = vrot.slane %v444, %v485
      %v488 = vadd.f32 %v480, %v486
      %v489 = vadd.f32 %v481, %v486
      %v490 = vld [vmem:[%s3] sm:$0xff]
      %v491 = vld [vmem:[%s3 + $0x8] sm:$0xff]
      %v492 = vld [vmem:[%s3 + $0x10] sm:$0xff]
      %v493 = vld [vmem:[%s3 + $0x18] sm:$0xff]
      %v494 = vld [vmem:[%s4] sm:$0x1]
      %v496 = vlaneseq
      %v497 = vshrl.u32 %v496, 7
      %v498 = vsub.s32 0, %v497
      %v499 = vrot.slane %v494, %v498
      %v502 = vsel %vm445, %v488, 0
      %v505 = vsel %vm445, %v489, 0
      %507 = vmatprep.subr.mxu0 0.0
      %508 = vmatpush1.msra.mxu0 %v490
      %509 = vmatprep.subr.mxu0 0.0
      %510 = vmatpush1.msra.mxu0 %v491
      %511 = vmatprep.subr.mxu0 0.0
      %512 = vmatpush1.msra.mxu0 %v492
      %513 = vmatprep.subr.mxu0 0.0
      %514 = vmatpush1.msra.mxu0 %v493
      %515 = vmatprep.subr.mxu0 0.0
      %516 = vmatpush1.msra.mxu0 0.0
      %517 = vmatprep.subr.mxu0 0.0
      %518 = vmatpush1.msra.mxu0 0.0
      %519 = vmatprep.subr.mxu0 0.0
      %520 = vmatpush1.msra.mxu0 0.0
      %521 = vmatprep.subr.mxu0 0.0
      %522 = vmatpush1.msra.mxu0 0.0
      %523 = vmatprep.subr.mxu0 0.0
      %524 = vmatpush1.msra.mxu0 0.0
      %525 = vmatprep.subr.mxu0 0.0
      %526 = vmatpush1.msra.mxu0 0.0
      %527 = vmatprep.subr.mxu0 0.0
      %528 = vmatpush1.msra.mxu0 0.0
      %529 = vmatprep.subr.mxu0 0.0
      %530 = vmatpush1.msra.mxu0 0.0
      %531 = vmatprep.subr.mxu0 0.0
      %532 = vmatpush1.msra.mxu0 0.0
      %533 = vmatprep.subr.mxu0 0.0
      %534 = vmatpush1.msra.mxu0 0.0
      %535 = vmatprep.subr.mxu0 0.0
      %536 = vmatpush1.msra.mxu0 0.0
      %537 = vmatprep.subr.mxu0 0.0
      %538 = vmatpush1.msra.mxu0 0.0
      %539 = vmatprep.subr.mxu0 0.0
      %540 = vmatpush1.msra.mxu0 0.0
      %541 = vmatprep.subr.mxu0 0.0
      %542 = vmatpush1.msra.mxu0 0.0
      %543 = vmatprep.subr.mxu0 0.0
      %544 = vmatpush1.msra.mxu0 0.0
      %545 = vmatprep.subr.mxu0 0.0
      %546 = vmatpush1.msra.mxu0 0.0
      %547 = vmatprep.subr.mxu0 0.0
      %548 = vmatpush1.msra.mxu0 0.0
      %549 = vmatprep.subr.mxu0 0.0
      %550 = vmatpush1.msra.mxu0 0.0
      %551 = vmatprep.subr.mxu0 0.0
      %552 = vmatpush1.msra.mxu0 0.0
      %553 = vmatprep.subr.mxu0 0.0
      %554 = vmatpush1.msra.mxu0 0.0
      %555 = vmatprep.subr.mxu0 0.0
      %556 = vmatpush1.msra.mxu0 0.0
      %557 = vmatprep.subr.mxu0 0.0
      %558 = vmatpush1.msra.mxu0 0.0
      %559 = vmatprep.subr.mxu0 0.0
      %560 = vmatpush1.msra.mxu0 0.0
      %561 = vmatprep.subr.mxu0 0.0
      %562 = vmatpush1.msra.mxu0 0.0
      %563 = vmatprep.subr.mxu0 0.0
      %564 = vmatpush1.msra.mxu0 0.0
      %565 = vmatprep.subr.mxu0 0.0
      %566 = vmatpush1.msra.mxu0 0.0
      %567 = vmatprep.subr.mxu0 0.0
      %568 = vmatpush1.msra.mxu0 0.0
      %569 = vmatprep.subr.mxu0 0.0
      %570 = vmatpush1.msra.mxu0 0.0
      %571 = vmatprep.mubr.f32.mxu0 0.0
      %572 = vmatmul.mubr.f32.gmra.mrb[0].mxu0 %v502
      %v573 = vpop.f32.mrb[0].mxu0
      %v574 = vadd.f32 %v499, %v573
      %v575 = vpop.f32.mrb[0].mxu0
      %576 = vmatprep.mubr.f32.mxu0 0.0
      %577 = vmatmul.mubr.f32.gmra.mrb[0].mxu0 %v505
      %v578 = vpop.f32.mrb[0].mxu0
      %v579 = vadd.f32 %v499, %v578
      %v580 = vpop.f32.mrb[0].mxu0
      %581 = vdwg.mxu0
      %v582 = vld [vmem:[%s5] sm:$0xff]
      %v583 = vld [vmem:[%s5 + $0x8] sm:$0xff]
      %v584 = vld [vmem:[%s5 + $0x10] sm:$0xff]
      %v585 = vld [vmem:[%s5 + $0x18] sm:$0xff]
      %v586 = vld [vmem:[%s6] sm:$0x1]
      %v588 = vlaneseq
      %v589 = vshrl.u32 %v588, 7
      %v590 = vsub.s32 0, %v589
      %v591 = vrot.slane %v586, %v590
      %593 = vmatprep.subr.mxu0 0.0
      %594 = vmatpush1.msra.mxu0 %v582
      %595 = vmatprep.subr.mxu0 0.0
      %596 = vmatpush1.msra.mxu0 %v583
      %597 = vmatprep.subr.mxu0 0.0
      %598 = vmatpush1.msra.mxu0 %v584
      %599 = vmatprep.subr.mxu0 0.0
      %600 = vmatpush1.msra.mxu0 %v585
      %601 = vmatprep.subr.mxu0 0.0
      %602 = vmatpush1.msra.mxu0 0.0
      %603 = vmatprep.subr.mxu0 0.0
      %604 = vmatpush1.msra.mxu0 0.0
      %605 = vmatprep.subr.mxu0 0.0
      %606 = vmatpush1.msra.mxu0 0.0
      %607 = vmatprep.subr.mxu0 0.0
      %608 = vmatpush1.msra.mxu0 0.0
      %609 = vmatprep.subr.mxu0 0.0
      %610 = vmatpush1.msra.mxu0 0.0
      %611 = vmatprep.subr.mxu0 0.0
      %612 = vmatpush1.msra.mxu0 0.0
      %613 = vmatprep.subr.mxu0 0.0
      %614 = vmatpush1.msra.mxu0 0.0
      %615 = vmatprep.subr.mxu0 0.0
      %616 = vmatpush1.msra.mxu0 0.0
      %617 = vmatprep.subr.mxu0 0.0
      %618 = vmatpush1.msra.mxu0 0.0
      %619 = vmatprep.subr.mxu0 0.0
      %620 = vmatpush1.msra.mxu0 0.0
      %621 = vmatprep.subr.mxu0 0.0
      %622 = vmatpush1.msra.mxu0 0.0
      %623 = vmatprep.subr.mxu0 0.0
      %624 = vmatpush1.msra.mxu0 0.0
      %625 = vmatprep.subr.mxu0 0.0
      %626 = vmatpush1.msra.mxu0 0.0
      %627 = vmatprep.subr.mxu0 0.0
      %628 = vmatpush1.msra.mxu0 0.0
      %629 = vmatprep.subr.mxu0 0.0
      %630 = vmatpush1.msra.mxu0 0.0
      %631 = vmatprep.subr.mxu0 0.0
      %632 = vmatpush1.msra.mxu0 0.0
      %633 = vmatprep.subr.mxu0 0.0
      %634 = vmatpush1.msra.mxu0 0.0
      %635 = vmatprep.subr.mxu0 0.0
      %636 = vmatpush1.msra.mxu0 0.0
      %637 = vmatprep.subr.mxu0 0.0
      %638 = vmatpush1.msra.mxu0 0.0
      %639 = vmatprep.subr.mxu0 0.0
      %640 = vmatpush1.msra.mxu0 0.0
      %641 = vmatprep.subr.mxu0 0.0
      %642 = vmatpush1.msra.mxu0 0.0
      %643 = vmatprep.subr.mxu0 0.0
      %644 = vmatpush1.msra.mxu0 0.0
      %645 = vmatprep.subr.mxu0 0.0
      %646 = vmatpush1.msra.mxu0 0.0
      %647 = vmatprep.subr.mxu0 0.0
      %648 = vmatpush1.msra.mxu0 0.0
      %649 = vmatprep.subr.mxu0 0.0
      %650 = vmatpush1.msra.mxu0 0.0
      %651 = vmatprep.subr.mxu0 0.0
      %652 = vmatpush1.msra.mxu0 0.0
      %653 = vmatprep.subr.mxu0 0.0
      %654 = vmatpush1.msra.mxu0 0.0
      %655 = vmatprep.subr.mxu0 0.0
      %656 = vmatpush1.msra.mxu0 0.0
      %657 = vmatprep.mubr.f32.mxu0 0.0
      %658 = vmatmul.mubr.f32.gmra.mrb[0].mxu0 %v502
      %v659 = vpop.f32.mrb[0].mxu0
      %v660 = vadd.f32 %v591, %v659
      %v661 = vpop.f32.mrb[0].mxu0
      %662 = vmatprep.mubr.f32.mxu0 0.0
      %663 = vmatmul.mubr.f32.gmra.mrb[0].mxu0 %v505
      %v664 = vpop.f32.mrb[0].mxu0
      %v665 = vadd.f32 %v591, %v664
      %v666 = vpop.f32.mrb[0].mxu0
      %667 = vdwg.mxu0
      %v668 = vxor.u32 %v660, 2147483648
      %v669 = vxor.u32 %v665, 2147483648
      %v670 = vmul.f32 %v668, 1.442695
      %v671 = vpow.pop %v670
      %v672 = vmul.f32 %v669, 1.442695
      %v673 = vpow.pop %v672
      %v674 = vadd.f32 %v671, 1.0
      %v675 = vadd.f32 %v673, 1.0
      %v676 = vrcp.pop %v674
      %v677 = vmul.f32 1.0, %v676
      %v678 = vrcp.pop %v675
      %v679 = vmul.f32 1.0, %v678
      %v680 = vmul.f32 %v574, %v677
      %v681 = vmul.f32 %v579, %v679
      %vm682 = vcmask 523264
      %683 = vst.msk [vmem:[#allocation2] sm:$0xff] %vm682, 0.0
      %vm684 = vcmask 522240
      %685 = vst.msk [vmem:[#allocation2 + $0x8] sm:$0x7f] %vm684, 0.0
      %686 = vst.msk [vmem:[#allocation2 + $0x3] sm:$0xff] %vm682, %v680
      %vm687 = vcmask 516096
      %688 = vst.msk [vmem:[#allocation2 + $0xb] sm:$0x1] %vm687, %v681
      %v689 = vld [vmem:[#allocation2] sm:$0xff]
      %v690 = vld [vmem:[#allocation2 + $0x8] sm:$0x1]
      %v691 = vld [vmem:[%s7] sm:$0x1]
      %v692 = vlaneseq
      %v693 = vshrl.u32 %v692, 7
      %v694 = vsub.s32 0, %v693
      %v695 = vrot.slane %v691, %v694
      %v696 = vmul.f32 %v689, %v695
      %v697 = vmul.f32 %v690, %v695
      %v698 = vadd.f32 %v696, 0.0
      %v699 = vadd.f32 %v697, 0.0
      %v700 = vld [vmem:[#allocation2 + $0x1] sm:$0xff]
      %v701 = vld [vmem:[#allocation2 + $0x9] sm:$0x1]
      %v702 = vld [vmem:[%s7 + $0x1] sm:$0x1]
      %v703 = vlaneseq
      %v704 = vshrl.u32 %v703, 7
      %v705 = vsub.s32 0, %v704
      %v706 = vrot.slane %v702, %v705
      %v707 = vmul.f32 %v700, %v706
      %v708 = vmul.f32 %v701, %v706
      %v709 = vadd.f32 %v698, %v707
      %v710 = vadd.f32 %v699, %v708
      %v711 = vld [vmem:[#allocation2 + $0x2] sm:$0xff]
      %v712 = vld [vmem:[#allocation2 + $0xa] sm:$0x1]
      %v713 = vld [vmem:[%s7 + $0x2] sm:$0x1]
      %v714 = vlaneseq
      %v715 = vshrl.u32 %v714, 7
      %v716 = vsub.s32 0, %v715
      %v717 = vrot.slane %v713, %v716
      %v718 = vmul.f32 %v711, %v717
      %v719 = vmul.f32 %v712, %v717
      %v720 = vadd.f32 %v709, %v718
      %v721 = vadd.f32 %v710, %v719
      %v722 = vld [vmem:[#allocation2 + $0x3] sm:$0xff]
      %v723 = vld [vmem:[#allocation2 + $0xb] sm:$0x1]
      %v724 = vld [vmem:[%s7 + $0x3] sm:$0x1]
      %v725 = vlaneseq
      %v726 = vshrl.u32 %v725, 7
      %v727 = vsub.s32 0, %v726
      %v728 = vrot.slane %v724, %v727
      %v729 = vmul.f32 %v722, %v728
      %v730 = vmul.f32 %v723, %v728
      %v731 = vadd.f32 %v720, %v729
      %v732 = vadd.f32 %v721, %v730
      %v733 = vld [vmem:[#allocation2 + $0x4] sm:$0xff]
      %v734 = vld [vmem:[#allocation2 + $0xc] sm:$0x1]
      %v735 = vld [vmem:[%s7 + $0x4] sm:$0x1]
      %v736 = vlaneseq
      %v737 = vshrl.u32 %v736, 7
      %v738 = vsub.s32 0, %v737
      %v739 = vrot.slane %v735, %v738
      %v740 = vmul.f32 %v733, %v739
      %v741 = vmul.f32 %v734, %v739
      %v742 = vadd.f32 %v731, %v740
      %v743 = vadd.f32 %v732, %v741
      %v744 = vld [vmem:[#allocation2 + $0x5] sm:$0xff]
      %v745 = vld [vmem:[#allocation2 + $0xd] sm:$0x1]
      %v746 = vld [vmem:[%s7 + $0x5] sm:$0x1]
      %v747 = vlaneseq
      %v748 = vshrl.u32 %v747, 7
      %v749 = vsub.s32 0, %v748
      %v750 = vrot.slane %v746, %v749
      %v751 = vmul.f32 %v744, %v750
      %v752 = vmul.f32 %v745, %v750
      %v753 = vadd.f32 %v742, %v751
      %v754 = vadd.f32 %v743, %v752
      %v755 = vld [vmem:[#allocation2 + $0x6] sm:$0xff]
      %v756 = vld [vmem:[#allocation2 + $0xe] sm:$0x1]
      %v757 = vld [vmem:[%s7 + $0x6] sm:$0x1]
      %v758 = vlaneseq
      %v759 = vshrl.u32 %v758, 7
      %v760 = vsub.s32 0, %v759
      %v761 = vrot.slane %v757, %v760
      %v762 = vmul.f32 %v755, %v761
      %v763 = vmul.f32 %v756, %v761
      %v764 = vadd.f32 %v753, %v762
      %v765 = vadd.f32 %v754, %v763
      %v766 = vld [vmem:[%s8] sm:$0x1]
      %v768 = vlaneseq
      %v769 = vshrl.u32 %v768, 7
      %v770 = vsub.s32 0, %v769
      %v771 = vrot.slane %v766, %v770
      %v773 = vadd.f32 %v764, %v771
      %v774 = vadd.f32 %v765, %v771
      %v775 = vld [vmem:[%s9] sm:$0x1]
      %v777 = vlaneseq
      %v778 = vshrl.u32 %v777, 7
      %v779 = vsub.s32 0, %v778
      %v780 = vrot.slane %v775, %v779
      %v782 = vmul.f32 %v773, %v780
      %v783 = vmul.f32 %v774, %v780
      %v784 = vld [vmem:[%s10] sm:$0x1]
      %v786 = vlaneseq
      %v787 = vshrl.u32 %v786, 7
      %v788 = vsub.s32 0, %v787
      %v789 = vrot.slane %v784, %v788
      %v791 = vadd.f32 %v782, %v789
      %v792 = vadd.f32 %v783, %v789
      %v793 = vxor.u32 %v791, 2147483648
      %v794 = vxor.u32 %v792, 2147483648
      %v795 = vmul.f32 %v793, 1.442695
      %v796 = vpow.pop %v795
      %v797 = vmul.f32 %v794, 1.442695
      %v798 = vpow.pop %v797
      %v799 = vadd.f32 %v796, 1.0
      %v800 = vadd.f32 %v798, 1.0
      %v801 = vrcp.pop %v799
      %v802 = vmul.f32 1.0, %v801
      %v803 = vrcp.pop %v800
      %v804 = vmul.f32 1.0, %v803
      %v805 = vmul.f32 %v791, %v802
      %v806 = vmul.f32 %v792, %v804
      %v807 = vld [vmem:[%s11] sm:$0xff]
      %v808 = vld [vmem:[%s11 + $0x8] sm:$0xff]
      %v809 = vld [vmem:[%s11 + $0x10] sm:$0xff]
      %v810 = vld [vmem:[%s11 + $0x18] sm:$0xff]
      %v811 = vld [vmem:[%s11 + $0x20] sm:$0xff]
      %v812 = vld [vmem:[%s11 + $0x28] sm:$0xff]
      %v813 = vld [vmem:[%s11 + $0x30] sm:$0xff]
      %v814 = vld [vmem:[%s11 + $0x38] sm:$0xff]
      %v815 = vld [vmem:[%s12] sm:$0x1]
      %v817 = vlaneseq
      %v818 = vshrl.u32 %v817, 7
      %v819 = vsub.s32 0, %v818
      %v820 = vrot.slane %v815, %v819
      %v823 = vsel %vm682, %v805, 0
      %v826 = vsel %vm682, %v806, 0
      %828 = vmatprep.subr.mxu0 0.0
      %829 = vmatpush1.msra.mxu0 %v807
      %830 = vmatprep.subr.mxu0 0.0
      %831 = vmatpush1.msra.mxu0 %v808
      %832 = vmatprep.subr.mxu0 0.0
      %833 = vmatpush1.msra.mxu0 %v809
      %834 = vmatprep.subr.mxu0 0.0
      %835 = vmatpush1.msra.mxu0 %v810
      %836 = vmatprep.subr.mxu0 0.0
      %837 = vmatpush1.msra.mxu0 %v811
      %838 = vmatprep.subr.mxu0 0.0
      %839 = vmatpush1.msra.mxu0 %v812
      %840 = vmatprep.subr.mxu0 0.0
      %841 = vmatpush1.msra.mxu0 %v813
      %842 = vmatprep.subr.mxu0 0.0
      %843 = vmatpush1.msra.mxu0 %v814
      %844 = vmatprep.subr.mxu0 0.0
      %845 = vmatpush1.msra.mxu0 0.0
      %846 = vmatprep.subr.mxu0 0.0
      %847 = vmatpush1.msra.mxu0 0.0
      %848 = vmatprep.subr.mxu0 0.0
      %849 = vmatpush1.msra.mxu0 0.0
      %850 = vmatprep.subr.mxu0 0.0
      %851 = vmatpush1.msra.mxu0 0.0
      %852 = vmatprep.subr.mxu0 0.0
      %853 = vmatpush1.msra.mxu0 0.0
      %854 = vmatprep.subr.mxu0 0.0
      %855 = vmatpush1.msra.mxu0 0.0
      %856 = vmatprep.subr.mxu0 0.0
      %857 = vmatpush1.msra.mxu0 0.0
      %858 = vmatprep.subr.mxu0 0.0
      %859 = vmatpush1.msra.mxu0 0.0
      %860 = vmatprep.subr.mxu0 0.0
      %861 = vmatpush1.msra.mxu0 0.0
      %862 = vmatprep.subr.mxu0 0.0
      %863 = vmatpush1.msra.mxu0 0.0
      %864 = vmatprep.subr.mxu0 0.0
      %865 = vmatpush1.msra.mxu0 0.0
      %866 = vmatprep.subr.mxu0 0.0
      %867 = vmatpush1.msra.mxu0 0.0
      %868 = vmatprep.subr.mxu0 0.0
      %869 = vmatpush1.msra.mxu0 0.0
      %870 = vmatprep.subr.mxu0 0.0
      %871 = vmatpush1.msra.mxu0 0.0
      %872 = vmatprep.subr.mxu0 0.0
      %873 = vmatpush1.msra.mxu0 0.0
      %874 = vmatprep.subr.mxu0 0.0
      %875 = vmatpush1.msra.mxu0 0.0
      %876 = vmatprep.subr.mxu0 0.0
      %877 = vmatpush1.msra.mxu0 0.0
      %878 = vmatprep.subr.mxu0 0.0
      %879 = vmatpush1.msra.mxu0 0.0
      %880 = vmatprep.subr.mxu0 0.0
      %881 = vmatpush1.msra.mxu0 0.0
      %882 = vmatprep.subr.mxu0 0.0
      %883 = vmatpush1.msra.mxu0 0.0
      %884 = vmatprep.subr.mxu0 0.0
      %885 = vmatpush1.msra.mxu0 0.0
      %886 = vmatprep.subr.mxu0 0.0
      %887 = vmatpush1.msra.mxu0 0.0
      %888 = vmatprep.subr.mxu0 0.0
      %889 = vmatpush1.msra.mxu0 0.0
      %890 = vmatprep.subr.mxu0 0.0
      %891 = vmatpush1.msra.mxu0 0.0
      %892 = vmatprep.mubr.f32.mxu0 0.0
      %893 = vmatmul.mubr.f32.gmra.mrb[0].mxu0 %v823
      %v894 = vpop.f32.mrb[0].mxu0
      %v895 = vadd.f32 %v820, %v894
      %v896 = vpop.f32.mrb[0].mxu0
      %897 = vmatprep.mubr.f32.mxu0 0.0
      %898 = vmatmul.mubr.f32.gmra.mrb[0].mxu0 %v826
      %v899 = vpop.f32.mrb[0].mxu0
      %v900 = vadd.f32 %v820, %v899
      %v901 = vpop.f32.mrb[0].mxu0
      %902 = vdwg.mxu0
      %v903 = vadd.f32 %v441, %v895
      %v904 = vadd.f32 %v442, %v900
      %905 = vst.msk [vmem:[%s440] sm:$0xff] %vm445, %v903
      %906 = vst.msk [vmem:[%s440 + $0x8] sm:$0x1] %vm449, %v904
      %p907 = scmp.lt.s32.totalorder %s24, 1
      %s908 = scalar_select %p907, %s24, 1
      %s909 = smul.addr %s908, 2
      %s910 = smul.addr %s909, 8
      %s911 = scalar_lea.vmem %s13, %s910
      // Predicated region
      $region73: #{xlsr_conformer_forward.13} parent=71 // pred_check
        %p912 = pneg %p320
      $region74: #{xlsr_conformer_forward.13} parent=71 // pred_check_branch
        %914 = sbr.rel (%p912) target = $region76
      $region75: #{xlsr_conformer_forward.13} parent=71 // pred_region
        _
      $region76: #{xlsr_conformer_forward.13} parent=71 // pred_fallthru
        _
    $region72: #{xlsr_conformer_forward.13} parent=5 // pred_fallthru
      _
    %p915 = scmp.le.s32.totalorder 2, %s19
    // Predicated region
    $region77: #{xlsr_conformer_forward.13} parent=5 // pred_check
      %p916 = pneg %p915
    $region78: #{xlsr_conformer_forward.13} parent=5 // pred_check_branch
      %918 = sbr.rel (%p916) target = $region80
    $region79: #{xlsr_conformer_forward.13} parent=5 // pred_region
      %s919 = ssub.s32 %s19, 2
      // Predicated region
      $region81: #{xlsr_conformer_forward.13} parent=79 // pred_check
        %p920 = pneg %p326
      $region82: #{xlsr_conformer_forward.13} parent=79 // pred_check_branch
        %922 = sbr.rel (%p920) target = $region84
      $region83: #{xlsr_conformer_forward.13} parent=79 // pred_region
        %p923 = scmp.lt.s32.totalorder %s25, 1
        %s924 = scalar_select %p923, %s25, 1
        %s925 = smul.addr %s924, 2
        %s926 = smul.addr %s925, 8
        %s927 = scalar_lea.vmem %s13, %s926
      $region84: #{xlsr_conformer_forward.13} parent=79 // pred_fallthru
        _
    $region80: #{xlsr_conformer_forward.13} parent=5 // pred_fallthru
      _
  $region6: #{xlsr_conformer_forward.13} parent=0 // loop_footer
    %s23 = sadd.s32 1, %s19
  $region7: #{xlsr_conformer_forward.13} parent=0 // loop_footer_branch
    %18 = sbr.rel target = $region3
  $region8: #{xlsr_conformer_forward.13} parent=0 // loop_exit
    _

// kernel: xlsr_conformer_forward.12
$region0: #{xlsr_conformer_forward.12}
  #allocation0 [shape = 'u32[]', space=smem, size = 0x4, offset = 0x4, fixed_abs, tag = 'smem constant byte address 0x4 - core index']
  #allocation1 [shape = 'u32[144,128]{1,0:T(1,128)}', space=vmem, size = 0x12000, scoped, tag = 'internal scratch']
  %s0 = inlined_call_operand.vmem [shape: f32[2,9,32], index: 0, kind: input, shape index: {}]
  %s1 = inlined_call_operand.vmem [shape: f32[2,9,32], index: 1, kind: input, shape index: {}]
  %s2 = inlined_call_operand.vmem [shape: f32[2,9,32], index: 2, kind: input, shape index: {}]
  %s3 = inlined_call_operand.vmem [shape: f32[2,4,9,9], index: 3, kind: input, shape index: {}]
  %s4 = inlined_call_operand.vmem [shape: f32[2,9,32], index: 4, kind: input, shape index: {}]
  %s5 = inlined_call_operand.vmem [shape: f32[32,32], index: 5, kind: input, shape index: {}]
  %s6 = inlined_call_operand.vmem [shape: f32[1,32], index: 6, kind: input, shape index: {}]
  %s7 = inlined_call_operand.vmem [shape: f32[2,9,32], index: 7, kind: output, shape index: {}]
  %s8 = sld [smem:[#allocation0]]
  $region61: #{xlsr_conformer_forward.12} parent=0
    _
  %s10 = ssub.s32 1, %s8
  %s11 = scalar_select 0, %s10, %s8
  loop: start=0, step=1, limit=4
  $region2: #{xlsr_conformer_forward.12} parent=0 // loop_pre_header
    _
  $region3: #{xlsr_conformer_forward.12} parent=0 // loop_header
    %s13 = sphi 0, %s17
    %p14 = scmp.ge.s32.totalorder %s13, 4
    %s23 = sphi 0, %s25
    %s26 = sphi 0, %s23
    %s27 = sphi 0, %s26
    %s43 = sphi 0, %s27
    %s49 = sphi 0, %s51
    %s52 = sphi 0, %s49
    %s53 = sphi 0, %s52
    %s69 = sphi 0, %s53
    %s75 = sphi 0, %s77
    %s78 = sphi 0, %s75
    %s79 = sphi 0, %s78
    %s95 = sphi 0, %s79
    %s101 = sphi 0, %s103
    %s104 = sphi 0, %s101
    %s105 = sphi 0, %s104
    %s121 = sphi 0, %s105
    %s127 = sphi 0, %s129
    %s130 = sphi 0, %s127
    %s131 = sphi 0, %s130
    %s147 = sphi 0, %s131
    %s151 = sphi 0, %s151
    %s153 = sphi 0, %s151
    %s154 = sphi 0, %s153
    %s168 = sphi 0, %s154
    %s172 = sphi 0, %s172
    %s174 = sphi 0, %s172
    %s175 = sphi 0, %s174
    %s189 = sphi 0, %s175
    %s195 = sphi 0, %s197
    %s198 = sphi 0, %s195
    %s199 = sphi 0, %s198
    %s215 = sphi 0, %s199
  $region4: #{xlsr_conformer_forward.12} parent=0 // loop_header_branch
    %16 = sbr.rel (%p14) target = $region8
  $region5: #{xlsr_conformer_forward.12} parent=0 // loop_body
    %s18 = ssub.s32 %s13, 1
    %s19 = ssub.s32 %s13, 2
    %s20 = sadd.s32 %s13, 1
    %s21 = ssub.s32 %s13, %s20
    %p22 = scmp.eq.s32.totalorder %s21, 0
    %s24 = sadd.s32 %s23, 1
    %s25 = scalar_select %p22, %s23, %s24
    %p28 = pneg %p22
    %p29 = scmp.eq.s32.totalorder %s13, 1
    %p30 = por %p28, %p29
    %p31 = scmp.ne.s32.totalorder %s23, %s26
    %p32 = scmp.eq.s32.totalorder %s13, 0
    %p33 = por %p31, %p32
    %p34 = scmp.ne.s32.totalorder %s23, %s26
    %p35 = scmp.eq.s32.totalorder %s18, 1
    %p36 = por %p34, %p35
    %p37 = scmp.ne.s32.totalorder %s26, %s27
    %p38 = scmp.eq.s32.totalorder %s18, 0
    %p39 = por %p37, %p38
    %p40 = scmp.ne.s32.totalorder %s26, %s27
    %p41 = scmp.eq.s32.totalorder %s19, 1
    %p42 = por %p40, %p41
    %p44 = scmp.ne.s32.totalorder %s27, %s43
    %p45 = scmp.eq.s32.totalorder %s19, 0
    %p46 = por %p44, %p45
    %s47 = ssub.s32 %s13, %s20
    %p48 = scmp.eq.s32.totalorder %s47, 0
    %s50 = sadd.s32 %s49, 1
    %s51 = scalar_select %p48, %s49, %s50
    %p54 = pneg %p48
    %p55 = scmp.eq.s32.totalorder %s13, 1
    %p56 = por %p54, %p55
    %p57 = scmp.ne.s32.totalorder %s49, %s52
    %p58 = scmp.eq.s32.totalorder %s13, 0
    %p59 = por %p57, %p58
    %p60 = scmp.ne.s32.totalorder %s49, %s52
    %p61 = scmp.eq.s32.totalorder %s18, 1
    %p62 = por %p60, %p61
    %p63 = scmp.ne.s32.totalorder %s52, %s53
    %p64 = scmp.eq.s32.totalorder %s18, 0
    %p65 = por %p63, %p64
    %p66 = scmp.ne.s32.totalorder %s52, %s53
    %p67 = scmp.eq.s32.totalorder %s19, 1
    %p68 = por %p66, %p67
    %p70 = scmp.ne.s32.totalorder %s53, %s69
    %p71 = scmp.eq.s32.totalorder %s19, 0
    %p72 = por %p70, %p71
    %s73 = ssub.s32 %s13, %s20
    %p74 = scmp.eq.s32.totalorder %s73, 0
    %s76 = sadd.s32 %s75, 1
    %s77 = scalar_select %p74, %s75, %s76
    %p80 = pneg %p74
    %p81 = scmp.eq.s32.totalorder %s13, 1
    %p82 = por %p80, %p81
    %p83 = scmp.ne.s32.totalorder %s75, %s78
    %p84 = scmp.eq.s32.totalorder %s13, 0
    %p85 = por %p83, %p84
    %p86 = scmp.ne.s32.totalorder %s75, %s78
    %p87 = scmp.eq.s32.totalorder %s18, 1
    %p88 = por %p86, %p87
    %p89 = scmp.ne.s32.totalorder %s78, %s79
    %p90 = scmp.eq.s32.totalorder %s18, 0
    %p91 = por %p89, %p90
    %p92 = scmp.ne.s32.totalorder %s78, %s79
    %p93 = scmp.eq.s32.totalorder %s19, 1
    %p94 = por %p92, %p93
    %p96 = scmp.ne.s32.totalorder %s79, %s95
    %p97 = scmp.eq.s32.totalorder %s19, 0
    %p98 = por %p96, %p97
    %s99 = ssub.s32 %s13, %s20
    %p100 = scmp.eq.s32.totalorder %s99, 0
    %s102 = sadd.s32 %s101, 1
    %s103 = scalar_select %p100, %s101, %s102
    %p106 = pneg %p100
    %p107 = scmp.eq.s32.totalorder %s13, 1
    %p108 = por %p106, %p107
    %p109 = scmp.ne.s32.totalorder %s101, %s104
    %p110 = scmp.eq.s32.totalorder %s13, 0
    %p111 = por %p109, %p110
    %p112 = scmp.ne.s32.totalorder %s101, %s104
    %p113 = scmp.eq.s32.totalorder %s18, 1
    %p114 = por %p112, %p113
    %p115 = scmp.ne.s32.totalorder %s104, %s105
    %p116 = scmp.eq.s32.totalorder %s18, 0
    %p117 = por %p115, %p116
    %p118 = scmp.ne.s32.totalorder %s104, %s105
    %p119 = scmp.eq.s32.totalorder %s19, 1
    %p120 = por %p118, %p119
    %p122 = scmp.ne.s32.totalorder %s105, %s121
    %p123 = scmp.eq.s32.totalorder %s19, 0
    %p124 = por %p122, %p123
    %s125 = ssub.s32 %s13, %s20
    %p126 = scmp.eq.s32.totalorder %s125, 0
    %s128 = sadd.s32 %s127, 1
    %s129 = scalar_select %p126, %s127, %s128
    %p132 = pneg %p126
    %p133 = scmp.eq.s32.totalorder %s13, 1
    %p134 = por %p132, %p133
    %p135 = scmp.ne.s32.totalorder %s127, %s130
    %p136 = scmp.eq.s32.totalorder %s13, 0
    %p137 = por %p135, %p136
    %p138 = scmp.ne.s32.totalorder %s127, %s130
    %p139 = scmp.eq.s32.totalorder %s18, 1
    %p140 = por %p138, %p139
    %p141 = scmp.ne.s32.totalorder %s130, %s131
    %p142 = scmp.eq.s32.totalorder %s18, 0
    %p143 = por %p141, %p142
    %p144 = scmp.ne.s32.totalorder %s130, %s131
    %p145 = scmp.eq.s32.totalorder %s19, 1
    %p146 = por %p144, %p145
    %p148 = scmp.ne.s32.totalorder %s131, %s147
    %p149 = scmp.eq.s32.totalorder %s19, 0
    %p150 = por %p148, %p149
    %s152 = sadd.s32 %s151, 1
    %p155 = scmp.eq.s32.totalorder %s13, 1
    %p156 = scmp.ne.s32.totalorder %s151, %s153
    %p157 = scmp.eq.s32.totalorder %s13, 0
    %p158 = por %p156, %p157
    %p159 = scmp.ne.s32.totalorder %s151, %s153
    %p160 = scmp.eq.s32.totalorder %s18, 1
    %p161 = por %p159, %p160
    %p162 = scmp.ne.s32.totalorder %s153, %s154
    %p163 = scmp.eq.s32.totalorder %s18, 0
    %p164 = por %p162, %p163
    %p165 = scmp.ne.s32.totalorder %s153, %s154
    %p166 = scmp.eq.s32.totalorder %s19, 1
    %p167 = por %p165, %p166
    %p169 = scmp.ne.s32.totalorder %s154, %s168
    %p170 = scmp.eq.s32.totalorder %s19, 0
    %p171 = por %p169, %p170
    %s173 = sadd.s32 %s172, 1
    %p176 = scmp.eq.s32.totalorder %s13, 1
    %p177 = scmp.ne.s32.totalorder %s172, %s174
    %p178 = scmp.eq.s32.totalorder %s13, 0
    %p179 = por %p177, %p178
    %p180 = scmp.ne.s32.totalorder %s172, %s174
    %p181 = scmp.eq.s32.totalorder %s18, 1
    %p182 = por %p180, %p181
    %p183 = scmp.ne.s32.totalorder %s174, %s175
    %p184 = scmp.eq.s32.totalorder %s18, 0
    %p185 = por %p183, %p184
    %p186 = scmp.ne.s32.totalorder %s174, %s175
    %p187 = scmp.eq.s32.totalorder %s19, 1
    %p188 = por %p186, %p187
    %p190 = scmp.ne.s32.totalorder %s175, %s189
    %p191 = scmp.eq.s32.totalorder %s19, 0
    %p192 = por %p190, %p191
    %s193 = ssub.s32 %s13, %s20
    %p194 = scmp.eq.s32.totalorder %s193, 0
    %s196 = sadd.s32 %s195, 1
    %s197 = scalar_select %p194, %s195, %s196
    %p200 = pneg %p194
    %p201 = scmp.eq.s32.totalorder %s13, 1
    %p202 = por %p200, %p201
    %p203 = scmp.ne.s32.totalorder %s195, %s198
    %p204 = scmp.eq.s32.totalorder %s13, 0
    %p205 = por %p203, %p204
    %p206 = scmp.ne.s32.totalorder %s195, %s198
    %p207 = scmp.eq.s32.totalorder %s18, 1
    %p208 = por %p206, %p207
    %p209 = scmp.ne.s32.totalorder %s198, %s199
    %p210 = scmp.eq.s32.totalorder %s18, 0
    %p211 = por %p209, %p210
    %p212 = scmp.ne.s32.totalorder %s198, %s199
    %p213 = scmp.eq.s32.totalorder %s19, 1
    %p214 = por %p212, %p213
    %p216 = scmp.ne.s32.totalorder %s199, %s215
    %p217 = scmp.eq.s32.totalorder %s19, 0
    %p218 = por %p216, %p217
    %p219 = scmp.le.s32.totalorder 1, %s13
    %p220 = scmp.lt.s32.totalorder %s13, 3
    %p221 = pnand %p219, %p220
    %p222 = pneg %p221
    // Predicated region
    $region9: #{xlsr_conformer_forward.12} parent=5 // pred_check
      _
    $region10: #{xlsr_conformer_forward.12} parent=5 // pred_check_branch
      %224 = sbr.rel (%p221) target = $region12
    $region11: #{xlsr_conformer_forward.12} parent=5 // pred_region
      %s225 = ssub.s32 %s13, 1
      // Predicated region
      $region13: #{xlsr_conformer_forward.12} parent=11 // pred_check
        %p226 = pneg %p164
      $region14: #{xlsr_conformer_forward.12} parent=11 // pred_check_branch
        %228 = sbr.rel (%p226) target = $region16
      $region15: #{xlsr_conformer_forward.12} parent=11 // pred_region
        _
      $region16: #{xlsr_conformer_forward.12} parent=11 // pred_fallthru
        _
      // Predicated region
      $region17: #{xlsr_conformer_forward.12} parent=11 // pred_check
        %p229 = pneg %p185
      $region18: #{xlsr_conformer_forward.12} parent=11 // pred_check_branch
        %231 = sbr.rel (%p229) target = $region20
      $region19: #{xlsr_conformer_forward.12} parent=11 // pred_region
        _
      $region20: #{xlsr_conformer_forward.12} parent=11 // pred_fallthru
        _
    $region12: #{xlsr_conformer_forward.12} parent=5 // pred_fallthru
      _
    %p232 = scmp.lt.s32.totalorder %s13, 2
    // Predicated region
    $region21: #{xlsr_conformer_forward.12} parent=5 // pred_check
      %p233 = pneg %p232
    $region22: #{xlsr_conformer_forward.12} parent=5 // pred_check_branch
      %235 = sbr.rel (%p233) target = $region24
    $region23: #{xlsr_conformer_forward.12} parent=5 // pred_region
      // Predicated region
      $region25: #{xlsr_conformer_forward.12} parent=23 // pred_check
        %p236 = pneg %p33
      $region26: #{xlsr_conformer_forward.12} parent=23 // pred_check_branch
        %238 = sbr.rel (%p236) target = $region28
      $region27: #{xlsr_conformer_forward.12} parent=23 // pred_region
        %p239 = scmp.lt.s32.totalorder %s13, 1
        %s240 = scalar_select %p239, %s13, 1
        %s241 = smul.addr %s240, 2
        %s242 = smul.addr %s241, 8
        %s243 = scalar_lea.vmem %s0, %s242
      $region28: #{xlsr_conformer_forward.12} parent=23 // pred_fallthru
        _
      // Predicated region
      $region29: #{xlsr_conformer_forward.12} parent=23 // pred_check
        %p244 = pneg %p59
      $region30: #{xlsr_conformer_forward.12} parent=23 // pred_check_branch
        %246 = sbr.rel (%p244) target = $region32
      $region31: #{xlsr_conformer_forward.12} parent=23 // pred_region
        %p247 = scmp.lt.s32.totalorder %s13, 1
        %s248 = scalar_select %p247, %s13, 1
        %s249 = smul.addr %s248, 2
        %s250 = smul.addr %s249, 8
        %s251 = scalar_lea.vmem %s1, %s250
      $region32: #{xlsr_conformer_forward.12} parent=23 // pred_fallthru
        _
      // Predicated region
      $region33: #{xlsr_conformer_forward.12} parent=23 // pred_check
        %p252 = pneg %p85
      $region34: #{xlsr_conformer_forward.12} parent=23 // pred_check_branch
        %254 = sbr.rel (%p252) target = $region36
      $region35: #{xlsr_conformer_forward.12} parent=23 // pred_region
        %p255 = scmp.lt.s32.totalorder %s13, 1
        %s256 = scalar_select %p255, %s13, 1
        %s257 = smul.addr %s256, 2
        %s258 = smul.addr %s257, 8
        %s259 = scalar_lea.vmem %s2, %s258
      $region36: #{xlsr_conformer_forward.12} parent=23 // pred_fallthru
        _
      // Predicated region
      $region37: #{xlsr_conformer_forward.12} parent=23 // pred_check
        %p260 = pneg %p111
      $region38: #{xlsr_conformer_forward.12} parent=23 // pred_check_branch
        %262 = sbr.rel (%p260) target = $region40
      $region39: #{xlsr_conformer_forward.12} parent=23 // pred_region
        %p263 = scmp.lt.s32.totalorder %s13, 1
        %s264 = scalar_select %p263, %s13, 1
        %s265 = smul.addr %s264, 8
        %s266 = smul.addr %s265, 8
        %s267 = scalar_lea.vmem %s3, %s266
      $region40: #{xlsr_conformer_forward.12} parent=23 // pred_fallthru
        _
      // Predicated region
      $region41: #{xlsr_conformer_forward.12} parent=23 // pred_check
        %p268 = pneg %p137
      $region42: #{xlsr_conformer_forward.12} parent=23 // pred_check_branch
        %270 = sbr.rel (%p268) target = $region44
      $region43: #{xlsr_conformer_forward.12} parent=23 // pred_region
        %p271 = scmp.lt.s32.totalorder %s13, 1
        %s272 = scalar_select %p271, %s13, 1
        %s273 = smul.addr %s272, 2
        %s274 = smul.addr %s273, 8
        %s275 = scalar_lea.vmem %s4, %s274
      $region44: #{xlsr_conformer_forward.12} parent=23 // pred_fallthru
        _
    $region24: #{xlsr_conformer_forward.12} parent=5 // pred_fallthru
      _
    %p276 = scmp.le.s32.totalorder 1, %s13
    %p277 = scmp.lt.s32.totalorder %s13, 3
    %p278 = pnand %p276, %p277
    %p279 = pneg %p278
    // Predicated region
    $region45: #{xlsr_conformer_forward.12} parent=5 // pred_check
      _
    $region46: #{xlsr_conformer_forward.12} parent=5 // pred_check_branch
      %281 = sbr.rel (%p278) target = $region48
    $region47: #{xlsr_conformer_forward.12} parent=5 // pred_region
      %s282 = ssub.s32 %s13, 1
      %p283 = scmp.lt.s32.totalorder %s18, 1
      %s284 = scalar_select %p283, %s18, 1
      %s285 = smul.addr %s284, 2
      %s286 = smul.addr %s285, 8
      %s287 = scalar_lea.vmem %s0, %s286
      %p288 = pneg %p39
      %p289 = pneg %p36
      %p290 = scmp.lt.s32.totalorder %s18, 1
      %s291 = scalar_select %p290, %s18, 1
      %s292 = smul.addr %s291, 2
      %s293 = smul.addr %s292, 8
      %s294 = scalar_lea.vmem %s1, %s293
      %p295 = pneg %p65
      %p296 = pneg %p62
      %p297 = scmp.lt.s32.totalorder %s18, 1
      %s298 = scalar_select %p297, %s18, 1
      %s299 = smul.addr %s298, 2
      %s300 = smul.addr %s299, 8
      %s301 = scalar_lea.vmem %s2, %s300
      %p302 = pneg %p91
      %p303 = pneg %p88
      %p304 = scmp.lt.s32.totalorder %s18, 1
      %s305 = scalar_select %p304, %s18, 1
      %s306 = smul.addr %s305, 8
      %s307 = smul.addr %s306, 8
      %s308 = scalar_lea.vmem %s3, %s307
      %p309 = pneg %p117
      %p310 = pneg %p114
      %p311 = scmp.lt.s32.totalorder %s18, 1
      %s312 = scalar_select %p311, %s18, 1
      %s313 = smul.addr %s312, 2
      %s314 = smul.addr %s313, 8
      %s315 = scalar_lea.vmem %s4, %s314
      %p316 = pneg %p143
      %p317 = pneg %p140
      %p318 = pneg %p164
      %p319 = pneg %p161
      %p320 = pneg %p185
      %p321 = pneg %p182
      %p322 = pneg %p211
      %p323 = pneg %p208
      %p324 = scmp.lt.s32.totalorder %s18, 1
      %s325 = scalar_select %p324, %s18, 1
      %s326 = smul.addr %s325, 2
      %s327 = smul.addr %s326, 8
      %s328 = scalar_lea.vmem %s7, %s327
      %p329 = scmp.lt.s32.totalorder %s18, 1
      %s330 = scalar_select %p329, %s18, 1
      %s331 = smul.addr %s330, 2
      %s332 = smul.addr %s331, 8
      %s333 = scalar_lea.vmem %s0, %s332
      %p334 = scmp.lt.s32.totalorder %s18, 1
      %s335 = scalar_select %p334, %s18, 1
      %s336 = smul.addr %s335, 2
      %s337 = smul.addr %s336, 8
      %s338 = scalar_lea.vmem %s1, %s337
      %p339 = scmp.lt.s32.totalorder %s18, 1
      %s340 = scalar_select %p339, %s18, 1
      %s341 = smul.addr %s340, 2
      %s342 = smul.addr %s341, 8
      %s343 = scalar_lea.vmem %s2, %s342
      %p344 = scmp.lt.s32.totalorder %s18, 1
      %s345 = scalar_select %p344, %s18, 1
      %s346 = smul.addr %s345, 8
      %s347 = smul.addr %s346, 8
      %s348 = scalar_lea.vmem %s3, %s347
      %p349 = scmp.lt.s32.totalorder %s18, 1
      %s350 = scalar_select %p349, %s18, 1
      %s351 = smul.addr %s350, 2
      %s352 = smul.addr %s351, 8
      %s353 = scalar_lea.vmem %s4, %s352
      %p354 = scmp.lt.s32.totalorder %s18, 1
      %s355 = scalar_select %p354, %s18, 1
      %s356 = smul.addr %s355, 2
      %s357 = smul.addr %s356, 8
      %s358 = scalar_lea.vmem %s7, %s357
      %v359 = vld [vmem:[%s333] sm:$0xff]
      %v360 = vld [vmem:[%s333 + $0x8] sm:$0x1]
      %v361 = vld [vmem:[%s338] sm:$0xff]
      %v362 = vld [vmem:[%s338 + $0x8] sm:$0x1]
      %v363 = vld [vmem:[%s343] sm:$0xff]
      %v364 = vld [vmem:[%s343 + $0x8] sm:$0x1]
      %v365 = vld [vmem:[%s353] sm:$0xff]
      %v366 = vld [vmem:[%s353 + $0x8] sm:$0x1]
      %v367 = vld [vmem:[%s6] sm:$0x1]
      %v369 = vlaneseq
      %v370 = vshrl.u32 %v369, 7
      %v371 = vsub.s32 0, %v370
      %v372 = vrot.slane %v367, %v371
      %v374 = vadd.f32 %v365, %v372
      %v375 = vadd.f32 %v366, %v372
      %v376 = vld [vmem:[%s348] sm:$0xff]
      %v377 = vld [vmem:[%s348 + $0x8] sm:$0x1]
      %vm378 = vcmask 64512
      %v380 = vsel %vm378, %v359, 0
      %v383 = vsel %vm378, %v360, 0
      %v386 = vsel %vm378, %v361, 0
      %v389 = vsel %vm378, %v362, 0
      %391 = vmatprep.subr.mxu0 0.0
      %392 = vmatpush1.xpose.msra.mxu0 %v386
      %393 = vmatprep.subr.mxu0 0.0
      %394 = vmatpush1.xpose.msra.mxu0 %v389
      %395 = vmatprep.subr.mxu0 0.0
      %396 = vmatpush1.xpose.msra.mxu0 0.0
      %397 = vmatprep.subr.mxu0 0.0
      %398 = vmatpush1.xpose.msra.mxu0 0.0
      %399 = vmatprep.subr.mxu0 0.0
      %400 = vmatpush1.xpose.msra.mxu0 0.0
      %401 = vmatprep.subr.mxu0 0.0
      %402 = vmatpush1.xpose.msra.mxu0 0.0
      %403 = vmatprep.subr.mxu0 0.0
      %404 = vmatpush1.xpose.msra.mxu0 0.0
      %405 = vmatprep.subr.mxu0 0.0
      %406 = vmatpush1.xpose.msra.mxu0 0.0
      %407 = vmatprep.subr.mxu0 0.0
      %408 = vmatpush1.xpose.msra.mxu0 0.0
      %409 = vmatprep.subr.mxu0 0.0
      %410 = vmatpush1.xpose.msra.mxu0 0.0
      %411 = vmatprep.subr.mxu0 0.0
      %412 = vmatpush1.xpose.msra.mxu0 0.0
      %413 = vmatprep.subr.mxu0 0.0
      %414 = vmatpush1.xpose.msra.mxu0 0.0
      %415 = vmatprep.subr.mxu0 0.0
      %416 = vmatpush1.xpose.msra.mxu0 0.0
      %417 = vmatprep.subr.mxu0 0.0
      %418 = vmatpush1.xpose.msra.mxu0 0.0
      %419 = vmatprep.subr.mxu0 0.0
      %420 = vmatpush1.xpose.msra.mxu0 0.0
      %421 = vmatprep.subr.mxu0 0.0
      %422 = vmatpush1.xpose.msra.mxu0 0.0
      %423 = vmatprep.subr.mxu0 0.0
      %424 = vmatpush1.xpose.msra.mxu0 0.0
      %425 = vmatprep.subr.mxu0 0.0
      %426 = vmatpush1.xpose.msra.mxu0 0.0
      %427 = vmatprep.subr.mxu0 0.0
      %428 = vmatpush1.xpose.msra.mxu0 0.0
      %429 = vmatprep.subr.mxu0 0.0
      %430 = vmatpush1.xpose.msra.mxu0 0.0
      %431 = vmatprep.subr.mxu0 0.0
      %432 = vmatpush1.xpose.msra.mxu0 0.0
      %433 = vmatprep.subr.mxu0 0.0
      %434 = vmatpush1.xpose.msra.mxu0 0.0
      %435 = vmatprep.subr.mxu0 0.0
      %436 = vmatpush1.xpose.msra.mxu0 0.0
      %437 = vmatprep.subr.mxu0 0.0
      %438 = vmatpush1.xpose.msra.mxu0 0.0
      %439 = vmatprep.subr.mxu0 0.0
      %440 = vmatpush1.xpose.msra.mxu0 0.0
      %441 = vmatprep.subr.mxu0 0.0
      %442 = vmatpush1.xpose.msra.mxu0 0.0
      %443 = vmatprep.subr.mxu0 0.0
      %444 = vmatpush1.xpose.msra.mxu0 0.0
      %445 = vmatprep.subr.mxu0 0.0
      %446 = vmatpush1.xpose.msra.mxu0 0.0
      %447 = vmatprep.subr.mxu0 0.0
      %448 = vmatpush1.xpose.msra.mxu0 0.0
      %449 = vmatprep.subr.mxu0 0.0
      %450 = vmatpush1.xpose.msra.mxu0 0.0
      %451 = vmatprep.subr.mxu0 0.0
      %452 = vmatpush1.xpose.msra.mxu0 0.0
      %453 = vmatprep.subr.mxu0 0.0
      %454 = vmatpush1.xpose.msra.mxu0 0.0
      %455 = vmatprep.mubr.f32.mxu0 0.0
      %456 = vmatmul.mubr.f32.gmra.mrb[0].mxu0 %v380
      %v457 = vpop.f32.mrb[0].mxu0
      %v458 = vadd.f32 %v376, %v457
      %v459 = vpop.f32.mrb[0].mxu0
      %460 = vmatprep.mubr.f32.mxu0 0.0
      %461 = vmatmul.mubr.f32.gmra.mrb[0].mxu0 %v383
      %v462 = vpop.f32.mrb[0].mxu0
      %v463 = vadd.f32 %v377, %v462
      %v464 = vpop.f32.mrb[0].mxu0
      %465 = vdwg.mxu0
      %v466 = vmul.f32 %v458, 0.35355338
      %v467 = vmul.f32 %v463, 0.35355338
      %vm468 = vcmask 72704
      %v469 = vsel %vm468, %v466, -inf
      %470 = vmax.xlane.f32.xlu0 %v469
      %v471 = vpop.xlane.xlu0 %470
      %vm472 = vcmask 65536
      %v473 = vsel %vm472, %v467, -inf
      %474 = vmax.xlane.f32.xlu0 %v473
      %v475 = vpop.xlane.xlu0 %474
      %v476 = vsub.f32 %v466, %v471
      %v477 = vsub.f32 %v467, %v475
      %v478 = vmul.f32 %v476, 1.442695
      %v479 = vpow.pop %v478
      %v480 = vmul.f32 %v477, 1.442695
      %v481 = vpow.pop %v480
      %v482 = vsel %vm468, %v479, 0.0
      %483 = vadd.xlane.f32.xlu0 %v482
      %v484 = vpop.xlane.xlu0 %483
      %v485 = vsel %vm472, %v481, 0.0
      %486 = vadd.xlane.f32.xlu0 %v485
      %v487 = vpop.xlane.xlu0 %486
      %v488 = vrcp.pop %v484
      %v489 = vrcp.pop %v487
      %v490 = vmul.f32 %v479, %v488
      %v491 = vmul.f32 %v481, %v489
      %v493 = vsel %vm468, %v490, 0
      %v496 = vsel %vm468, %v491, 0
      %vm498 = vcmask 1040384
      %v500 = vsel %vm498, %v364, 0
      %502 = vmatprep.subr.mxu0 0.0
      %503 = vmatpush1.msra.mxu0 %v363
      %504 = vmatprep.subr.mxu0 0.0
      %505 = vmatpush1.msra.mxu0 %v500
      %506 = vmatprep.subr.mxu0 0.0
      %507 = vmatpush1.msra.mxu0 0.0
      %508 = vmatprep.subr.mxu0 0.0
      %509 = vmatpush1.msra.mxu0 0.0
      %510 = vmatprep.subr.mxu0 0.0
      %511 = vmatpush1.msra.mxu0 0.0
      %512 = vmatprep.subr.mxu0 0.0
      %513 = vmatpush1.msra.mxu0 0.0
      %514 = vmatprep.subr.mxu0 0.0
      %515 = vmatpush1.msra.mxu0 0.0
      %516 = vmatprep.subr.mxu0 0.0
      %517 = vmatpush1.msra.mxu0 0.0
      %518 = vmatprep.subr.mxu0 0.0
      %519 = vmatpush1.msra.mxu0 0.0
      %520 = vmatprep.subr.mxu0 0.0
      %521 = vmatpush1.msra.mxu0 0.0
      %522 = vmatprep.subr.mxu0 0.0
      %523 = vmatpush1.msra.mxu0 0.0
      %524 = vmatprep.subr.mxu0 0.0
      %525 = vmatpush1.msra.mxu0 0.0
      %526 = vmatprep.subr.mxu0 0.0
      %527 = vmatpush1.msra.mxu0 0.0
      %528 = vmatprep.subr.mxu0 0.0
      %529 = vmatpush1.msra.mxu0 0.0
      %530 = vmatprep.subr.mxu0 0.0
      %531 = vmatpush1.msra.mxu0 0.0
      %532 = vmatprep.subr.mxu0 0.0
      %533 = vmatpush1.msra.mxu0 0.0
      %534 = vmatprep.subr.mxu0 0.0
      %535 = vmatpush1.msra.mxu0 0.0
      %536 = vmatprep.subr.mxu0 0.0
      %537 = vmatpush1.msra.mxu0 0.0
      %538 = vmatprep.subr.mxu0 0.0
      %539 = vmatpush1.msra.mxu0 0.0
      %540 = vmatprep.subr.mxu0 0.0
      %541 = vmatpush1.msra.mxu0 0.0
      %542 = vmatprep.subr.mxu0 0.0
      %543 = vmatpush1.msra.mxu0 0.0
      %544 = vmatprep.subr.mxu0 0.0
      %545 = vmatpush1.msra.mxu0 0.0
      %546 = vmatprep.subr.mxu0 0.0
      %547 = vmatpush1.msra.mxu0 0.0
      %548 = vmatprep.subr.mxu0 0.0
      %549 = vmatpush1.msra.mxu0 0.0
      %550 = vmatprep.subr.mxu0 0.0
      %551 = vmatpush1.msra.mxu0 0.0
      %552 = vmatprep.subr.mxu0 0.0
      %553 = vmatpush1.msra.mxu0 0.0
      %554 = vmatprep.subr.mxu0 0.0
      %555 = vmatpush1.msra.mxu0 0.0
      %556 = vmatprep.subr.mxu0 0.0
      %557 = vmatpush1.msra.mxu0 0.0
      %558 = vmatprep.subr.mxu0 0.0
      %559 = vmatpush1.msra.mxu0 0.0
      %560 = vmatprep.subr.mxu0 0.0
      %561 = vmatpush1.msra.mxu0 0.0
      %562 = vmatprep.subr.mxu0 0.0
      %563 = vmatpush1.msra.mxu0 0.0
      %564 = vmatprep.subr.mxu0 0.0
      %565 = vmatpush1.msra.mxu0 0.0
      %566 = vmatprep.mubr.f32.mxu0 0.0
      %567 = vmatmul.mubr.f32.gmra.mrb[0].mxu0 %v493
      %v568 = vpop.f32.mrb[0].mxu0
      %v569 = vadd.f32 0.0, %v568
      %v570 = vpop.f32.mrb[0].mxu0
      %571 = vmatprep.mubr.f32.mxu0 0.0
      %572 = vmatmul.mubr.f32.gmra.mrb[0].mxu0 %v496
      %v573 = vpop.f32.mrb[0].mxu0
      %v574 = vadd.f32 0.0, %v573
      %v575 = vpop.f32.mrb[0].mxu0
      %576 = vdwg.mxu0
      %v577 = vld [vmem:[%s5] sm:$0xff]
      %v579 = vsel %vm378, %v569, 0
      %v582 = vsel %vm378, %v574, 0
      %584 = vmatprep.subr.mxu0 0.0
      %585 = vmatpush1.msra.mxu0 %v577
      %586 = vmatprep.subr.mxu0 0.0
      %587 = vmatpush1.msra.mxu0 0.0
      %588 = vmatprep.subr.mxu0 0.0
      %589 = vmatpush1.msra.mxu0 0.0
      %590 = vmatprep.subr.mxu0 0.0
      %591 = vmatpush1.msra.mxu0 0.0
      %592 = vmatprep.subr.mxu0 0.0
      %593 = vmatpush1.msra.mxu0 0.0
      %594 = vmatprep.subr.mxu0 0.0
      %595 = vmatpush1.msra.mxu0 0.0
      %596 = vmatprep.subr.mxu0 0.0
      %597 = vmatpush1.msra.mxu0 0.0
      %598 = vmatprep.subr.mxu0 0.0
      %599 = vmatpush1.msra.mxu0 0.0
      %600 = vmatprep.subr.mxu0 0.0
      %601 = vmatpush1.msra.mxu0 0.0
      %602 = vmatprep.subr.mxu0 0.0
      %603 = vmatpush1.msra.mxu0 0.0
      %604 = vmatprep.subr.mxu0 0.0
      %605 = vmatpush1.msra.mxu0 0.0
      %606 = vmatprep.subr.mxu0 0.0
      %607 = vmatpush1.msra.mxu0 0.0
      %608 = vmatprep.subr.mxu0 0.0
      %609 = vmatpush1.msra.mxu0 0.0
      %610 = vmatprep.subr.mxu0 0.0
      %611 = vmatpush1.msra.mxu0 0.0
      %612 = vmatprep.subr.mxu0 0.0
      %613 = vmatpush1.msra.mxu0 0.0
      %614 = vmatprep.subr.mxu0 0.0
      %615 = vmatpush1.msra.mxu0 0.0
      %616 = vmatprep.subr.mxu0 0.0
      %617 = vmatpush1.msra.mxu0 0.0
      %618 = vmatprep.subr.mxu0 0.0
      %619 = vmatpush1.msra.mxu0 0.0
      %620 = vmatprep.subr.mxu0 0.0
      %621 = vmatpush1.msra.mxu0 0.0
      %622 = vmatprep.subr.mxu0 0.0
      %623 = vmatpush1.msra.mxu0 0.0
      %624 = vmatprep.subr.mxu0 0.0
      %625 = vmatpush1.msra.mxu0 0.0
      %626 = vmatprep.subr.mxu0 0.0
      %627 = vmatpush1.msra.mxu0 0.0
      %628 = vmatprep.subr.mxu0 0.0
      %629 = vmatpush1.msra.mxu0 0.0
      %630 = vmatprep.subr.mxu0 0.0
      %631 = vmatpush1.msra.mxu0 0.0
      %632 = vmatprep.subr.mxu0 0.0
      %633 = vmatpush1.msra.mxu0 0.0
      %634 = vmatprep.subr.mxu0 0.0
      %635 = vmatpush1.msra.mxu0 0.0
      %636 = vmatprep.subr.mxu0 0.0
      %637 = vmatpush1.msra.mxu0 0.0
      %638 = vmatprep.subr.mxu0 0.0
      %639 = vmatpush1.msra.mxu0 0.0
      %640 = vmatprep.subr.mxu0 0.0
      %641 = vmatpush1.msra.mxu0 0.0
      %642 = vmatprep.subr.mxu0 0.0
      %643 = vmatpush1.msra.mxu0 0.0
      %644 = vmatprep.subr.mxu0 0.0
      %645 = vmatpush1.msra.mxu0 0.0
      %646 = vmatprep.subr.mxu0 0.0
      %647 = vmatpush1.msra.mxu0 0.0
      %648 = vmatprep.mubr.f32.mxu0 0.0
      %649 = vmatmul.mubr.f32.gmra.mrb[0].mxu0 %v579
      %v650 = vpop.f32.mrb[0].mxu0
      %v651 = vadd.f32 0.0, %v650
      %v652 = vpop.f32.mrb[0].mxu0
      %653 = vmatprep.mubr.f32.mxu0 0.0
      %654 = vmatmul.mubr.f32.gmra.mrb[0].mxu0 %v582
      %v655 = vpop.f32.mrb[0].mxu0
      %v656 = vadd.f32 0.0, %v655
      %v657 = vpop.f32.mrb[0].mxu0
      %658 = vdwg.mxu0
      %v659 = vadd.f32 %v374, %v651
      %v660 = vadd.f32 %v375, %v656
      %s661 = scalar_lea.vmem %s348, 16
      %v662 = vld [vmem:[%s661] sm:$0xff]
      %v663 = vld [vmem:[%s661 + $0x8] sm:$0x1]
      %664 = vrot.lane.b32.xlu0 %v359, 120
      %v665 = vpop.permute.xlu0 %664
      %666 = vrot.lane.b32.xlu0 %v360, 120
      %v667 = vpop.permute.xlu0 %666
      %668 = vrot.lane.b32.xlu0 %v361, 120
      %v669 = vpop.permute.xlu0 %668
      %670 = vrot.lane.b32.xlu0 %v362, 120
      %v671 = vpop.permute.xlu0 %670
      %v672 = vsel %vm378, %v665, 0
      %v674 = vsel %vm378, %v667, 0
      %v676 = vsel %vm378, %v669, 0
      %v678 = vsel %vm378, %v671, 0
      %680 = vmatprep.subr.mxu0 0.0
      %681 = vmatpush1.xpose.msra.mxu0 %v676
      %682 = vmatprep.subr.mxu0 0.0
      %683 = vmatpush1.xpose.msra.mxu0 %v678
      %684 = vmatprep.subr.mxu0 0.0
      %685 = vmatpush1.xpose.msra.mxu0 0.0
      %686 = vmatprep.subr.mxu0 0.0
      %687 = vmatpush1.xpose.msra.mxu0 0.0
      %688 = vmatprep.subr.mxu0 0.0
      %689 = vmatpush1.xpose.msra.mxu0 0.0
      %690 = vmatprep.subr.mxu0 0.0
      %691 = vmatpush1.xpose.msra.mxu0 0.0
      %692 = vmatprep.subr.mxu0 0.0
      %693 = vmatpush1.xpose.msra.mxu0 0.0
      %694 = vmatprep.subr.mxu0 0.0
      %695 = vmatpush1.xpose.msra.mxu0 0.0
      %696 = vmatprep.subr.mxu0 0.0
      %697 = vmatpush1.xpose.msra.mxu0 0.0
      %698 = vmatprep.subr.mxu0 0.0
      %699 = vmatpush1.xpose.msra.mxu0 0.0
      %700 = vmatprep.subr.mxu0 0.0
      %701 = vmatpush1.xpose.msra.mxu0 0.0
      %702 = vmatprep.subr.mxu0 0.0
      %703 = vmatpush1.xpose.msra.mxu0 0.0
      %704 = vmatprep.subr.mxu0 0.0
      %705 = vmatpush1.xpose.msra.mxu0 0.0
      %706 = vmatprep.subr.mxu0 0.0
      %707 = vmatpush1.xpose.msra.mxu0 0.0
      %708 = vmatprep.subr.mxu0 0.0
      %709 = vmatpush1.xpose.msra.mxu0 0.0
      %710 = vmatprep.subr.mxu0 0.0
      %711 = vmatpush1.xpose.msra.mxu0 0.0
      %712 = vmatprep.subr.mxu0 0.0
      %713 = vmatpush1.xpose.msra.mxu0 0.0
      %714 = vmatprep.subr.mxu0 0.0
      %715 = vmatpush1.xpose.msra.mxu0 0.0
      %716 = vmatprep.subr.mxu0 0.0
      %717 = vmatpush1.xpose.msra.mxu0 0.0
      %718 = vmatprep.subr.mxu0 0.0
      %719 = vmatpush1.xpose.msra.mxu0 0.0
      %720 = vmatprep.subr.mxu0 0.0
      %721 = vmatpush1.xpose.msra.mxu0 0.0
      %722 = vmatprep.subr.mxu0 0.0
      %723 = vmatpush1.xpose.msra.mxu0 0.0
      %724 = vmatprep.subr.mxu0 0.0
      %725 = vmatpush1.xpose.msra.mxu0 0.0
      %726 = vmatprep.subr.mxu0 0.0
      %727 = vmatpush1.xpose.msra.mxu0 0.0
      %728 = vmatprep.subr.mxu0 0.0
      %729 = vmatpush1.xpose.msra.mxu0 0.0
      %730 = vmatprep.subr.mxu0 0.0
      %731 = vmatpush1.xpose.msra.mxu0 0.0
      %732 = vmatprep.subr.mxu0 0.0
      %733 = vmatpush1.xpose.msra.mxu0 0.0
      %734 = vmatprep.subr.mxu0 0.0
      %735 = vmatpush1.xpose.msra.mxu0 0.0
      %736 = vmatprep.subr.mxu0 0.0
      %737 = vmatpush1.xpose.msra.mxu0 0.0
      %738 = vmatprep.subr.mxu0 0.0
      %739 = vmatpush1.xpose.msra.mxu0 0.0
      %740 = vmatprep.subr.mxu0 0.0
      %741 = vmatpush1.xpose.msra.mxu0 0.0
      %742 = vmatprep.subr.mxu0 0.0
      %743 = vmatpush1.xpose.msra.mxu0 0.0
      %744 = vmatprep.mubr.f32.mxu0 0.0
      %745 = vmatmul.mubr.f32.gmra.mrb[0].mxu0 %v672
      %v746 = vpop.f32.mrb[0].mxu0
      %v747 = vadd.f32 %v662, %v746
      %v748 = vpop.f32.mrb[0].mxu0
      %749 = vmatprep.mubr.f32.mxu0 0.0
      %750 = vmatmul.mubr.f32.gmra.mrb[0].mxu0 %v674
      %v751 = vpop.f32.mrb[0].mxu0
      %v752 = vadd.f32 %v663, %v751
      %v753 = vpop.f32.mrb[0].mxu0
      %754 = vdwg.mxu0
      %v755 = vmul.f32 %v747, 0.35355338
      %v756 = vmul.f32 %v752, 0.35355338
      %v757 = vsel %vm468, %v755, -inf
      %758 = vmax.xlane.f32.xlu0 %v757
      %v759 = vpop.xlane.xlu0 %758
      %v760 = vsel %vm472, %v756, -inf
      %761 = vmax.xlane.f32.xlu0 %v760
      %v762 = vpop.xlane.xlu0 %761
      %v763 = vsub.f32 %v755, %v759
      %v764 = vsub.f32 %v756, %v762
      %v765 = vmul.f32 %v763, 1.442695
      %v766 = vpow.pop %v765
      %v767 = vmul.f32 %v764, 1.442695
      %v768 = vpow.pop %v767
      %v769 = vsel %vm468, %v766, 0.0
      %770 = vadd.xlane.f32.xlu0 %v769
      %v771 = vpop.xlane.xlu0 %770
      %v772 = vsel %vm472, %v768, 0.0
      %773 = vadd.xlane.f32.xlu0 %v772
      %v774 = vpop.xlane.xlu0 %773
      %v775 = vrcp.pop %v771
      %v776 = vrcp.pop %v774
      %v777 = vmul.f32 %v766, %v775
      %v778 = vmul.f32 %v768, %v776
      %780 = vrot.lane.b32.xlu0 %v363, 120
      %v781 = vpop.permute.xlu0 %780
      %782 = vrot.lane.b32.xlu0 %v364, 120
      %v783 = vpop.permute.xlu0 %782
      %v786 = vsel %vm468, %v777, 0
      %v789 = vsel %vm468, %v778, 0
      %v791 = vsel %vm498, %v783, 0
      %793 = vmatprep.subr.mxu0 0.0
      %794 = vmatpush1.msra.mxu0 %v781
      %795 = vmatprep.subr.mxu0 0.0
      %796 = vmatpush1.msra.mxu0 %v791
      %797 = vmatprep.subr.mxu0 0.0
      %798 = vmatpush1.msra.mxu0 0.0
      %799 = vmatprep.subr.mxu0 0.0
      %800 = vmatpush1.msra.mxu0 0.0
      %801 = vmatprep.subr.mxu0 0.0
      %802 = vmatpush1.msra.mxu0 0.0
      %803 = vmatprep.subr.mxu0 0.0
      %804 = vmatpush1.msra.mxu0 0.0
      %805 = vmatprep.subr.mxu0 0.0
      %806 = vmatpush1.msra.mxu0 0.0
      %807 = vmatprep.subr.mxu0 0.0
      %808 = vmatpush1.msra.mxu0 0.0
      %809 = vmatprep.subr.mxu0 0.0
      %810 = vmatpush1.msra.mxu0 0.0
      %811 = vmatprep.subr.mxu0 0.0
      %812 = vmatpush1.msra.mxu0 0.0
      %813 = vmatprep.subr.mxu0 0.0
      %814 = vmatpush1.msra.mxu0 0.0
      %815 = vmatprep.subr.mxu0 0.0
      %816 = vmatpush1.msra.mxu0 0.0
      %817 = vmatprep.subr.mxu0 0.0
      %818 = vmatpush1.msra.mxu0 0.0
      %819 = vmatprep.subr.mxu0 0.0
      %820 = vmatpush1.msra.mxu0 0.0
      %821 = vmatprep.subr.mxu0 0.0
      %822 = vmatpush1.msra.mxu0 0.0
      %823 = vmatprep.subr.mxu0 0.0
      %824 = vmatpush1.msra.mxu0 0.0
      %825 = vmatprep.subr.mxu0 0.0
      %826 = vmatpush1.msra.mxu0 0.0
      %827 = vmatprep.subr.mxu0 0.0
      %828 = vmatpush1.msra.mxu0 0.0
      %829 = vmatprep.subr.mxu0 0.0
      %830 = vmatpush1.msra.mxu0 0.0
      %831 = vmatprep.subr.mxu0 0.0
      %832 = vmatpush1.msra.mxu0 0.0
      %833 = vmatprep.subr.mxu0 0.0
      %834 = vmatpush1.msra.mxu0 0.0
      %835 = vmatprep.subr.mxu0 0.0
      %836 = vmatpush1.msra.mxu0 0.0
      %837 = vmatprep.subr.mxu0 0.0
      %838 = vmatpush1.msra.mxu0 0.0
      %839 = vmatprep.subr.mxu0 0.0
      %840 = vmatpush1.msra.mxu0 0.0
      %841 = vmatprep.subr.mxu0 0.0
      %842 = vmatpush1.msra.mxu0 0.0
      %843 = vmatprep.subr.mxu0 0.0
      %844 = vmatpush1.msra.mxu0 0.0
      %845 = vmatprep.subr.mxu0 0.0
      %846 = vmatpush1.msra.mxu0 0.0
      %847 = vmatprep.subr.mxu0 0.0
      %848 = vmatpush1.msra.mxu0 0.0
      %849 = vmatprep.subr.mxu0 0.0
      %850 = vmatpush1.msra.mxu0 0.0
      %851 = vmatprep.subr.mxu0 0.0
      %852 = vmatpush1.msra.mxu0 0.0
      %853 = vmatprep.subr.mxu0 0.0
      %854 = vmatpush1.msra.mxu0 0.0
      %855 = vmatprep.subr.mxu0 0.0
      %856 = vmatpush1.msra.mxu0 0.0
      %857 = vmatprep.mubr.f32.mxu0 0.0
      %858 = vmatmul.mubr.f32.gmra.mrb[0].mxu0 %v786
      %v859 = vpop.f32.mrb[0].mxu0
      %v860 = vadd.f32 0.0, %v859
      %v861 = vpop.f32.mrb[0].mxu0
      %862 = vmatprep.mubr.f32.mxu0 0.0
      %863 = vmatmul.mubr.f32.gmra.mrb[0].mxu0 %v789
      %v864 = vpop.f32.mrb[0].mxu0
      %v865 = vadd.f32 0.0, %v864
      %v866 = vpop.f32.mrb[0].mxu0
      %867 = vdwg.mxu0
      %v868 = vld [vmem:[%s5 + $0x8] sm:$0xff]
      %v870 = vsel %vm378, %v860, 0
      %v873 = vsel %vm378, %v865, 0
      %875 = vmatprep.subr.mxu0 0.0
      %876 = vmatpush1.msra.mxu0 %v868
      %877 = vmatprep.subr.mxu0 0.0
      %878 = vmatpush1.msra.mxu0 0.0
      %879 = vmatprep.subr.mxu0 0.0
      %880 = vmatpush1.msra.mxu0 0.0
      %881 = vmatprep.subr.mxu0 0.0
      %882 = vmatpush1.msra.mxu0 0.0
      %883 = vmatprep.subr.mxu0 0.0
      %884 = vmatpush1.msra.mxu0 0.0
      %885 = vmatprep.subr.mxu0 0.0
      %886 = vmatpush1.msra.mxu0 0.0
      %887 = vmatprep.subr.mxu0 0.0
      %888 = vmatpush1.msra.mxu0 0.0
      %889 = vmatprep.subr.mxu0 0.0
      %890 = vmatpush1.msra.mxu0 0.0
      %891 = vmatprep.subr.mxu0 0.0
      %892 = vmatpush1.msra.mxu0 0.0
      %893 = vmatprep.subr.mxu0 0.0
      %894 = vmatpush1.msra.mxu0 0.0
      %895 = vmatprep.subr.mxu0 0.0
      %896 = vmatpush1.msra.mxu0 0.0
      %897 = vmatprep.subr.mxu0 0.0
      %898 = vmatpush1.msra.mxu0 0.0
      %899 = vmatprep.subr.mxu0 0.0
      %900 = vmatpush1.msra.mxu0 0.0
      %901 = vmatprep.subr.mxu0 0.0
      %902 = vmatpush1.msra.mxu0 0.0
      %903 = vmatprep.subr.mxu0 0.0
      %904 = vmatpush1.msra.mxu0 0.0
      %905 = vmatprep.subr.mxu0 0.0
      %906 = vmatpush1.msra.mxu0 0.0
      %907 = vmatprep.subr.mxu0 0.0
      %908 = vmatpush1.msra.mxu0 0.0
      %909 = vmatprep.subr.mxu0 0.0
      %910 = vmatpush1.msra.mxu0 0.0
      %911 = vmatprep.subr.mxu0 0.0
      %912 = vmatpush1.msra.mxu0 0.0
      %913 = vmatprep.subr.mxu0 0.0
      %914 = vmatpush1.msra.mxu0 0.0
      %915 = vmatprep.subr.mxu0 0.0
      %916 = vmatpush1.msra.mxu0 0.0
      %917 = vmatprep.subr.mxu0 0.0
      %918 = vmatpush1.msra.mxu0 0.0
      %919 = vmatprep.subr.mxu0 0.0
      %920 = vmatpush1.msra.mxu0 0.0
      %921 = vmatprep.subr.mxu0 0.0
      %922 = vmatpush1.msra.mxu0 0.0
      %923 = vmatprep.subr.mxu0 0.0
      %924 = vmatpush1.msra.mxu0 0.0
      %925 = vmatprep.subr.mxu0 0.0
      %926 = vmatpush1.msra.mxu0 0.0
      %927 = vmatprep.subr.mxu0 0.0
      %928 = vmatpush1.msra.mxu0 0.0
      %929 = vmatprep.subr.mxu0 0.0
      %930 = vmatpush1.msra.mxu0 0.0
      %931 = vmatprep.subr.mxu0 0.0
      %932 = vmatpush1.msra.mxu0 0.0
      %933 = vmatprep.subr.mxu0 0.0
      %934 = vmatpush1.msra.mxu0 0.0
      %935 = vmatprep.subr.mxu0 0.0
      %936 = vmatpush1.msra.mxu0 0.0
      %937 = vmatprep.subr.mxu0 0.0
      %938 = vmatpush1.msra.mxu0 0.0
      %939 = vmatprep.mubr.f32.mxu0 0.0
      %940 = vmatmul.mubr.f32.gmra.mrb[0].mxu0 %v870
      %v941 = vpop.f32.mrb[0].mxu0
      %v942 = vadd.f32 0.0, %v941
      %v943 = vpop.f32.mrb[0].mxu0
      %944 = vmatprep.mubr.f32.mxu0 0.0
      %945 = vmatmul.mubr.f32.gmra.mrb[0].mxu0 %v873
      %v946 = vpop.f32.mrb[0].mxu0
      %v947 = vadd.f32 0.0, %v946
      %v948 = vpop.f32.mrb[0].mxu0
      %949 = vdwg.mxu0
      %v950 = vadd.f32 %v659, %v942
      %v951 = vadd.f32 %v660, %v947
      %s952 = scalar_lea.vmem %s348, 32
      %v953 = vld [vmem:[%s952] sm:$0xff]
      %v954 = vld [vmem:[%s952 + $0x8] sm:$0x1]
      %955 = vrot.lane.b32.xlu0 %v359, 112
      %v956 = vpop.permute.xlu0 %955
      %957 = vrot.lane.b32.xlu0 %v360, 112
      %v958 = vpop.permute.xlu0 %957
      %959 = vrot.lane.b32.xlu0 %v361, 112
      %v960 = vpop.permute.xlu0 %959
      %961 = vrot.lane.b32.xlu0 %v362, 112
      %v962 = vpop.permute.xlu0 %961
      %v963 = vsel %vm378, %v956, 0
      %v965 = vsel %vm378, %v958, 0
      %v967 = vsel %vm378, %v960, 0
      %v969 = vsel %vm378, %v962, 0
      %971 = vmatprep.subr.mxu0 0.0
      %972 = vmatpush1.xpose.msra.mxu0 %v967
      %973 = vmatprep.subr.mxu0 0.0
      %974 = vmatpush1.xpose.msra.mxu0 %v969
      %975 = vmatprep.subr.mxu0 0.0
      %976 = vmatpush1.xpose.msra.mxu0 0.0
      %977 = vmatprep.subr.mxu0 0.0
      %978 = vmatpush1.xpose.msra.mxu0 0.0
      %979 = vmatprep.subr.mxu0 0.0
      %980 = vmatpush1.xpose.msra.mxu0 0.0
      %981 = vmatprep.subr.mxu0 0.0
      %982 = vmatpush1.xpose.msra.mxu0 0.0
      %983 = vmatprep.subr.mxu0 0.0
      %984 = vmatpush1.xpose.msra.mxu0 0.0
      %985 = vmatprep.subr.mxu0 0.0
      %986 = vmatpush1.xpose.msra.mxu0 0.0
      %987 = vmatprep.subr.mxu0 0.0
      %988 = vmatpush1.xpose.msra.mxu0 0.0
      %989 = vmatprep.subr.mxu0 0.0
      %990 = vmatpush1.xpose.msra.mxu0 0.0
      %991 = vmatprep.subr.mxu0 0.0
      %992 = vmatpush1.xpose.msra.mxu0 0.0
      %993 = vmatprep.subr.mxu0 0.0
      %994 = vmatpush1.xpose.msra.mxu0 0.0
      %995 = vmatprep.subr.mxu0 0.0
      %996 = vmatpush1.xpose.msra.mxu0 0.0
      %997 = vmatprep.subr.mxu0 0.0
      %998 = vmatpush1.xpose.msra.mxu0 0.0
      %999 = vmatprep.subr.mxu0 0.0
      %1000 = vmatpush1.xpose.msra.mxu0 0.0
      %1001 = vmatprep.subr.mxu0 0.0
      %1002 = vmatpush1.xpose.msra.mxu0 0.0
      %1003 = vmatprep.subr.mxu0 0.0
      %1004 = vmatpush1.xpose.msra.mxu0 0.0
      %1005 = vmatprep.subr.mxu0 0.0
      %1006 = vmatpush1.xpose.msra.mxu0 0.0
      %1007 = vmatprep.subr.mxu0 0.0
      %1008 = vmatpush1.xpose.msra.mxu0 0.0
      %1009 = vmatprep.subr.mxu0 0.0
      %1010 = vmatpush1.xpose.msra.mxu0 0.0
      %1011 = vmatprep.subr.mxu0 0.0
      %1012 = vmatpush1.xpose.msra.mxu0 0.0
      %1013 = vmatprep.subr.mxu0 0.0
      %1014 = vmatpush1.xpose.msra.mxu0 0.0
      %1015 = vmatprep.subr.mxu0 0.0
      %1016 = vmatpush1.xpose.msra.mxu0 0.0
      %1017 = vmatprep.subr.mxu0 0.0
      %1018 = vmatpush1.xpose.msra.mxu0 0.0
      %1019 = vmatprep.subr.mxu0 0.0
      %1020 = vmatpush1.xpose.msra.mxu0 0.0
      %1021 = vmatprep.subr.mxu0 0.0
      %1022 = vmatpush1.xpose.msra.mxu0 0.0
      %1023 = vmatprep.subr.mxu0 0.0
      %1024 = vmatpush1.xpose.msra.mxu0 0.0
      %1025 = vmatprep.subr.mxu0 0.0
      %1026 = vmatpush1.xpose.msra.mxu0 0.0
      %1027 = vmatprep.subr.mxu0 0.0
      %1028 = vmatpush1.xpose.msra.mxu0 0.0
      %1029 = vmatprep.subr.mxu0 0.0
      %1030 = vmatpush1.xpose.msra.mxu0 0.0
      %1031 = vmatprep.subr.mxu0 0.0
      %1032 = vmatpush1.xpose.msra.mxu0 0.0
      %1033 = vmatprep.subr.mxu0 0.0
      %1034 = vmatpush1.xpose.msra.mxu0 0.0
      %1035 = vmatprep.mubr.f32.mxu0 0.0
      %1036 = vmatmul.mubr.f32.gmra.mrb[0].mxu0 %v963
      %v1037 = vpop.f32.mrb[0].mxu0
      %v1038 = vadd.f32 %v953, %v1037
      %v1039 = vpop.f32.mrb[0].mxu0
      %1040 = vmatprep.mubr.f32.mxu0 0.0
      %1041 = vmatmul.mubr.f32.gmra.mrb[0].mxu0 %v965
      %v1042 = vpop.f32.mrb[0].mxu0
      %v1043 = vadd.f32 %v954, %v1042
      %v1044 = vpop.f32.mrb[0].mxu0
      %1045 = vdwg.mxu0
      %v1046 = vmul.f32 %v1038, 0.35355338
      %v1047 = vmul.f32 %v1043, 0.35355338
      %v1048 = vsel %vm468, %v1046, -inf
      %1049 = vmax.xlane.f32.xlu0 %v1048
      %v1050 = vpop.xlane.xlu0 %1049
      %v1051 = vsel %vm472, %v1047, -inf
      %1052 = vmax.xlane.f32.xlu0 %v1051
      %v1053 = vpop.xlane.xlu0 %1052
      %v1054 = vsub.f32 %v1046, %v1050
      %v1055 = vsub.f32 %v1047, %v1053
      %v1056 = vmul.f32 %v1054, 1.442695
      %v1057 = vpow.pop %v1056
      %v1058 = vmul.f32 %v1055, 1.442695
      %v1059 = vpow.pop %v1058
      %v1060 = vsel %vm468, %v1057, 0.0
      %1061 = vadd.xlane.f32.xlu0 %v1060
      %v1062 = vpop.xlane.xlu0 %1061
      %v1063 = vsel %vm472, %v1059, 0.0
      %1064 = vadd.xlane.f32.xlu0 %v1063
      %v1065 = vpop.xlane.xlu0 %1064
      %v1066 = vrcp.pop %v1062
      %v1067 = vrcp.pop %v1065
      %v1068 = vmul.f32 %v1057, %v1066
      %v1069 = vmul.f32 %v1059, %v1067
      %1070 = vrot.lane.b32.xlu0 %v363, 112
      %v1071 = vpop.permute.xlu0 %1070
      %1072 = vrot.lane.b32.xlu0 %v364, 112
      %v1073 = vpop.permute.xlu0 %1072
      %v1076 = vsel %vm468, %v1068, 0
      %v1079 = vsel %vm468, %v1069, 0
      %v1081 = vsel %vm498, %v1073, 0
      %1083 = vmatprep.subr.mxu0 0.0
      %1084 = vmatpush1.msra.mxu0 %v1071
      %1085 = vmatprep.subr.mxu0 0.0
      %1086 = vmatpush1.msra.mxu0 %v1081
      %1087 = vmatprep.subr.mxu0 0.0
      %1088 = vmatpush1.msra.mxu0 0.0
      %1089 = vmatprep.subr.mxu0 0.0
      %1090 = vmatpush1.msra.mxu0 0.0
      %1091 = vmatprep.subr.mxu0 0.0
      %1092 = vmatpush1.msra.mxu0 0.0
      %1093 = vmatprep.subr.mxu0 0.0
      %1094 = vmatpush1.msra.mxu0 0.0
      %1095 = vmatprep.subr.mxu0 0.0
      %1096 = vmatpush1.msra.mxu0 0.0
      %1097 = vmatprep.subr.mxu0 0.0
      %1098 = vmatpush1.msra.mxu0 0.0
      %1099 = vmatprep.subr.mxu0 0.0
      %1100 = vmatpush1.msra.mxu0 0.0
      %1101 = vmatprep.subr.mxu0 0.0
      %1102 = vmatpush1.msra.mxu0 0.0
      %1103 = vmatprep.subr.mxu0 0.0
      %1104 = vmatpush1.msra.mxu0 0.0
      %1105 = vmatprep.subr.mxu0 0.0
      %1106 = vmatpush1.msra.mxu0 0.0
      %1107 = vmatprep.subr.mxu0 0.0
      %1108 = vmatpush1.msra.mxu0 0.0
      %1109 = vmatprep.subr.mxu0 0.0
      %1110 = vmatpush1.msra.mxu0 0.0
      %1111 = vmatprep.subr.mxu0 0.0
      %1112 = vmatpush1.msra.mxu0 0.0
      %1113 = vmatprep.subr.mxu0 0.0
      %1114 = vmatpush1.msra.mxu0 0.0
      %1115 = vmatprep.subr.mxu0 0.0
      %1116 = vmatpush1.msra.mxu0 0.0
      %1117 = vmatprep.subr.mxu0 0.0
      %1118 = vmatpush1.msra.mxu0 0.0
      %1119 = vmatprep.subr.mxu0 0.0
      %1120 = vmatpush1.msra.mxu0 0.0
      %1121 = vmatprep.subr.mxu0 0.0
      %1122 = vmatpush1.msra.mxu0 0.0
      %1123 = vmatprep.subr.mxu0 0.0
      %1124 = vmatpush1.msra.mxu0 0.0
      %1125 = vmatprep.subr.mxu0 0.0
      %1126 = vmatpush1.msra.mxu0 0.0
      %1127 = vmatprep.subr.mxu0 0.0
      %1128 = vmatpush1.msra.mxu0 0.0
      %1129 = vmatprep.subr.mxu0 0.0
      %1130 = vmatpush1.msra.mxu0 0.0
      %1131 = vmatprep.subr.mxu0 0.0
      %1132 = vmatpush1.msra.mxu0 0.0
      %1133 = vmatprep.subr.mxu0 0.0
      %1134 = vmatpush1.msra.mxu0 0.0
      %1135 = vmatprep.subr.mxu0 0.0
      %1136 = vmatpush1.msra.mxu0 0.0
      %1137 = vmatprep.subr.mxu0 0.0
      %1138 = vmatpush1.msra.mxu0 0.0
      %1139 = vmatprep.subr.mxu0 0.0
      %1140 = vmatpush1.msra.mxu0 0.0
      %1141 = vmatprep.subr.mxu0 0.0
      %1142 = vmatpush1.msra.mxu0 0.0
      %1143 = vmatprep.subr.mxu0 0.0
      %1144 = vmatpush1.msra.mxu0 0.0
      %1145 = vmatprep.subr.mxu0 0.0
      %1146 = vmatpush1.msra.mxu0 0.0
      %1147 = vmatprep.mubr.f32.mxu0 0.0
      %1148 = vmatmul.mubr.f32.gmra.mrb[0].mxu0 %v1076
      %v1149 = vpop.f32.mrb[0].mxu0
      %v1150 = vadd.f32 0.0, %v1149
      %v1151 = vpop.f32.mrb[0].mxu0
      %1152 = vmatprep.mubr.f32.mxu0 0.0
      %1153 = vmatmul.mubr.f32.gmra.mrb[0].mxu0 %v1079
      %v1154 = vpop.f32.mrb[0].mxu0
      %v1155 = vadd.f32 0.0, %v1154
      %v1156 = vpop.f32.mrb[0].mxu0
      %1157 = vdwg.mxu0
      %v1158 = vld [vmem:[%s5 + $0x10] sm:$0xff]
      %v1160 = vsel %vm378, %v1150, 0
      %v1163 = vsel %vm378, %v1155, 0
      %1165 = vmatprep.subr.mxu0 0.0
      %1166 = vmatpush1.msra.mxu0 %v1158
      %1167 = vmatprep.subr.mxu0 0.0
      %1168 = vmatpush1.msra.mxu0 0.0
      %1169 = vmatprep.subr.mxu0 0.0
      %1170 = vmatpush1.msra.mxu0 0.0
      %1171 = vmatprep.subr.mxu0 0.0
      %1172 = vmatpush1.msra.mxu0 0.0
      %1173 = vmatprep.subr.mxu0 0.0
      %1174 = vmatpush1.msra.mxu0 0.0
      %1175 = vmatprep.subr.mxu0 0.0
      %1176 = vmatpush1.msra.mxu0 0.0
      %1177 = vmatprep.subr.mxu0 0.0
      %1178 = vmatpush1.msra.mxu0 0.0
      %1179 = vmatprep.subr.mxu0 0.0
      %1180 = vmatpush1.msra.mxu0 0.0
      %1181 = vmatprep.subr.mxu0 0.0
      %1182 = vmatpush1.msra.mxu0 0.0
      %1183 = vmatprep.subr.mxu0 0.0
      %1184 = vmatpush1.msra.mxu0 0.0
      %1185 = vmatprep.subr.mxu0 0.0
      %1186 = vmatpush1.msra.mxu0 0.0
      %1187 = vmatprep.subr.mxu0 0.0
      %1188 = vmatpush1.msra.mxu0 0.0
      %1189 = vmatprep.subr.mxu0 0.0
      %1190 = vmatpush1.msra.mxu0 0.0
      %1191 = vmatprep.subr.mxu0 0.0
      %1192 = vmatpush1.msra.mxu0 0.0
      %1193 = vmatprep.subr.mxu0 0.0
      %1194 = vmatpush1.msra.mxu0 0.0
      %1195 = vmatprep.subr.mxu0 0.0
      %1196 = vmatpush1.msra.mxu0 0.0
      %1197 = vmatprep.subr.mxu0 0.0
      %1198 = vmatpush1.msra.mxu0 0.0
      %1199 = vmatprep.subr.mxu0 0.0
      %1200 = vmatpush1.msra.mxu0 0.0
      %1201 = vmatprep.subr.mxu0 0.0
      %1202 = vmatpush1.msra.mxu0 0.0
      %1203 = vmatprep.subr.mxu0 0.0
      %1204 = vmatpush1.msra.mxu0 0.0
      %1205 = vmatprep.subr.mxu0 0.0
      %1206 = vmatpush1.msra.mxu0 0.0
      %1207 = vmatprep.subr.mxu0 0.0
      %1208 = vmatpush1.msra.mxu0 0.0
      %1209 = vmatprep.subr.mxu0 0.0
      %1210 = vmatpush1.msra.mxu0 0.0
      %1211 = vmatprep.subr.mxu0 0.0
      %1212 = vmatpush1.msra.mxu0 0.0
      %1213 = vmatprep.subr.mxu0 0.0
      %1214 = vmatpush1.msra.mxu0 0.0
      %1215 = vmatprep.subr.mxu0 0.0
      %1216 = vmatpush1.msra.mxu0 0.0
      %1217 = vmatprep.subr.mxu0 0.0
      %1218 = vmatpush1.msra.mxu0 0.0
      %1219 = vmatprep.subr.mxu0 0.0
      %1220 = vmatpush1.msra.mxu0 0.0
      %1221 = vmatprep.subr.mxu0 0.0
      %1222 = vmatpush1.msra.mxu0 0.0
      %1223 = vmatprep.subr.mxu0 0.0
      %1224 = vmatpush1.msra.mxu0 0.0
      %1225 = vmatprep.subr.mxu0 0.0
      %1226 = vmatpush1.msra.mxu0 0.0
      %1227 = vmatprep.subr.mxu0 0.0
      %1228 = vmatpush1.msra.mxu0 0.0
      %1229 = vmatprep.mubr.f32.mxu0 0.0
      %1230 = vmatmul.mubr.f32.gmra.mrb[0].mxu0 %v1160
      %v1231 = vpop.f32.mrb[0].mxu0
      %v1232 = vadd.f32 0.0, %v1231
      %v1233 = vpop.f32.mrb[0].mxu0
      %1234 = vmatprep.mubr.f32.mxu0 0.0
      %1235 = vmatmul.mubr.f32.gmra.mrb[0].mxu0 %v1163
      %v1236 = vpop.f32.mrb[0].mxu0
      %v1237 = vadd.f32 0.0, %v1236
      %v1238 = vpop.f32.mrb[0].mxu0
      %1239 = vdwg.mxu0
      %v1240 = vadd.f32 %v950, %v1232
      %v1241 = vadd.f32 %v951, %v1237
      %s1242 = scalar_lea.vmem %s348, 48
      %v1243 = vld [vmem:[%s1242] sm:$0xff]
      %v1244 = vld [vmem:[%s1242 + $0x8] sm:$0x1]
      %1245 = vrot.lane.b32.xlu0 %v359, 104
      %v1246 = vpop.permute.xlu0 %1245
      %1247 = vrot.lane.b32.xlu0 %v360, 104
      %v1248 = vpop.permute.xlu0 %1247
      %1249 = vrot.lane.b32.xlu0 %v361, 104
      %v1250 = vpop.permute.xlu0 %1249
      %1251 = vrot.lane.b32.xlu0 %v362, 104
      %v1252 = vpop.permute.xlu0 %1251
      %v1253 = vsel %vm378, %v1246, 0
      %v1255 = vsel %vm378, %v1248, 0
      %v1257 = vsel %vm378, %v1250, 0
      %v1259 = vsel %vm378, %v1252, 0
      %1261 = vmatprep.subr.mxu0 0.0
      %1262 = vmatpush1.xpose.msra.mxu0 %v1257
      %1263 = vmatprep.subr.mxu0 0.0
      %1264 = vmatpush1.xpose.msra.mxu0 %v1259
      %1265 = vmatprep.subr.mxu0 0.0
      %1266 = vmatpush1.xpose.msra.mxu0 0.0
      %1267 = vmatprep.subr.mxu0 0.0
      %1268 = vmatpush1.xpose.msra.mxu0 0.0
      %1269 = vmatprep.subr.mxu0 0.0
      %1270 = vmatpush1.xpose.msra.mxu0 0.0
      %1271 = vmatprep.subr.mxu0 0.0
      %1272 = vmatpush1.xpose.msra.mxu0 0.0
      %1273 = vmatprep.subr.mxu0 0.0
      %1274 = vmatpush1.xpose.msra.mxu0 0.0
      %1275 = vmatprep.subr.mxu0 0.0
      %1276 = vmatpush1.xpose.msra.mxu0 0.0
      %1277 = vmatprep.subr.mxu0 0.0
      %1278 = vmatpush1.xpose.msra.mxu0 0.0
      %1279 = vmatprep.subr.mxu0 0.0
      %1280 = vmatpush1.xpose.msra.mxu0 0.0
      %1281 = vmatprep.subr.mxu0 0.0
      %1282 = vmatpush1.xpose.msra.mxu0 0.0
      %1283 = vmatprep.subr.mxu0 0.0
      %1284 = vmatpush1.xpose.msra.mxu0 0.0
      %1285 = vmatprep.subr.mxu0 0.0
      %1286 = vmatpush1.xpose.msra.mxu0 0.0
      %1287 = vmatprep.subr.mxu0 0.0
      %1288 = vmatpush1.xpose.msra.mxu0 0.0
      %1289 = vmatprep.subr.mxu0 0.0
      %1290 = vmatpush1.xpose.msra.mxu0 0.0
      %1291 = vmatprep.subr.mxu0 0.0
      %1292 = vmatpush1.xpose.msra.mxu0 0.0
      %1293 = vmatprep.subr.mxu0 0.0
      %1294 = vmatpush1.xpose.msra.mxu0 0.0
      %1295 = vmatprep.subr.mxu0 0.0
      %1296 = vmatpush1.xpose.msra.mxu0 0.0
      %1297 = vmatprep.subr.mxu0 0.0
      %1298 = vmatpush1.xpose.msra.mxu0 0.0
      %1299 = vmatprep.subr.mxu0 0.0
      %1300 = vmatpush1.xpose.msra.mxu0 0.0
      %1301 = vmatprep.subr.mxu0 0.0
      %1302 = vmatpush1.xpose.msra.mxu0 0.0
      %1303 = vmatprep.subr.mxu0 0.0
      %1304 = vmatpush1.xpose.msra.mxu0 0.0
      %1305 = vmatprep.subr.mxu0 0.0
      %1306 = vmatpush1.xpose.msra.mxu0 0.0
      %1307 = vmatprep.subr.mxu0 0.0
      %1308 = vmatpush1.xpose.msra.mxu0 0.0
      %1309 = vmatprep.subr.mxu0 0.0
      %1310 = vmatpush1.xpose.msra.mxu0 0.0
      %1311 = vmatprep.subr.mxu0 0.0
      %1312 = vmatpush1.xpose.msra.mxu0 0.0
      %1313 = vmatprep.subr.mxu0 0.0
      %1314 = vmatpush1.xpose.msra.mxu0 0.0
      %1315 = vmatprep.subr.mxu0 0.0
      %1316 = vmatpush1.xpose.msra.mxu0 0.0
      %1317 = vmatprep.subr.mxu0 0.0
      %1318 = vmatpush1.xpose.msra.mxu0 0.0
      %1319 = vmatprep.subr.mxu0 0.0
      %1320 = vmatpush1.xpose.msra.mxu0 0.0
      %1321 = vmatprep.subr.mxu0 0.0
      %1322 = vmatpush1.xpose.msra.mxu0 0.0
      %1323 = vmatprep.subr.mxu0 0.0
      %1324 = vmatpush1.xpose.msra.mxu0 0.0
      %1325 = vmatprep.mubr.f32.mxu0 0.0
      %1326 = vmatmul.mubr.f32.gmra.mrb[0].mxu0 %v1253
      %v1327 = vpop.f32.mrb[0].mxu0
      %v1328 = vadd.f32 %v1243, %v1327
      %v1329 = vpop.f32.mrb[0].mxu0
      %1330 = vmatprep.mubr.f32.mxu0 0.0
      %1331 = vmatmul.mubr.f32.gmra.mrb[0].mxu0 %v1255
      %v1332 = vpop.f32.mrb[0].mxu0
      %v1333 = vadd.f32 %v1244, %v1332
      %v1334 = vpop.f32.mrb[0].mxu0
      %1335 = vdwg.mxu0
      %v1336 = vmul.f32 %v1328, 0.35355338
      %v1337 = vmul.f32 %v1333, 0.35355338
      %v1338 = vsel %vm468, %v1336, -inf
      %1339 = vmax.xlane.f32.xlu0 %v1338
      %v1340 = vpop.xlane.xlu0 %1339
      %v1341 = vsel %vm472, %v1337, -inf
      %1342 = vmax.xlane.f32.xlu0 %v1341
      %v1343 = vpop.xlane.xlu0 %1342
      %v1344 = vsub.f32 %v1336, %v1340
      %v1345 = vsub.f32 %v1337, %v1343
      %v1346 = vmul.f32 %v1344, 1.442695
      %v1347 = vpow.pop %v1346
      %v1348 = vmul.f32 %v1345, 1.442695
      %v1349 = vpow.pop %v1348
      %v1350 = vsel %vm468, %v1347, 0.0
      %1351 = vadd.xlane.f32.xlu0 %v1350
      %v1352 = vpop.xlane.xlu0 %1351
      %v1353 = vsel %vm472, %v1349, 0.0
      %1354 = vadd.xlane.f32.xlu0 %v1353
      %v1355 = vpop.xlane.xlu0 %1354
      %v1356 = vrcp.pop %v1352
      %v1357 = vrcp.pop %v1355
      %v1358 = vmul.f32 %v1347, %v1356
      %v1359 = vmul.f32 %v1349, %v1357
      %1360 = vrot.lane.b32.xlu0 %v363, 104
      %v1361 = vpop.permute.xlu0 %1360
      %1362 = vrot.lane.b32.xlu0 %v364, 104
      %v1363 = vpop.permute.xlu0 %1362
      %v1366 = vsel %vm468, %v1358, 0
      %v1369 = vsel %vm468, %v1359, 0
      %v1371 = vsel %vm498, %v1363, 0
      %1373 = vmatprep.subr.mxu0 0.0
      %1374 = vmatpush1.msra.mxu0 %v1361
      %1375 = vmatprep.subr.mxu0 0.0
      %1376 = vmatpush1.msra.mxu0 %v1371
      %1377 = vmatprep.subr.mxu0 0.0
      %1378 = vmatpush1.msra.mxu0 0.0
      %1379 = vmatprep.subr.mxu0 0.0
      %1380 = vmatpush1.msra.mxu0 0.0
      %1381 = vmatprep.subr.mxu0 0.0
      %1382 = vmatpush1.msra.mxu0 0.0
      %1383 = vmatprep.subr.mxu0 0.0
      %1384 = vmatpush1.msra.mxu0 0.0
      %1385 = vmatprep.subr.mxu0 0.0
      %1386 = vmatpush1.msra.mxu0 0.0
      %1387 = vmatprep.subr.mxu0 0.0
      %1388 = vmatpush1.msra.mxu0 0.0
      %1389 = vmatprep.subr.mxu0 0.0
      %1390 = vmatpush1.msra.mxu0 0.0
      %1391 = vmatprep.subr.mxu0 0.0
      %1392 = vmatpush1.msra.mxu0 0.0
      %1393 = vmatprep.subr.mxu0 0.0
      %1394 = vmatpush1.msra.mxu0 0.0
      %1395 = vmatprep.subr.mxu0 0.0
      %1396 = vmatpush1.msra.mxu0 0.0
      %1397 = vmatprep.subr.mxu0 0.0
      %1398 = vmatpush1.msra.mxu0 0.0
      %1399 = vmatprep.subr.mxu0 0.0
      %1400 = vmatpush1.msra.mxu0 0.0
      %1401 = vmatprep.subr.mxu0 0.0
      %1402 = vmatpush1.msra.mxu0 0.0
      %1403 = vmatprep.subr.mxu0 0.0
      %1404 = vmatpush1.msra.mxu0 0.0
      %1405 = vmatprep.subr.mxu0 0.0
      %1406 = vmatpush1.msra.mxu0 0.0
      %1407 = vmatprep.subr.mxu0 0.0
      %1408 = vmatpush1.msra.mxu0 0.0
      %1409 = vmatprep.subr.mxu0 0.0
      %1410 = vmatpush1.msra.mxu0 0.0
      %1411 = vmatprep.subr.mxu0 0.0
      %1412 = vmatpush1.msra.mxu0 0.0
      %1413 = vmatprep.subr.mxu0 0.0
      %1414 = vmatpush1.msra.mxu0 0.0
      %1415 = vmatprep.subr.mxu0 0.0
      %1416 = vmatpush1.msra.mxu0 0.0
      %1417 = vmatprep.subr.mxu0 0.0
      %1418 = vmatpush1.msra.mxu0 0.0
      %1419 = vmatprep.subr.mxu0 0.0
      %1420 = vmatpush1.msra.mxu0 0.0
      %1421 = vmatprep.subr.mxu0 0.0
      %1422 = vmatpush1.msra.mxu0 0.0
      %1423 = vmatprep.subr.mxu0 0.0
      %1424 = vmatpush1.msra.mxu0 0.0
      %1425 = vmatprep.subr.mxu0 0.0
      %1426 = vmatpush1.msra.mxu0 0.0
      %1427 = vmatprep.subr.mxu0 0.0
      %1428 = vmatpush1.msra.mxu0 0.0
      %1429 = vmatprep.subr.mxu0 0.0
      %1430 = vmatpush1.msra.mxu0 0.0
      %1431 = vmatprep.subr.mxu0 0.0
      %1432 = vmatpush1.msra.mxu0 0.0
      %1433 = vmatprep.subr.mxu0 0.0
      %1434 = vmatpush1.msra.mxu0 0.0
      %1435 = vmatprep.subr.mxu0 0.0
      %1436 = vmatpush1.msra.mxu0 0.0
      %1437 = vmatprep.mubr.f32.mxu0 0.0
      %1438 = vmatmul.mubr.f32.gmra.mrb[0].mxu0 %v1366
      %v1439 = vpop.f32.mrb[0].mxu0
      %v1440 = vadd.f32 0.0, %v1439
      %v1441 = vpop.f32.mrb[0].mxu0
      %1442 = vmatprep.mubr.f32.mxu0 0.0
      %1443 = vmatmul.mubr.f32.gmra.mrb[0].mxu0 %v1369
      %v1444 = vpop.f32.mrb[0].mxu0
      %v1445 = vadd.f32 0.0, %v1444
      %v1446 = vpop.f32.mrb[0].mxu0
      %1447 = vdwg.mxu0
      %v1448 = vld [vmem:[%s5 + $0x18] sm:$0xff]
      %v1450 = vsel %vm378, %v1440, 0
      %v1453 = vsel %vm378, %v1445, 0
      %1455 = vmatprep.subr.mxu0 0.0
      %1456 = vmatpush1.msra.mxu0 %v1448
      %1457 = vmatprep.subr.mxu0 0.0
      %1458 = vmatpush1.msra.mxu0 0.0
      %1459 = vmatprep.subr.mxu0 0.0
      %1460 = vmatpush1.msra.mxu0 0.0
      %1461 = vmatprep.subr.mxu0 0.0
      %1462 = vmatpush1.msra.mxu0 0.0
      %1463 = vmatprep.subr.mxu0 0.0
      %1464 = vmatpush1.msra.mxu0 0.0
      %1465 = vmatprep.subr.mxu0 0.0
      %1466 = vmatpush1.msra.mxu0 0.0
      %1467 = vmatprep.subr.mxu0 0.0
      %1468 = vmatpush1.msra.mxu0 0.0
      %1469 = vmatprep.subr.mxu0 0.0
      %1470 = vmatpush1.msra.mxu0 0.0
      %1471 = vmatprep.subr.mxu0 0.0
      %1472 = vmatpush1.msra.mxu0 0.0
      %1473 = vmatprep.subr.mxu0 0.0
      %1474 = vmatpush1.msra.mxu0 0.0
      %1475 = vmatprep.subr.mxu0 0.0
      %1476 = vmatpush1.msra.mxu0 0.0
      %1477 = vmatprep.subr.mxu0 0.0
      %1478 = vmatpush1.msra.mxu0 0.0
      %1479 = vmatprep.subr.mxu0 0.0
      %1480 = vmatpush1.msra.mxu0 0.0
      %1481 = vmatprep.subr.mxu0 0.0
      %1482 = vmatpush1.msra.mxu0 0.0
      %1483 = vmatprep.subr.mxu0 0.0
      %1484 = vmatpush1.msra.mxu0 0.0
      %1485 = vmatprep.subr.mxu0 0.0
      %1486 = vmatpush1.msra.mxu0 0.0
      %1487 = vmatprep.subr.mxu0 0.0
      %1488 = vmatpush1.msra.mxu0 0.0
      %1489 = vmatprep.subr.mxu0 0.0
      %1490 = vmatpush1.msra.mxu0 0.0
      %1491 = vmatprep.subr.mxu0 0.0
      %1492 = vmatpush1.msra.mxu0 0.0
      %1493 = vmatprep.subr.mxu0 0.0
      %1494 = vmatpush1.msra.mxu0 0.0
      %1495 = vmatprep.subr.mxu0 0.0
      %1496 = vmatpush1.msra.mxu0 0.0
      %1497 = vmatprep.subr.mxu0 0.0
      %1498 = vmatpush1.msra.mxu0 0.0
      %1499 = vmatprep.subr.mxu0 0.0
      %1500 = vmatpush1.msra.mxu0 0.0
      %1501 = vmatprep.subr.mxu0 0.0
      %1502 = vmatpush1.msra.mxu0 0.0
      %1503 = vmatprep.subr.mxu0 0.0
      %1504 = vmatpush1.msra.mxu0 0.0
      %1505 = vmatprep.subr.mxu0 0.0
      %1506 = vmatpush1.msra.mxu0 0.0
      %1507 = vmatprep.subr.mxu0 0.0
      %1508 = vmatpush1.msra.mxu0 0.0
      %1509 = vmatprep.subr.mxu0 0.0
      %1510 = vmatpush1.msra.mxu0 0.0
      %1511 = vmatprep.subr.mxu0 0.0
      %1512 = vmatpush1.msra.mxu0 0.0
      %1513 = vmatprep.subr.mxu0 0.0
      %1514 = vmatpush1.msra.mxu0 0.0
      %1515 = vmatprep.subr.mxu0 0.0
      %1516 = vmatpush1.msra.mxu0 0.0
      %1517 = vmatprep.subr.mxu0 0.0
      %1518 = vmatpush1.msra.mxu0 0.0
      %1519 = vmatprep.mubr.f32.mxu0 0.0
      %1520 = vmatmul.mubr.f32.gmra.mrb[0].mxu0 %v1450
      %v1521 = vpop.f32.mrb[0].mxu0
      %v1522 = vadd.f32 0.0, %v1521
      %v1523 = vpop.f32.mrb[0].mxu0
      %1524 = vmatprep.mubr.f32.mxu0 0.0
      %1525 = vmatmul.mubr.f32.gmra.mrb[0].mxu0 %v1453
      %v1526 = vpop.f32.mrb[0].mxu0
      %v1527 = vadd.f32 0.0, %v1526
      %v1528 = vpop.f32.mrb[0].mxu0
      %1529 = vdwg.mxu0
      %v1530 = vadd.f32 %v1240, %v1522
      %v1531 = vadd.f32 %v1241, %v1527
      %vm1532 = vcmask 261120
      %1533 = vst.msk [vmem:[%s358] sm:$0xff] %vm1532, %v1530
      %vm1534 = vcmask 253952
      %1535 = vst.msk [vmem:[%s358 + $0x8] sm:$0x1] %vm1534, %v1531
      %p1536 = scmp.lt.s32.totalorder %s18, 1
      %s1537 = scalar_select %p1536, %s18, 1
      %s1538 = smul.addr %s1537, 2
      %s1539 = smul.addr %s1538, 8
      %s1540 = scalar_lea.vmem %s7, %s1539
      // Predicated region
      $region49: #{xlsr_conformer_forward.12} parent=47 // pred_check
        %p1541 = pneg %p208
      $region50: #{xlsr_conformer_forward.12} parent=47 // pred_check_branch
        %1543 = sbr.rel (%p1541) target = $region52
      $region51: #{xlsr_conformer_forward.12} parent=47 // pred_region
        _
      $region52: #{xlsr_conformer_forward.12} parent=47 // pred_fallthru
        _
    $region48: #{xlsr_conformer_forward.12} parent=5 // pred_fallthru
      _
    %p1544 = scmp.le.s32.totalorder 2, %s13
    // Predicated region
    $region53: #{xlsr_conformer_forward.12} parent=5 // pred_check
      %p1545 = pneg %p1544
    $region54: #{xlsr_conformer_forward.12} parent=5 // pred_check_branch
      %1547 = sbr.rel (%p1545) target = $region56
    $region55: #{xlsr_conformer_forward.12} parent=5 // pred_region
      %s1548 = ssub.s32 %s13, 2
      // Predicated region
      $region57: #{xlsr_conformer_forward.12} parent=55 // pred_check
        %p1549 = pneg %p214
      $region58: #{xlsr_conformer_forward.12} parent=55 // pred_check_branch
        %1551 = sbr.rel (%p1549) target = $region60
      $region59: #{xlsr_conformer_forward.12} parent=55 // pred_region
        %p1552 = scmp.lt.s32.totalorder %s19, 1
        %s1553 = scalar_select %p1552, %s19, 1
        %s1554 = smul.addr %s1553, 2
        %s1555 = smul.addr %s1554, 8
        %s1556 = scalar_lea.vmem %s7, %s1555
      $region60: #{xlsr_conformer_forward.12} parent=55 // pred_fallthru
        _
    $region56: #{xlsr_conformer_forward.12} parent=5 // pred_fallthru
      _
  $region6: #{xlsr_conformer_forward.12} parent=0 // loop_footer
    %s17 = sadd.s32 1, %s13
  $region7: #{xlsr_conformer_forward.12} parent=0 // loop_footer_branch
    %12 = sbr.rel target = $region3
  $region8: #{xlsr_conformer_forward.12} parent=0 // loop_exit
    _

// kernel: xlsr_conformer_forward.19
$region0: #{xlsr_conformer_forward.19}
  #allocation0 [shape = 'u32[]', space=smem, size = 0x4, offset = 0x4, fixed_abs, tag = 'smem constant byte address 0x4 - core index']
  #allocation1 [shape = 'u32[144,128]{1,0:T(1,128)}', space=vmem, size = 0x12000, scoped, tag = 'internal scratch']
  %s0 = inlined_call_operand.vmem [shape: f32[2,32], index: 0, kind: input, shape index: {}]
  %s1 = inlined_call_operand.vmem [shape: f32[32,2], index: 1, kind: input, shape index: {}]
  %s2 = inlined_call_operand.vmem [shape: f32[1,2], index: 2, kind: input, shape index: {}]
  %s3 = inlined_call_operand.hbm [shape: f32[2,2], index: 3, kind: output, shape index: {}]
  %s4 = sld [smem:[#allocation0]]
  $region22: #{xlsr_conformer_forward.19} parent=0
    _
  %s6 = ssub.s32 1, %s4
  %s7 = scalar_select 0, %s6, %s4
  $region1: #{xlsr_conformer_forward.19} parent=0
    #allocation2 [shape = 'u8[1024]{0}', space=vmem, size = 0x400, scoped, tag = 'output window, operand 0, single buffered']
    #allocation3 [shape = 's32[1]{0}', space=sflag, size = 0x4, scoped, tag = 'scoped memory for xlsr_conformer_forward.19']
    %8 = vsyncpa [#allocation3], 0
    // Predicated region
    $region2: #{xlsr_conformer_forward.19} parent=1 // pred_check
      _
    $region3: #{xlsr_conformer_forward.19} parent=1 // pred_check_branch
      %10 = sbr.rel (0) target = $region5
    $region4: #{xlsr_conformer_forward.19} parent=1 // pred_region
      _
    $region5: #{xlsr_conformer_forward.19} parent=1 // pred_fallthru
      _
    // Predicated region
    $region6: #{xlsr_conformer_forward.19} parent=1 // pred_check
      _
    $region7: #{xlsr_conformer_forward.19} parent=1 // pred_check_branch
      %12 = sbr.rel (0) target = $region9
    $region8: #{xlsr_conformer_forward.19} parent=1 // pred_region
      _
    $region9: #{xlsr_conformer_forward.19} parent=1 // pred_fallthru
      _
    // Predicated region
    $region10: #{xlsr_conformer_forward.19} parent=1 // pred_check
      _
    $region11: #{xlsr_conformer_forward.19} parent=1 // pred_check_branch
      %14 = sbr.rel (0) target = $region13
    $region12: #{xlsr_conformer_forward.19} parent=1 // pred_region
      _
    $region13: #{xlsr_conformer_forward.19} parent=1 // pred_fallthru
      _
    %v15 = vld [vmem:[%s0] sm:$0x3]
    %v16 = vld [vmem:[%s1] sm:$0xff]
    %v17 = vld [vmem:[%s1 + $0x8] sm:$0xff]
    %v18 = vld [vmem:[%s1 + $0x10] sm:$0xff]
    %v19 = vld [vmem:[%s1 + $0x18] sm:$0xff]
    %v20 = vld [vmem:[%s2] sm:$0x1]
    %v22 = vlaneseq
    %v23 = vshrl.u32 %v22, 7
    %v24 = vsub.s32 0, %v23
    %v25 = vrot.slane %v20, %v24
    %vm27 = vcmask 261120
    %v29 = vsel %vm27, %v15, 0
    %31 = vmatprep.subr.mxu0 0.0
    %32 = vmatpush1.msra.mxu0 %v16
    %33 = vmatprep.subr.mxu0 0.0
    %34 = vmatpush1.msra.mxu0 %v17
    %35 = vmatprep.subr.mxu0 0.0
    %36 = vmatpush1.msra.mxu0 %v18
    %37 = vmatprep.subr.mxu0 0.0
    %38 = vmatpush1.msra.mxu0 %v19
    %39 = vmatprep.subr.mxu0 0.0
    %40 = vmatpush1.msra.mxu0 0.0
    %41 = vmatprep.subr.mxu0 0.0
    %42 = vmatpush1.msra.mxu0 0.0
    %43 = vmatprep.subr.mxu0 0.0
    %44 = vmatpush1.msra.mxu0 0.0
    %45 = vmatprep.subr.mxu0 0.0
    %46 = vmatpush1.msra.mxu0 0.0
    %47 = vmatprep.subr.mxu0 0.0
    %48 = vmatpush1.msra.mxu0 0.0
    %49 = vmatprep.subr.mxu0 0.0
    %50 = vmatpush1.msra.mxu0 0.0
    %51 = vmatprep.subr.mxu0 0.0
    %52 = vmatpush1.msra.mxu0 0.0
    %53 = vmatprep.subr.mxu0 0.0
    %54 = vmatpush1.msra.mxu0 0.0
    %55 = vmatprep.subr.mxu0 0.0
    %56 = vmatpush1.msra.mxu0 0.0
    %57 = vmatprep.subr.mxu0 0.0
    %58 = vmatpush1.msra.mxu0 0.0
    %59 = vmatprep.subr.mxu0 0.0
    %60 = vmatpush1.msra.mxu0 0.0
    %61 = vmatprep.subr.mxu0 0.0
    %62 = vmatpush1.msra.mxu0 0.0
    %63 = vmatprep.subr.mxu0 0.0
    %64 = vmatpush1.msra.mxu0 0.0
    %65 = vmatprep.subr.mxu0 0.0
    %66 = vmatpush1.msra.mxu0 0.0
    %67 = vmatprep.subr.mxu0 0.0
    %68 = vmatpush1.msra.mxu0 0.0
    %69 = vmatprep.subr.mxu0 0.0
    %70 = vmatpush1.msra.mxu0 0.0
    %71 = vmatprep.subr.mxu0 0.0
    %72 = vmatpush1.msra.mxu0 0.0
    %73 = vmatprep.subr.mxu0 0.0
    %74 = vmatpush1.msra.mxu0 0.0
    %75 = vmatprep.subr.mxu0 0.0
    %76 = vmatpush1.msra.mxu0 0.0
    %77 = vmatprep.subr.mxu0 0.0
    %78 = vmatpush1.msra.mxu0 0.0
    %79 = vmatprep.subr.mxu0 0.0
    %80 = vmatpush1.msra.mxu0 0.0
    %81 = vmatprep.subr.mxu0 0.0
    %82 = vmatpush1.msra.mxu0 0.0
    %83 = vmatprep.subr.mxu0 0.0
    %84 = vmatpush1.msra.mxu0 0.0
    %85 = vmatprep.subr.mxu0 0.0
    %86 = vmatpush1.msra.mxu0 0.0
    %87 = vmatprep.subr.mxu0 0.0
    %88 = vmatpush1.msra.mxu0 0.0
    %89 = vmatprep.subr.mxu0 0.0
    %90 = vmatpush1.msra.mxu0 0.0
    %91 = vmatprep.subr.mxu0 0.0
    %92 = vmatpush1.msra.mxu0 0.0
    %93 = vmatprep.subr.mxu0 0.0
    %94 = vmatpush1.msra.mxu0 0.0
    %95 = vmatprep.mubr.f32.mxu0 0.0
    %96 = vmatmul.mubr.f32.gmra.mrb[0].mxu0 %v29
    %v97 = vpop.f32.mrb[0].mxu0
    %v98 = vadd.f32 %v25, %v97
    %v99 = vpop.f32.mrb[0].mxu0
    %100 = vdwg.mxu0
    %vm101 = vcmask 9216
    %102 = vst.msk [vmem:[#allocation2] sm:$0x3] %vm101, %v98
    // Predicated region
    $region14: #{xlsr_conformer_forward.19} parent=1 // pred_check
      _
    $region15: #{xlsr_conformer_forward.19} parent=1 // pred_check_branch
      %104 = sbr.rel (0) target = $region17
    $region16: #{xlsr_conformer_forward.19} parent=1 // pred_region
      %s106 = ssub.s32 32, 32
      %107 = vsyncadd [#allocation3], %s106
      %s109 = sshll.u32 [#allocation2], 4
      %s110 = int_to_ptr.vmem [resolvable:$true] %s109
      %112 = dma.vmem_to_hbm [thread:$0]  %s110, 32, %s3, [#allocation3]
    $region17: #{xlsr_conformer_forward.19} parent=1 // pred_fallthru
      _
    // Predicated region
    $region18: #{xlsr_conformer_forward.19} parent=1 // pred_check
      _
    $region19: #{xlsr_conformer_forward.19} parent=1 // pred_check_branch
      %114 = sbr.rel (0) target = $region21
    $region20: #{xlsr_conformer_forward.19} parent=1 // pred_region
      %115 = dma.done [#allocation3], 32
    $region21: #{xlsr_conformer_forward.19} parent=1 // pred_fallthru
      _
    %116 = vsyncpa [#allocation3], 1

</llo_original>
